<compile_context>
chip_gen: v5e
topology: v5e:2x2
jax: 0.10.0
libtpu: 0.0.40
codegen_flags: <defaults>
</compile_context>

<pallas_src>
import functools

import jax
import jax.numpy as jnp
from jax import lax
from jax.experimental import pallas as pl
from jax.experimental.pallas import tpu as pltpu


# ------------------------------- helpers --------------------------------------

def _round_up(x, m):
    return (x + m - 1) // m * m


def _pick_tile(dim, unit, max_tile):
    """Returns (tile, padded_dim) with tile | padded_dim and tile % unit == 0."""
    p = _round_up(dim, unit)
    if p <= max_tile:
        return p, p
    return max_tile, _round_up(dim, max_tile)


def _pad_vec(v, cp):
    return jnp.pad(v.astype(jnp.float32), (0, cp - v.shape[0]))


# --------------------------- Pallas GEMM kernel --------------------------------

def _gemm_kernel(a_ref, w_ref, b_ref, o_ref, acc_ref, *, post_tanh):
    @pl.when(pl.program_id(2) == 0)
    def _init():
        acc_ref[...] = jnp.zeros_like(acc_ref)

    acc_ref[...] += jnp.dot(a_ref[...], w_ref[...],
                            preferred_element_type=jnp.float32)

    @pl.when(pl.program_id(2) == pl.num_programs(2) - 1)
    def _finalize():
        y = acc_ref[...] + b_ref[...]
        if post_tanh:
            y = jnp.tanh(y)
        o_ref[...] = y.astype(o_ref.dtype)


def gemm(a, w, bias=None, *, post_tanh=False):
    """Tiled MXU GEMM: (M,K)@(K,N) + bias, bf16 operands, f32 accumulation.
    Returns the zero-padded (Mp, Np) f32 result; caller slices [:M, :N]."""
    a = a.astype(jnp.bfloat16)
    w = w.astype(jnp.bfloat16)
    m, k = a.shape
    k2, n = w.shape
    assert k == k2
    tm, mp = _pick_tile(m, 8, 256)
    tk, kp = _pick_tile(k, 128, 512)
    tn, np_ = _pick_tile(n, 128, 256)
    a_p = jnp.pad(a, ((0, mp - m), (0, kp - k)))
    w_p = jnp.pad(w, ((0, kp - k), (0, np_ - n)))
    if bias is None:
        b_p = jnp.zeros((1, np_), jnp.float32)
    else:
        b_p = jnp.pad(bias.astype(jnp.float32), (0, np_ - n)).reshape(1, np_)

    grid = (mp // tm, np_ // tn, kp // tk)
    return pl.pallas_call(
        functools.partial(_gemm_kernel, post_tanh=post_tanh),
        out_shape=jax.ShapeDtypeStruct((mp, np_), jnp.float32),
        grid_spec=pltpu.PrefetchScalarGridSpec(
            num_scalar_prefetch=0,
            grid=grid,
            in_specs=[
                pl.BlockSpec((tm, tk), lambda i, j, kk: (i, kk)),
                pl.BlockSpec((tk, tn), lambda i, j, kk: (kk, j)),
                pl.BlockSpec((1, tn), lambda i, j, kk: (0, j)),
            ],
            out_specs=pl.BlockSpec((tm, tn), lambda i, j, kk: (i, j)),
            scratch_shapes=[pltpu.VMEM((tm, tn), jnp.float32)],
        ),
        compiler_params=pltpu.CompilerParams(
            dimension_semantics=("parallel", "parallel", "arbitrary")),
    )(a_p, w_p, b_p)


# --------------------- Pallas BatchNorm (train-mode) kernels -------------------

def _bn_stats_kernel(x_ref, o_ref, *, m_real, tm, mask_rows):
    i = pl.program_id(1)

    @pl.when(i == 0)
    def _init():
        o_ref[...] = jnp.zeros_like(o_ref)

    x = x_ref[...]
    if mask_rows:
        row = i * tm + lax.broadcasted_iota(jnp.int32, x.shape, 0)
        x = jnp.where(row < m_real, x, 0.0)
    s = jnp.sum(x, axis=0, keepdims=True)
    ss = jnp.sum(x * x, axis=0, keepdims=True)
    o_ref[...] += jnp.concatenate([s, ss], axis=0)


def bn_stats(y_pad, m_real):
    """Per-channel [sum; sum of squares] over the first axis (rows >= m_real are
    masked out).  y_pad: (Mp, Cp) f32.  Returns (2, Cp) f32."""
    mp, cp = y_pad.shape
    tm = mp if mp <= 512 else 256
    tc = cp if cp <= 512 else 256
    assert mp % tm == 0 and cp % tc == 0
    grid = (cp // tc, mp // tm)          # reduction (rows) axis last
    return pl.pallas_call(
        functools.partial(_bn_stats_kernel, m_real=m_real, tm=tm,
                          mask_rows=(mp != m_real)),
        out_shape=jax.ShapeDtypeStruct((2, cp), jnp.float32),
        grid_spec=pltpu.PrefetchScalarGridSpec(
            num_scalar_prefetch=0,
            grid=grid,
            in_specs=[pl.BlockSpec((tm, tc), lambda j, i: (i, j))],
            out_specs=pl.BlockSpec((2, tc), lambda j, i: (0, j)),
        ),
        compiler_params=pltpu.CompilerParams(
            dimension_semantics=("parallel", "arbitrary")),
    )(y_pad)


def _affine_kernel(x_ref, s_ref, b_ref, o_ref, *, relu):
    y = x_ref[...] * s_ref[...] + b_ref[...]
    if relu:
        y = jnp.maximum(y, 0.0)
    o_ref[...] = y.astype(o_ref.dtype)


def _affine_res_kernel(x_ref, s_ref, b_ref, r_ref, o_ref):
    y = x_ref[...] * s_ref[...] + b_ref[...] + r_ref[...].astype(jnp.float32)
    o_ref[...] = y.astype(o_ref.dtype)


def bn_affine(y_pad, scale, shift, *, relu, residual=None,
              out_dtype=jnp.bfloat16):
    """y*scale + shift (+residual) (+ReLU), tiled, bf16 output."""
    mp, cp = y_pad.shape
    tm = mp if mp <= 512 else 256
    tc = cp if cp <= 512 else 256
    assert mp % tm == 0 and cp % tc == 0
    grid = (mp // tm, cp // tc)
    x_spec = pl.BlockSpec((tm, tc), lambda i, j: (i, j))
    v_spec = pl.BlockSpec((1, tc), lambda i, j: (0, j))
    s2 = scale.reshape(1, cp).astype(jnp.float32)
    b2 = shift.reshape(1, cp).astype(jnp.float32)
    if residual is None:
        kern = functools.partial(_affine_kernel, relu=relu)
        in_specs = [x_spec, v_spec, v_spec]
        args = (y_pad, s2, b2)
    else:
        kern = _affine_res_kernel
        in_specs = [x_spec, v_spec, v_spec, x_spec]
        args = (y_pad, s2, b2, residual)
    return pl.pallas_call(
        kern,
        out_shape=jax.ShapeDtypeStruct((mp, cp), out_dtype),
        grid_spec=pltpu.PrefetchScalarGridSpec(
            num_scalar_prefetch=0,
            grid=grid,
            in_specs=in_specs,
            out_specs=x_spec,
        ),
        compiler_params=pltpu.CompilerParams(
            dimension_semantics=("parallel", "parallel")),
    )(*args)


def _bn_scale_shift(sum_, sumsq, count, gamma_pad, beta_pad, eps=1e-5):
    mean = sum_ / count
    var = sumsq / count - mean * mean        # biased variance (PyTorch train mode)
    scale = gamma_pad * lax.rsqrt(var + eps)
    shift = beta_pad - mean * scale
    return scale, shift


def batch_norm_act(y_pad, m_real, gamma, beta, *, relu, residual=None):
    mp, cp = y_pad.shape
    st = bn_stats(y_pad, m_real)
    scale, shift = _bn_scale_shift(st[0], st[1], float(m_real),
                                   _pad_vec(gamma, cp), _pad_vec(beta, cp))
    return bn_affine(y_pad, scale, shift, relu=relu, residual=residual)


# ------------------------------ conv glue (NHWC) -------------------------------

def _pad_hw(x, pad, mode):
    if pad == 0:
        return x
    widths = ((0, 0), (pad, pad), (pad, pad), (0, 0))
    return jnp.pad(x, widths, mode='reflect' if mode == 'reflect' else 'constant')


def _patches(xp, offsets, oh, ow, stride):
    """xp: padded NHWC bf16.  Returns (N*OH*OW, T*C); columns ordered (tap, c)."""
    n, _, _, c = xp.shape
    slabs = [xp[:, dy:dy + stride * oh:stride, dx:dx + stride * ow:stride, :]
             for dy, dx in offsets]
    cols = jnp.concatenate(slabs, axis=-1)
    return cols.reshape(n * oh * ow, len(offsets) * c)


def conv2d(x, w_oihw, bias, *, stride=1, pad=0, pad_mode='zero', post_tanh=False):
    """NHWC conv via tap-gather + tiled Pallas GEMM.
    Returns the padded (Mp, Np) f32 output and the logical output shape."""
    n, h, w, cin = x.shape
    cout, _, kh, kw = w_oihw.shape
    oh = (h + 2 * pad - kh) // stride + 1
    ow = (w + 2 * pad - kw) // stride + 1
    xp = _pad_hw(x, pad, pad_mode)
    offs = [(ky, kx) for ky in range(kh) for kx in range(kw)]
    a = _patches(xp, offs, oh, ow, stride)                             # bf16
    wm = jnp.transpose(w_oihw, (2, 3, 1, 0)).reshape(kh * kw * cin, cout)
    y = gemm(a, wm, bias, post_tanh=post_tanh)
    return y, (n, oh, ow, cout)


def conv_bn_relu(x, w, bias, gamma, beta, *, stride, pad, pad_mode):
    y, (n, oh, ow, cout) = conv2d(x, w, bias, stride=stride, pad=pad,
                                  pad_mode=pad_mode)
    m = n * oh * ow
    h_p = batch_norm_act(y, m, gamma, beta, relu=True)
    return h_p[:m, :cout].reshape(n, oh, ow, cout)


def resnet_block(x, p, j):
    """ResnetBlock (padding_type='reflect', use_dropout=False)."""
    n, h, w, c = x.shape
    m = n * h * w
    y1, _ = conv2d(x, p[f'r{j}_w1'], p[f'r{j}_b1'],
                   stride=1, pad=1, pad_mode='reflect')
    h1 = batch_norm_act(y1, m, p[f'r{j}a_g'], p[f'r{j}a_bt'], relu=True)
    h1 = h1[:m, :c].reshape(n, h, w, c)
    # TODO(synk): nn.Dropout(0.5) path (use_dropout=True) not implemented; default off.
    y2, _ = conv2d(h1, p[f'r{j}_w2'], p[f'r{j}_b2'],
                   stride=1, pad=1, pad_mode='reflect')
    mp, cp = y2.shape
    res = jnp.pad(x.reshape(m, c), ((0, mp - m), (0, cp - c)))
    out = batch_norm_act(y2, m, p[f'r{j}b_g'], p[f'r{j}b_bt'],
                         relu=False, residual=res)
    return out[:m, :c].reshape(n, h, w, c)


# ConvTranspose2d(k=3, s=2, p=1, output_padding=1) phase decomposition:
# phase (ry,rx) -> list of ((input offset dy,dx), (equiv. kernel index ky,kx)).
_PHASE_TAPS = {
    (0, 0): (((0, 0), (1, 1)),),
    (0, 1): (((0, 0), (1, 0)), ((0, 1), (1, 2))),
    (1, 0): (((0, 0), (0, 1)), ((1, 0), (2, 1))),
    (1, 1): (((0, 0), (0, 0)), ((0, 1), (0, 2)),
             ((1, 0), (2, 0)), ((1, 1), (2, 2))),
}


def convT_bn_relu(x, w_iohw, gamma, beta):
    """ConvTranspose2d(3, s=2, p=1, output_padding=1) + BatchNorm + ReLU."""
    n, h, w, cin = x.shape
    cout = w_iohw.shape[1]
    m = n * h * w
    w_eq = jnp.transpose(w_iohw[:, :, ::-1, ::-1], (1, 0, 2, 3))  # OIHW equivalent
    xp = jnp.pad(x, ((0, 0), (0, 1), (0, 1), (0, 0)))             # bottom/right +1
    ys = {}
    total = None
    for ph, taps in _PHASE_TAPS.items():
        a = _patches(xp, [off for off, _ in taps], h, w, 1)
        wm = jnp.concatenate([w_eq[:, :, ky, kx].T for _, (ky, kx) in taps],
                             axis=0)
        y = gemm(a, wm, None)
        ys[ph] = y
        st = bn_stats(y, m)
        total = st if total is None else total + st
    mp, cp = ys[(0, 0)].shape
    scale, shift = _bn_scale_shift(total[0], total[1], float(4 * m),
                                   _pad_vec(gamma, cp), _pad_vec(beta, cp))
    outs = {ph: bn_affine(ys[ph], scale, shift, relu=True)[:m, :cout]
                 .reshape(n, h, w, cout)
            for ph in _PHASE_TAPS}
    row_e = jnp.stack([outs[(0, 0)], outs[(0, 1)]], axis=3).reshape(n, h, 2 * w, cout)
    row_o = jnp.stack([outs[(1, 0)], outs[(1, 1)]], axis=3).reshape(n, h, 2 * w, cout)
    return jnp.stack([row_e, row_o], axis=2).reshape(n, 2 * h, 2 * w, cout)


# ------------------------------ ResnetGenerator --------------------------------

def resnet_generator_forward(x_nchw, p, *, n_blocks):
    x = jnp.transpose(x_nchw, (0, 2, 3, 1)).astype(jnp.bfloat16)      # NHWC
    # ReflectionPad2d(3) + Conv2d(input_nc, ngf, 7, bias=False) + BN + ReLU
    x = conv_bn_relu(x, p['c1_w'], None, p['c1_g'], p['c1_bt'],
                     stride=1, pad=3, pad_mode='reflect')
    # 2x downsampling: Conv2d(3, s=2, p=1, bias=False) + BN + ReLU
    for i in range(2):
        x = conv_bn_relu(x, p[f'd{i}_w'], None, p[f'd{i}_g'], p[f'd{i}_bt'],
                         stride=2, pad=1, pad_mode='zero')
    # n_blocks Resnet blocks
    for j in range(n_blocks):
        x = resnet_block(x, p, j)
    # 2x upsampling: ConvTranspose2d(3, s=2, p=1, op=1, bias=False) + BN + ReLU
    for i in range(2):
        x = convT_bn_relu(x, p[f'u{i}_w'], p[f'u{i}_g'], p[f'u{i}_bt'])
    # ReflectionPad2d(3) + Conv2d(ngf, output_nc, 7, bias=True) + Tanh
    y, (n, oh, ow, cout) = conv2d(x, p['cf_w'], p['cf_b'],
                                  stride=1, pad=3, pad_mode='reflect',
                                  post_tanh=True)
    m = n * oh * ow
    y = y[:m, :cout].reshape(n, oh, ow, cout)
    return jnp.transpose(y, (0, 3, 1, 2))                             # NCHW, f32


def init_params(key, input_nc, output_nc, ngf, n_blocks):
    cnt = [0]

    def nk():
        cnt[0] += 1
        return jax.random.fold_in(key, cnt[0])

    def w_(shape):
        return 0.02 * jax.random.normal(nk(), shape, jnp.float32)

    p = {}

    def bn_(c, tag):
        p[tag + '_g'] = 1.0 + 0.02 * jax.random.normal(nk(), (c,), jnp.float32)
        p[tag + '_bt'] = jnp.zeros((c,), jnp.float32)

    p['c1_w'] = w_((ngf, input_nc, 7, 7)); bn_(ngf, 'c1')             # bias=False
    for i in range(2):
        cin, cout = ngf * 2 ** i, ngf * 2 ** (i + 1)
        p[f'd{i}_w'] = w_((cout, cin, 3, 3)); bn_(cout, f'd{i}')      # bias=False
    dim = ngf * 4
    for j in range(n_blocks):
        p[f'r{j}_w1'] = w_((dim, dim, 3, 3)); p[f'r{j}_b1'] = w_((dim,))
        bn_(dim, f'r{j}a')
        p[f'r{j}_w2'] = w_((dim, dim, 3, 3)); p[f'r{j}_b2'] = w_((dim,))
        bn_(dim, f'r{j}b')
    for i in range(2):
        mult = 2 ** (2 - i)
        cin, cout = ngf * mult, ngf * mult // 2
        p[f'u{i}_w'] = w_((cin, cout, 3, 3)); bn_(cout, f'u{i}')      # (Cin,Cout,3,3)
    p['cf_w'] = w_((output_nc, ngf, 7, 7))
    p['cf_b'] = w_((output_nc,))
    return p


# ---------------------------- pure-JAX reference -------------------------------
# Mirrors the same arithmetic (bf16 conv operands, f32 accumulation, train-mode
# BatchNorm, bf16 activations between layers) using lax.conv_general_dilated.

def _ref_conv(x, w, b, stride, pad, pad_mode):
    if pad:
        widths = ((0, 0), (0, 0), (pad, pad), (pad, pad))
        x = jnp.pad(x, widths, mode='reflect' if pad_mode == 'reflect' else 'constant')
    y = lax.conv_general_dilated(x, w.astype(jnp.bfloat16), (stride, stride),
                                 'VALID',
                                 dimension_numbers=('NCHW', 'OIHW', 'NCHW'),
                                 preferred_element_type=jnp.float32)
    if b is not None:
        y = y + b.reshape(1, -1, 1, 1).astype(jnp.float32)
    return y


def _ref_convT(x, w_iohw):
    w_eq = jnp.transpose(w_iohw[:, :, ::-1, ::-1], (1, 0, 2, 3)).astype(jnp.bfloat16)
    return lax.conv_general_dilated(x, w_eq, (1, 1), ((1, 2), (1, 2)),
                                    lhs_dilation=(2, 2),
                                    dimension_numbers=('NCHW', 'OIHW', 'NCHW'),
                                    preferred_element_type=jnp.float32)


def _ref_bn(y, g, b, eps=1e-5):
    mean = jnp.mean(y, axis=(0, 2, 3), keepdims=True)
    var = jnp.mean(jnp.square(y - mean), axis=(0, 2, 3), keepdims=True)
    return (y - mean) * lax.rsqrt(var + eps) * g.reshape(1, -1, 1, 1) + \
        b.reshape(1, -1, 1, 1)


def ref_forward(x_nchw, p, *, n_blocks):
    h = x_nchw.astype(jnp.bfloat16)
    h = _ref_conv(h, p['c1_w'], None, 1, 3, 'reflect')
    h = jnp.maximum(_ref_bn(h, p['c1_g'], p['c1_bt']), 0.0).astype(jnp.bfloat16)
    for i in range(2):
        h = _ref_conv(h, p[f'd{i}_w'], None, 2, 1, 'zero')
        h = jnp.maximum(_ref_bn(h, p[f'd{i}_g'], p[f'd{i}_bt']), 0.0).astype(jnp.bfloat16)
    for j in range(n_blocks):
        r = h
        t = _ref_conv(h, p[f'r{j}_w1'], p[f'r{j}_b1'], 1, 1, 'reflect')
        t = jnp.maximum(_ref_bn(t, p[f'r{j}a_g'], p[f'r{j}a_bt']), 0.0).astype(jnp.bfloat16)
        t = _ref_conv(t, p[f'r{j}_w2'], p[f'r{j}_b2'], 1, 1, 'reflect')
        t = _ref_bn(t, p[f'r{j}b_g'], p[f'r{j}b_bt'])
        h = (t + r.astype(jnp.float32)).astype(jnp.bfloat16)
    for i in range(2):
        h = _ref_convT(h, p[f'u{i}_w'])
        h = jnp.maximum(_ref_bn(h, p[f'u{i}_g'], p[f'u{i}_bt']), 0.0).astype(jnp.bfloat16)
    y = _ref_conv(h, p['cf_w'], p['cf_b'], 1, 3, 'reflect')
    return jnp.tanh(y)


# ------------------------------------ main --------------------------------------

if __name__ == "__main__":
    key = jax.random.PRNGKey(0)
    k_p, k_x = jax.random.split(key)

    input_nc, output_nc, ngf, n_blocks = 3, 3, 8, 2
    params = init_params(k_p, input_nc, output_nc, ngf, n_blocks)
    x = jax.random.normal(k_x, (2, input_nc, 16, 16), jnp.float32)

    fwd = jax.jit(functools.partial(resnet_generator_forward, n_blocks=n_blocks))
    ref = jax.jit(functools.partial(ref_forward, n_blocks=n_blocks))

    out = jax.block_until_ready(fwd(x, params))
    expected = jax.block_until_ready(ref(x, params))

    assert out.shape == (2, output_nc, 16, 16), out.shape
    err = float(jnp.max(jnp.abs(out.astype(jnp.float32) -
                                expected.astype(jnp.float32))))
    if not (err < 3e-2):
        raise AssertionError(f"mismatch vs pure-JAX reference: max|diff|={err}")
    print("KERNEL_OK")
</pallas_src>

<mosaic_0001>
module attributes {stable_mosaic.version = 11 : i64} {
  func.func @_bn_stats_kernel(%arg0: i32, %arg1: i32, %arg2: memref<512x128xf32, #tpu.memory_space<vmem>>, %arg3: memref<2x128xf32, #tpu.memory_space<vmem>>) attributes {dimension_semantics = [#tpu.dimension_semantics<parallel>, #tpu.dimension_semantics<arbitrary>], iteration_bounds = array<i64: 1, 1>, scalar_prefetch = 0 : i64, scratch_operands = 0 : i64, tpu.core_type = #tpu.core_type<tc>, window_params = [{transform_indices = @transform_0, window_bounds = array<i64: 512, 128>}, {transform_indices = @transform_1, window_bounds = array<i64: 2, 128>}]} {
    %c0_i32 = arith.constant 0 : i32
    %0 = arith.cmpi eq, %arg1, %c0_i32 : i32
    %1 = arith.extui %0 : i1 to i32
    %c0_i32_0 = arith.constant 0 : i32
    %2 = arith.cmpi ne, %1, %c0_i32_0 : i32
    scf.if %2 {
      %cst_7 = arith.constant 0.000000e+00 : f32
      %13 = vector.broadcast %cst_7 : f32 to vector<2x128xf32>
      %c0_8 = arith.constant 0 : index
      %c0_9 = arith.constant 0 : index
      %14 = vector.load %arg3[%c0_8, %c0_9] : memref<2x128xf32, #tpu.memory_space<vmem>>, vector<2x128xf32>
      tpu.vector_store %arg3[%c0_8, %c0_9], %13 {strides = array<i32>} : memref<2x128xf32, #tpu.memory_space<vmem>>, vector<2x128xf32>,
    } else {
    }
    %c0 = arith.constant 0 : index
    %c0_1 = arith.constant 0 : index
    %3 = vector.load %arg2[%c0, %c0_1] : memref<512x128xf32, #tpu.memory_space<vmem>>, vector<512x128xf32>
    %cst = arith.constant dense<0.000000e+00> : vector<128xf32>
    %4 = vector.multi_reduction <add>, %3, %cst [0] : vector<512x128xf32> to vector<128xf32>
    %5 = vector.shape_cast %4 : vector<128xf32> to vector<1x128xf32>
    %6 = arith.mulf %3, %3 : vector<512x128xf32>
    %cst_2 = arith.constant dense<0.000000e+00> : vector<128xf32>
    %7 = vector.multi_reduction <add>, %6, %cst_2 [0] : vector<512x128xf32> to vector<128xf32>
    %8 = vector.shape_cast %7 : vector<128xf32> to vector<1x128xf32>
    %c0_3 = arith.constant 0 : index
    %c0_4 = arith.constant 0 : index
    %9 = vector.load %arg3[%c0_3, %c0_4] : memref<2x128xf32, #tpu.memory_space<vmem>>, vector<2x128xf32>
    %10 = tpu.concatenate %5, %8 in 0 : vector<1x128xf32>, vector<1x128xf32> -> vector<2x128xf32>
    %11 = arith.addf %9, %10 : vector<2x128xf32>
    %c0_5 = arith.constant 0 : index
    %c0_6 = arith.constant 0 : index
    %12 = vector.load %arg3[%c0_5, %c0_6] : memref<2x128xf32, #tpu.memory_space<vmem>>, vector<2x128xf32>
    tpu.vector_store %arg3[%c0_5, %c0_6], %11 {strides = array<i32>} : memref<2x128xf32, #tpu.memory_space<vmem>>, vector<2x128xf32>,
    return
  }
  func.func @transform_0(%arg0: i32, %arg1: i32) -> (i32, i32) {
    %c0_i32 = arith.constant 0 : i32
    return %arg1, %arg0 : i32, i32
  }
  func.func @transform_1(%arg0: i32, %arg1: i32) -> (i32, i32) {
    %c0_i32 = arith.constant 0 : i32
    %c0_i32_0 = arith.constant 0 : i32
    return %c0_i32, %arg0 : i32, i32
  }
}

module attributes {stable_mosaic.version = 11 : i64} {
  func.func @_gemm_kernel(%arg0: i32, %arg1: i32, %arg2: i32, %arg3: memref<256x256xbf16, #tpu.memory_space<vmem>>, %arg4: memref<256x128xbf16, #tpu.memory_space<vmem>>, %arg5: memref<1x128xf32, #tpu.memory_space<vmem>>, %arg6: memref<256x128xf32, #tpu.memory_space<vmem>>, %arg7: memref<256x128xf32, #tpu.memory_space<vmem>>) attributes {dimension_semantics = [#tpu.dimension_semantics<parallel>, #tpu.dimension_semantics<parallel>, #tpu.dimension_semantics<arbitrary>], iteration_bounds = array<i64: 2, 1, 1>, scalar_prefetch = 0 : i64, scratch_operands = 1 : i64, tpu.core_type = #tpu.core_type<tc>, window_params = [{transform_indices = @transform_0, window_bounds = array<i64: 256, 256>}, {transform_indices = @transform_1, window_bounds = array<i64: 256, 128>}, {transform_indices = @transform_2, window_bounds = array<i64: 1, 128>}, {transform_indices = @transform_3, window_bounds = array<i64: 256, 128>}]} {
    %c0_i32 = arith.constant 0 : i32
    %0 = arith.cmpi eq, %arg2, %c0_i32 : i32
    %1 = arith.extui %0 : i1 to i32
    %c0_i32_0 = arith.constant 0 : i32
    %2 = arith.cmpi ne, %1, %c0_i32_0 : i32
    scf.if %2 {
      %cst_10 = arith.constant 0.000000e+00 : f32
      %12 = vector.broadcast %cst_10 : f32 to vector<256x128xf32>
      %c0_11 = arith.constant 0 : index
      %c0_12 = arith.constant 0 : index
      %13 = vector.load %arg7[%c0_11, %c0_12] : memref<256x128xf32, #tpu.memory_space<vmem>>, vector<256x128xf32>
      tpu.vector_store %arg7[%c0_11, %c0_12], %12 {strides = array<i32>} : memref<256x128xf32, #tpu.memory_space<vmem>>, vector<256x128xf32>,
    } else {
    }
    %c0 = arith.constant 0 : index
    %c0_1 = arith.constant 0 : index
    %3 = vector.load %arg7[%c0, %c0_1] : memref<256x128xf32, #tpu.memory_space<vmem>>, vector<256x128xf32>
    %c0_2 = arith.constant 0 : index
    %c0_3 = arith.constant 0 : index
    %4 = vector.load %arg3[%c0_2, %c0_3] : memref<256x256xbf16, #tpu.memory_space<vmem>>, vector<256x256xbf16>
    %c0_4 = arith.constant 0 : index
    %c0_5 = arith.constant 0 : index
    %5 = vector.load %arg4[%c0_4, %c0_5] : memref<256x128xbf16, #tpu.memory_space<vmem>>, vector<256x128xbf16>
    %cst = arith.constant dense<0.000000e+00> : vector<256x128xf32>
    %6 = tpu.matmul %4, %5, %cst {dimension_numbers = #tpu.dot_dimension_numbers<[1], [0], [0], [1], [0, 0, 1, 1], [], []>} : vector<256x256xbf16>, vector<256x128xbf16>, vector<256x128xf32> -> vector<256x128xf32>
    %7 = arith.addf %3, %6 : vector<256x128xf32>
    %c0_6 = arith.constant 0 : index
    %c0_7 = arith.constant 0 : index
    %8 = vector.load %arg7[%c0_6, %c0_7] : memref<256x128xf32, #tpu.memory_space<vmem>>, vector<256x128xf32>
    tpu.vector_store %arg7[%c0_6, %c0_7], %7 {strides = array<i32>} : memref<256x128xf32, #tpu.memory_space<vmem>>, vector<256x128xf32>,
    %c0_i32_8 = arith.constant 0 : i32
    %9 = arith.cmpi eq, %arg2, %c0_i32_8 : i32
    %10 = arith.extui %9 : i1 to i32
    %c0_i32_9 = arith.constant 0 : i32
    %11 = arith.cmpi ne, %10, %c0_i32_9 : i32
    scf.if %11 {
      %c0_10 = arith.constant 0 : index
      %c0_11 = arith.constant 0 : index
      %12 = vector.load %arg7[%c0_10, %c0_11] : memref<256x128xf32, #tpu.memory_space<vmem>>, vector<256x128xf32>
      %c0_12 = arith.constant 0 : index
      %c0_13 = arith.constant 0 : index
      %13 = vector.load %arg5[%c0_12, %c0_13] : memref<1x128xf32, #tpu.memory_space<vmem>>, vector<1x128xf32>
      %14 = vector.broadcast %13 : vector<1x128xf32> to vector<256x128xf32>
      %15 = arith.addf %12, %14 : vector<256x128xf32>
      %c0_14 = arith.constant 0 : index
      %c0_15 = arith.constant 0 : index
      %16 = vector.load %arg6[%c0_14, %c0_15] : memref<256x128xf32, #tpu.memory_space<vmem>>, vector<256x128xf32>
      tpu.vector_store %arg6[%c0_14, %c0_15], %15 {strides = array<i32>} : memref<256x128xf32, #tpu.memory_space<vmem>>, vector<256x128xf32>,
    } else {
    }
    return
  }
  func.func @transform_0(%arg0: i32, %arg1: i32, %arg2: i32) -> (i32, i32) {
    %c0_i32 = arith.constant 0 : i32
    return %arg0, %arg2 : i32, i32
  }
  func.func @transform_1(%arg0: i32, %arg1: i32, %arg2: i32) -> (i32, i32) {
    %c0_i32 = arith.constant 0 : i32
    return %arg2, %arg1 : i32, i32
  }
  func.func @transform_2(%arg0: i32, %arg1: i32, %arg2: i32) -> (i32, i32) {
    %c0_i32 = arith.constant 0 : i32
    %c0_i32_0 = arith.constant 0 : i32
    return %c0_i32, %arg1 : i32, i32
  }
  func.func @transform_3(%arg0: i32, %arg1: i32, %arg2: i32) -> (i32, i32) {
    %c0_i32 = arith.constant 0 : i32
    return %arg0, %arg1 : i32, i32
  }
}

module attributes {stable_mosaic.version = 11 : i64} {
  func.func @_affine_kernel(%arg0: i32, %arg1: i32, %arg2: memref<512x128xf32, #tpu.memory_space<vmem>>, %arg3: memref<1x128xf32, #tpu.memory_space<vmem>>, %arg4: memref<1x128xf32, #tpu.memory_space<vmem>>, %arg5: memref<512x128xbf16, #tpu.memory_space<vmem>>) attributes {dimension_semantics = [#tpu.dimension_semantics<parallel>, #tpu.dimension_semantics<parallel>], iteration_bounds = array<i64: 1, 1>, scalar_prefetch = 0 : i64, scratch_operands = 0 : i64, tpu.core_type = #tpu.core_type<tc>, window_params = [{transform_indices = @transform_0, window_bounds = array<i64: 512, 128>}, {transform_indices = @transform_1, window_bounds = array<i64: 1, 128>}, {transform_indices = @transform_2, window_bounds = array<i64: 1, 128>}, {transform_indices = @transform_3, window_bounds = array<i64: 512, 128>}]} {
    %c0 = arith.constant 0 : index
    %c0_0 = arith.constant 0 : index
    %0 = vector.load %arg2[%c0, %c0_0] : memref<512x128xf32, #tpu.memory_space<vmem>>, vector<512x128xf32>
    %c0_1 = arith.constant 0 : index
    %c0_2 = arith.constant 0 : index
    %1 = vector.load %arg3[%c0_1, %c0_2] : memref<1x128xf32, #tpu.memory_space<vmem>>, vector<1x128xf32>
    %2 = vector.broadcast %1 : vector<1x128xf32> to vector<512x128xf32>
    %3 = arith.mulf %0, %2 : vector<512x128xf32>
    %c0_3 = arith.constant 0 : index
    %c0_4 = arith.constant 0 : index
    %4 = vector.load %arg4[%c0_3, %c0_4] : memref<1x128xf32, #tpu.memory_space<vmem>>, vector<1x128xf32>
    %5 = vector.broadcast %4 : vector<1x128xf32> to vector<512x128xf32>
    %6 = arith.addf %3, %5 : vector<512x128xf32>
    %cst = arith.constant 0.000000e+00 : f32
    %7 = vector.broadcast %cst : f32 to vector<512x128xf32>
    %8 = arith.maximumf %6, %7 : vector<512x128xf32>
    %9 = arith.truncf %8 : vector<512x128xf32> to vector<512x128xbf16>
    %c0_5 = arith.constant 0 : index
    %c0_6 = arith.constant 0 : index
    %10 = vector.load %arg5[%c0_5, %c0_6] : memref<512x128xbf16, #tpu.memory_space<vmem>>, vector<512x128xbf16>
    tpu.vector_store %arg5[%c0_5, %c0_6], %9 {strides = array<i32>} : memref<512x128xbf16, #tpu.memory_space<vmem>>, vector<512x128xbf16>,
    return
  }
  func.func @transform_0(%arg0: i32, %arg1: i32) -> (i32, i32) {
    %c0_i32 = arith.constant 0 : i32
    return %arg0, %arg1 : i32, i32
  }
  func.func @transform_1(%arg0: i32, %arg1: i32) -> (i32, i32) {
    %c0_i32 = arith.constant 0 : i32
    %c0_i32_0 = arith.constant 0 : i32
    return %c0_i32, %arg1 : i32, i32
  }
  func.func @transform_2(%arg0: i32, %arg1: i32) -> (i32, i32) {
    %c0_i32 = arith.constant 0 : i32
    %c0_i32_0 = arith.constant 0 : i32
    return %c0_i32, %arg1 : i32, i32
  }
  func.func @transform_3(%arg0: i32, %arg1: i32) -> (i32, i32) {
    %c0_i32 = arith.constant 0 : i32
    return %arg0, %arg1 : i32, i32
  }
}

module attributes {stable_mosaic.version = 11 : i64} {
  func.func @_gemm_kernel(%arg0: i32, %arg1: i32, %arg2: i32, %arg3: memref<128x128xbf16, #tpu.memory_space<vmem>>, %arg4: memref<128x128xbf16, #tpu.memory_space<vmem>>, %arg5: memref<1x128xf32, #tpu.memory_space<vmem>>, %arg6: memref<128x128xf32, #tpu.memory_space<vmem>>, %arg7: memref<128x128xf32, #tpu.memory_space<vmem>>) attributes {dimension_semantics = [#tpu.dimension_semantics<parallel>, #tpu.dimension_semantics<parallel>, #tpu.dimension_semantics<arbitrary>], iteration_bounds = array<i64: 1, 1, 1>, scalar_prefetch = 0 : i64, scratch_operands = 1 : i64, tpu.core_type = #tpu.core_type<tc>, window_params = [{transform_indices = @transform_0, window_bounds = array<i64: 128, 128>}, {transform_indices = @transform_1, window_bounds = array<i64: 128, 128>}, {transform_indices = @transform_2, window_bounds = array<i64: 1, 128>}, {transform_indices = @transform_3, window_bounds = array<i64: 128, 128>}]} {
    %c0_i32 = arith.constant 0 : i32
    %0 = arith.cmpi eq, %arg2, %c0_i32 : i32
    %1 = arith.extui %0 : i1 to i32
    %c0_i32_0 = arith.constant 0 : i32
    %2 = arith.cmpi ne, %1, %c0_i32_0 : i32
    scf.if %2 {
      %cst_10 = arith.constant 0.000000e+00 : f32
      %12 = vector.broadcast %cst_10 : f32 to vector<128x128xf32>
      %c0_11 = arith.constant 0 : index
      %c0_12 = arith.constant 0 : index
      %13 = vector.load %arg7[%c0_11, %c0_12] : memref<128x128xf32, #tpu.memory_space<vmem>>, vector<128x128xf32>
      tpu.vector_store %arg7[%c0_11, %c0_12], %12 {strides = array<i32>} : memref<128x128xf32, #tpu.memory_space<vmem>>, vector<128x128xf32>,
    } else {
    }
    %c0 = arith.constant 0 : index
    %c0_1 = arith.constant 0 : index
    %3 = vector.load %arg7[%c0, %c0_1] : memref<128x128xf32, #tpu.memory_space<vmem>>, vector<128x128xf32>
    %c0_2 = arith.constant 0 : index
    %c0_3 = arith.constant 0 : index
    %4 = vector.load %arg3[%c0_2, %c0_3] : memref<128x128xbf16, #tpu.memory_space<vmem>>, vector<128x128xbf16>
    %c0_4 = arith.constant 0 : index
    %c0_5 = arith.constant 0 : index
    %5 = vector.load %arg4[%c0_4, %c0_5] : memref<128x128xbf16, #tpu.memory_space<vmem>>, vector<128x128xbf16>
    %cst = arith.constant dense<0.000000e+00> : vector<128x128xf32>
    %6 = tpu.matmul %4, %5, %cst {dimension_numbers = #tpu.dot_dimension_numbers<[1], [0], [0], [1], [0, 0, 1, 1], [], []>} : vector<128x128xbf16>, vector<128x128xbf16>, vector<128x128xf32> -> vector<128x128xf32>
    %7 = arith.addf %3, %6 : vector<128x128xf32>
    %c0_6 = arith.constant 0 : index
    %c0_7 = arith.constant 0 : index
    %8 = vector.load %arg7[%c0_6, %c0_7] : memref<128x128xf32, #tpu.memory_space<vmem>>, vector<128x128xf32>
    tpu.vector_store %arg7[%c0_6, %c0_7], %7 {strides = array<i32>} : memref<128x128xf32, #tpu.memory_space<vmem>>, vector<128x128xf32>,
    %c0_i32_8 = arith.constant 0 : i32
    %9 = arith.cmpi eq, %arg2, %c0_i32_8 : i32
    %10 = arith.extui %9 : i1 to i32
    %c0_i32_9 = arith.constant 0 : i32
    %11 = arith.cmpi ne, %10, %c0_i32_9 : i32
    scf.if %11 {
      %c0_10 = arith.constant 0 : index
      %c0_11 = arith.constant 0 : index
      %12 = vector.load %arg7[%c0_10, %c0_11] : memref<128x128xf32, #tpu.memory_space<vmem>>, vector<128x128xf32>
      %c0_12 = arith.constant 0 : index
      %c0_13 = arith.constant 0 : index
      %13 = vector.load %arg5[%c0_12, %c0_13] : memref<1x128xf32, #tpu.memory_space<vmem>>, vector<1x128xf32>
      %14 = vector.broadcast %13 : vector<1x128xf32> to vector<128x128xf32>
      %15 = arith.addf %12, %14 : vector<128x128xf32>
      %c0_14 = arith.constant 0 : index
      %c0_15 = arith.constant 0 : index
      %16 = vector.load %arg6[%c0_14, %c0_15] : memref<128x128xf32, #tpu.memory_space<vmem>>, vector<128x128xf32>
      tpu.vector_store %arg6[%c0_14, %c0_15], %15 {strides = array<i32>} : memref<128x128xf32, #tpu.memory_space<vmem>>, vector<128x128xf32>,
    } else {
    }
    return
  }
  func.func @transform_0(%arg0: i32, %arg1: i32, %arg2: i32) -> (i32, i32) {
    %c0_i32 = arith.constant 0 : i32
    return %arg0, %arg2 : i32, i32
  }
  func.func @transform_1(%arg0: i32, %arg1: i32, %arg2: i32) -> (i32, i32) {
    %c0_i32 = arith.constant 0 : i32
    return %arg2, %arg1 : i32, i32
  }
  func.func @transform_2(%arg0: i32, %arg1: i32, %arg2: i32) -> (i32, i32) {
    %c0_i32 = arith.constant 0 : i32
    %c0_i32_0 = arith.constant 0 : i32
    return %c0_i32, %arg1 : i32, i32
  }
  func.func @transform_3(%arg0: i32, %arg1: i32, %arg2: i32) -> (i32, i32) {
    %c0_i32 = arith.constant 0 : i32
    return %arg0, %arg1 : i32, i32
  }
}

module attributes {stable_mosaic.version = 11 : i64} {
  func.func @_bn_stats_kernel(%arg0: i32, %arg1: i32, %arg2: memref<128x128xf32, #tpu.memory_space<vmem>>, %arg3: memref<2x128xf32, #tpu.memory_space<vmem>>) attributes {dimension_semantics = [#tpu.dimension_semantics<parallel>, #tpu.dimension_semantics<arbitrary>], iteration_bounds = array<i64: 1, 1>, scalar_prefetch = 0 : i64, scratch_operands = 0 : i64, tpu.core_type = #tpu.core_type<tc>, window_params = [{transform_indices = @transform_0, window_bounds = array<i64: 128, 128>}, {transform_indices = @transform_1, window_bounds = array<i64: 2, 128>}]} {
    %c0_i32 = arith.constant 0 : i32
    %0 = arith.cmpi eq, %arg1, %c0_i32 : i32
    %1 = arith.extui %0 : i1 to i32
    %c0_i32_0 = arith.constant 0 : i32
    %2 = arith.cmpi ne, %1, %c0_i32_0 : i32
    scf.if %2 {
      %cst_7 = arith.constant 0.000000e+00 : f32
      %13 = vector.broadcast %cst_7 : f32 to vector<2x128xf32>
      %c0_8 = arith.constant 0 : index
      %c0_9 = arith.constant 0 : index
      %14 = vector.load %arg3[%c0_8, %c0_9] : memref<2x128xf32, #tpu.memory_space<vmem>>, vector<2x128xf32>
      tpu.vector_store %arg3[%c0_8, %c0_9], %13 {strides = array<i32>} : memref<2x128xf32, #tpu.memory_space<vmem>>, vector<2x128xf32>,
    } else {
    }
    %c0 = arith.constant 0 : index
    %c0_1 = arith.constant 0 : index
    %3 = vector.load %arg2[%c0, %c0_1] : memref<128x128xf32, #tpu.memory_space<vmem>>, vector<128x128xf32>
    %cst = arith.constant dense<0.000000e+00> : vector<128xf32>
    %4 = vector.multi_reduction <add>, %3, %cst [0] : vector<128x128xf32> to vector<128xf32>
    %5 = vector.shape_cast %4 : vector<128xf32> to vector<1x128xf32>
    %6 = arith.mulf %3, %3 : vector<128x128xf32>
    %cst_2 = arith.constant dense<0.000000e+00> : vector<128xf32>
    %7 = vector.multi_reduction <add>, %6, %cst_2 [0] : vector<128x128xf32> to vector<128xf32>
    %8 = vector.shape_cast %7 : vector<128xf32> to vector<1x128xf32>
    %c0_3 = arith.constant 0 : index
    %c0_4 = arith.constant 0 : index
    %9 = vector.load %arg3[%c0_3, %c0_4] : memref<2x128xf32, #tpu.memory_space<vmem>>, vector<2x128xf32>
    %10 = tpu.concatenate %5, %8 in 0 : vector<1x128xf32>, vector<1x128xf32> -> vector<2x128xf32>
    %11 = arith.addf %9, %10 : vector<2x128xf32>
    %c0_5 = arith.constant 0 : index
    %c0_6 = arith.constant 0 : index
    %12 = vector.load %arg3[%c0_5, %c0_6] : memref<2x128xf32, #tpu.memory_space<vmem>>, vector<2x128xf32>
    tpu.vector_store %arg3[%c0_5, %c0_6], %11 {strides = array<i32>} : memref<2x128xf32, #tpu.memory_space<vmem>>, vector<2x128xf32>,
    return
  }
  func.func @transform_0(%arg0: i32, %arg1: i32) -> (i32, i32) {
    %c0_i32 = arith.constant 0 : i32
    return %arg1, %arg0 : i32, i32
  }
  func.func @transform_1(%arg0: i32, %arg1: i32) -> (i32, i32) {
    %c0_i32 = arith.constant 0 : i32
    %c0_i32_0 = arith.constant 0 : i32
    return %c0_i32, %arg0 : i32, i32
  }
}

module attributes {stable_mosaic.version = 11 : i64} {
  func.func @_affine_kernel(%arg0: i32, %arg1: i32, %arg2: memref<128x128xf32, #tpu.memory_space<vmem>>, %arg3: memref<1x128xf32, #tpu.memory_space<vmem>>, %arg4: memref<1x128xf32, #tpu.memory_space<vmem>>, %arg5: memref<128x128xbf16, #tpu.memory_space<vmem>>) attributes {dimension_semantics = [#tpu.dimension_semantics<parallel>, #tpu.dimension_semantics<parallel>], iteration_bounds = array<i64: 1, 1>, scalar_prefetch = 0 : i64, scratch_operands = 0 : i64, tpu.core_type = #tpu.core_type<tc>, window_params = [{transform_indices = @transform_0, window_bounds = array<i64: 128, 128>}, {transform_indices = @transform_1, window_bounds = array<i64: 1, 128>}, {transform_indices = @transform_2, window_bounds = array<i64: 1, 128>}, {transform_indices = @transform_3, window_bounds = array<i64: 128, 128>}]} {
    %c0 = arith.constant 0 : index
    %c0_0 = arith.constant 0 : index
    %0 = vector.load %arg2[%c0, %c0_0] : memref<128x128xf32, #tpu.memory_space<vmem>>, vector<128x128xf32>
    %c0_1 = arith.constant 0 : index
    %c0_2 = arith.constant 0 : index
    %1 = vector.load %arg3[%c0_1, %c0_2] : memref<1x128xf32, #tpu.memory_space<vmem>>, vector<1x128xf32>
    %2 = vector.broadcast %1 : vector<1x128xf32> to vector<128x128xf32>
    %3 = arith.mulf %0, %2 : vector<128x128xf32>
    %c0_3 = arith.constant 0 : index
    %c0_4 = arith.constant 0 : index
    %4 = vector.load %arg4[%c0_3, %c0_4] : memref<1x128xf32, #tpu.memory_space<vmem>>, vector<1x128xf32>
    %5 = vector.broadcast %4 : vector<1x128xf32> to vector<128x128xf32>
    %6 = arith.addf %3, %5 : vector<128x128xf32>
    %cst = arith.constant 0.000000e+00 : f32
    %7 = vector.broadcast %cst : f32 to vector<128x128xf32>
    %8 = arith.maximumf %6, %7 : vector<128x128xf32>
    %9 = arith.truncf %8 : vector<128x128xf32> to vector<128x128xbf16>
    %c0_5 = arith.constant 0 : index
    %c0_6 = arith.constant 0 : index
    %10 = vector.load %arg5[%c0_5, %c0_6] : memref<128x128xbf16, #tpu.memory_space<vmem>>, vector<128x128xbf16>
    tpu.vector_store %arg5[%c0_5, %c0_6], %9 {strides = array<i32>} : memref<128x128xbf16, #tpu.memory_space<vmem>>, vector<128x128xbf16>,
    return
  }
  func.func @transform_0(%arg0: i32, %arg1: i32) -> (i32, i32) {
    %c0_i32 = arith.constant 0 : i32
    return %arg0, %arg1 : i32, i32
  }
  func.func @transform_1(%arg0: i32, %arg1: i32) -> (i32, i32) {
    %c0_i32 = arith.constant 0 : i32
    %c0_i32_0 = arith.constant 0 : i32
    return %c0_i32, %arg1 : i32, i32
  }
  func.func @transform_2(%arg0: i32, %arg1: i32) -> (i32, i32) {
    %c0_i32 = arith.constant 0 : i32
    %c0_i32_0 = arith.constant 0 : i32
    return %c0_i32, %arg1 : i32, i32
  }
  func.func @transform_3(%arg0: i32, %arg1: i32) -> (i32, i32) {
    %c0_i32 = arith.constant 0 : i32
    return %arg0, %arg1 : i32, i32
  }
}

module attributes {stable_mosaic.version = 11 : i64} {
  func.func @_gemm_kernel(%arg0: i32, %arg1: i32, %arg2: i32, %arg3: memref<32x256xbf16, #tpu.memory_space<vmem>>, %arg4: memref<256x128xbf16, #tpu.memory_space<vmem>>, %arg5: memref<1x128xf32, #tpu.memory_space<vmem>>, %arg6: memref<32x128xf32, #tpu.memory_space<vmem>>, %arg7: memref<32x128xf32, #tpu.memory_space<vmem>>) attributes {dimension_semantics = [#tpu.dimension_semantics<parallel>, #tpu.dimension_semantics<parallel>, #tpu.dimension_semantics<arbitrary>], iteration_bounds = array<i64: 1, 1, 1>, scalar_prefetch = 0 : i64, scratch_operands = 1 : i64, tpu.core_type = #tpu.core_type<tc>, window_params = [{transform_indices = @transform_0, window_bounds = array<i64: 32, 256>}, {transform_indices = @transform_1, window_bounds = array<i64: 256, 128>}, {transform_indices = @transform_2, window_bounds = array<i64: 1, 128>}, {transform_indices = @transform_3, window_bounds = array<i64: 32, 128>}]} {
    %c0_i32 = arith.constant 0 : i32
    %0 = arith.cmpi eq, %arg2, %c0_i32 : i32
    %1 = arith.extui %0 : i1 to i32
    %c0_i32_0 = arith.constant 0 : i32
    %2 = arith.cmpi ne, %1, %c0_i32_0 : i32
    scf.if %2 {
      %cst_10 = arith.constant 0.000000e+00 : f32
      %12 = vector.broadcast %cst_10 : f32 to vector<32x128xf32>
      %c0_11 = arith.constant 0 : index
      %c0_12 = arith.constant 0 : index
      %13 = vector.load %arg7[%c0_11, %c0_12] : memref<32x128xf32, #tpu.memory_space<vmem>>, vector<32x128xf32>
      tpu.vector_store %arg7[%c0_11, %c0_12], %12 {strides = array<i32>} : memref<32x128xf32, #tpu.memory_space<vmem>>, vector<32x128xf32>,
    } else {
    }
    %c0 = arith.constant 0 : index
    %c0_1 = arith.constant 0 : index
    %3 = vector.load %arg7[%c0, %c0_1] : memref<32x128xf32, #tpu.memory_space<vmem>>, vector<32x128xf32>
    %c0_2 = arith.constant 0 : index
    %c0_3 = arith.constant 0 : index
    %4 = vector.load %arg3[%c0_2, %c0_3] : memref<32x256xbf16, #tpu.memory_space<vmem>>, vector<32x256xbf16>
    %c0_4 = arith.constant 0 : index
    %c0_5 = arith.constant 0 : index
    %5 = vector.load %arg4[%c0_4, %c0_5] : memref<256x128xbf16, #tpu.memory_space<vmem>>, vector<256x128xbf16>
    %cst = arith.constant dense<0.000000e+00> : vector<32x128xf32>
    %6 = tpu.matmul %4, %5, %cst {dimension_numbers = #tpu.dot_dimension_numbers<[1], [0], [0], [1], [0, 0, 1, 1], [], []>} : vector<32x256xbf16>, vector<256x128xbf16>, vector<32x128xf32> -> vector<32x128xf32>
    %7 = arith.addf %3, %6 : vector<32x128xf32>
    %c0_6 = arith.constant 0 : index
    %c0_7 = arith.constant 0 : index
    %8 = vector.load %arg7[%c0_6, %c0_7] : memref<32x128xf32, #tpu.memory_space<vmem>>, vector<32x128xf32>
    tpu.vector_store %arg7[%c0_6, %c0_7], %7 {strides = array<i32>} : memref<32x128xf32, #tpu.memory_space<vmem>>, vector<32x128xf32>,
    %c0_i32_8 = arith.constant 0 : i32
    %9 = arith.cmpi eq, %arg2, %c0_i32_8 : i32
    %10 = arith.extui %9 : i1 to i32
    %c0_i32_9 = arith.constant 0 : i32
    %11 = arith.cmpi ne, %10, %c0_i32_9 : i32
    scf.if %11 {
      %c0_10 = arith.constant 0 : index
      %c0_11 = arith.constant 0 : index
      %12 = vector.load %arg7[%c0_10, %c0_11] : memref<32x128xf32, #tpu.memory_space<vmem>>, vector<32x128xf32>
      %c0_12 = arith.constant 0 : index
      %c0_13 = arith.constant 0 : index
      %13 = vector.load %arg5[%c0_12, %c0_13] : memref<1x128xf32, #tpu.memory_space<vmem>>, vector<1x128xf32>
      %14 = vector.broadcast %13 : vector<1x128xf32> to vector<32x128xf32>
      %15 = arith.addf %12, %14 : vector<32x128xf32>
      %c0_14 = arith.constant 0 : index
      %c0_15 = arith.constant 0 : index
      %16 = vector.load %arg6[%c0_14, %c0_15] : memref<32x128xf32, #tpu.memory_space<vmem>>, vector<32x128xf32>
      tpu.vector_store %arg6[%c0_14, %c0_15], %15 {strides = array<i32>} : memref<32x128xf32, #tpu.memory_space<vmem>>, vector<32x128xf32>,
    } else {
    }
    return
  }
  func.func @transform_0(%arg0: i32, %arg1: i32, %arg2: i32) -> (i32, i32) {
    %c0_i32 = arith.constant 0 : i32
    return %arg0, %arg2 : i32, i32
  }
  func.func @transform_1(%arg0: i32, %arg1: i32, %arg2: i32) -> (i32, i32) {
    %c0_i32 = arith.constant 0 : i32
    return %arg2, %arg1 : i32, i32
  }
  func.func @transform_2(%arg0: i32, %arg1: i32, %arg2: i32) -> (i32, i32) {
    %c0_i32 = arith.constant 0 : i32
    %c0_i32_0 = arith.constant 0 : i32
    return %c0_i32, %arg1 : i32, i32
  }
  func.func @transform_3(%arg0: i32, %arg1: i32, %arg2: i32) -> (i32, i32) {
    %c0_i32 = arith.constant 0 : i32
    return %arg0, %arg1 : i32, i32
  }
}

module attributes {stable_mosaic.version = 11 : i64} {
  func.func @_bn_stats_kernel(%arg0: i32, %arg1: i32, %arg2: memref<32x128xf32, #tpu.memory_space<vmem>>, %arg3: memref<2x128xf32, #tpu.memory_space<vmem>>) attributes {dimension_semantics = [#tpu.dimension_semantics<parallel>, #tpu.dimension_semantics<arbitrary>], iteration_bounds = array<i64: 1, 1>, scalar_prefetch = 0 : i64, scratch_operands = 0 : i64, tpu.core_type = #tpu.core_type<tc>, window_params = [{transform_indices = @transform_0, window_bounds = array<i64: 32, 128>}, {transform_indices = @transform_1, window_bounds = array<i64: 2, 128>}]} {
    %c0_i32 = arith.constant 0 : i32
    %0 = arith.cmpi eq, %arg1, %c0_i32 : i32
    %1 = arith.extui %0 : i1 to i32
    %c0_i32_0 = arith.constant 0 : i32
    %2 = arith.cmpi ne, %1, %c0_i32_0 : i32
    scf.if %2 {
      %cst_7 = arith.constant 0.000000e+00 : f32
      %13 = vector.broadcast %cst_7 : f32 to vector<2x128xf32>
      %c0_8 = arith.constant 0 : index
      %c0_9 = arith.constant 0 : index
      %14 = vector.load %arg3[%c0_8, %c0_9] : memref<2x128xf32, #tpu.memory_space<vmem>>, vector<2x128xf32>
      tpu.vector_store %arg3[%c0_8, %c0_9], %13 {strides = array<i32>} : memref<2x128xf32, #tpu.memory_space<vmem>>, vector<2x128xf32>,
    } else {
    }
    %c0 = arith.constant 0 : index
    %c0_1 = arith.constant 0 : index
    %3 = vector.load %arg2[%c0, %c0_1] : memref<32x128xf32, #tpu.memory_space<vmem>>, vector<32x128xf32>
    %cst = arith.constant dense<0.000000e+00> : vector<128xf32>
    %4 = vector.multi_reduction <add>, %3, %cst [0] : vector<32x128xf32> to vector<128xf32>
    %5 = vector.shape_cast %4 : vector<128xf32> to vector<1x128xf32>
    %6 = arith.mulf %3, %3 : vector<32x128xf32>
    %cst_2 = arith.constant dense<0.000000e+00> : vector<128xf32>
    %7 = vector.multi_reduction <add>, %6, %cst_2 [0] : vector<32x128xf32> to vector<128xf32>
    %8 = vector.shape_cast %7 : vector<128xf32> to vector<1x128xf32>
    %c0_3 = arith.constant 0 : index
    %c0_4 = arith.constant 0 : index
    %9 = vector.load %arg3[%c0_3, %c0_4] : memref<2x128xf32, #tpu.memory_space<vmem>>, vector<2x128xf32>
    %10 = tpu.concatenate %5, %8 in 0 : vector<1x128xf32>, vector<1x128xf32> -> vector<2x128xf32>
    %11 = arith.addf %9, %10 : vector<2x128xf32>
    %c0_5 = arith.constant 0 : index
    %c0_6 = arith.constant 0 : index
    %12 = vector.load %arg3[%c0_5, %c0_6] : memref<2x128xf32, #tpu.memory_space<vmem>>, vector<2x128xf32>
    tpu.vector_store %arg3[%c0_5, %c0_6], %11 {strides = array<i32>} : memref<2x128xf32, #tpu.memory_space<vmem>>, vector<2x128xf32>,
    return
  }
  func.func @transform_0(%arg0: i32, %arg1: i32) -> (i32, i32) {
    %c0_i32 = arith.constant 0 : i32
    return %arg1, %arg0 : i32, i32
  }
  func.func @transform_1(%arg0: i32, %arg1: i32) -> (i32, i32) {
    %c0_i32 = arith.constant 0 : i32
    %c0_i32_0 = arith.constant 0 : i32
    return %c0_i32, %arg0 : i32, i32
  }
}

module attributes {stable_mosaic.version = 11 : i64} {
  func.func @_affine_kernel(%arg0: i32, %arg1: i32, %arg2: memref<32x128xf32, #tpu.memory_space<vmem>>, %arg3: memref<1x128xf32, #tpu.memory_space<vmem>>, %arg4: memref<1x128xf32, #tpu.memory_space<vmem>>, %arg5: memref<32x128xbf16, #tpu.memory_space<vmem>>) attributes {dimension_semantics = [#tpu.dimension_semantics<parallel>, #tpu.dimension_semantics<parallel>], iteration_bounds = array<i64: 1, 1>, scalar_prefetch = 0 : i64, scratch_operands = 0 : i64, tpu.core_type = #tpu.core_type<tc>, window_params = [{transform_indices = @transform_0, window_bounds = array<i64: 32, 128>}, {transform_indices = @transform_1, window_bounds = array<i64: 1, 128>}, {transform_indices = @transform_2, window_bounds = array<i64: 1, 128>}, {transform_indices = @transform_3, window_bounds = array<i64: 32, 128>}]} {
    %c0 = arith.constant 0 : index
    %c0_0 = arith.constant 0 : index
    %0 = vector.load %arg2[%c0, %c0_0] : memref<32x128xf32, #tpu.memory_space<vmem>>, vector<32x128xf32>
    %c0_1 = arith.constant 0 : index
    %c0_2 = arith.constant 0 : index
    %1 = vector.load %arg3[%c0_1, %c0_2] : memref<1x128xf32, #tpu.memory_space<vmem>>, vector<1x128xf32>
    %2 = vector.broadcast %1 : vector<1x128xf32> to vector<32x128xf32>
    %3 = arith.mulf %0, %2 : vector<32x128xf32>
    %c0_3 = arith.constant 0 : index
    %c0_4 = arith.constant 0 : index
    %4 = vector.load %arg4[%c0_3, %c0_4] : memref<1x128xf32, #tpu.memory_space<vmem>>, vector<1x128xf32>
    %5 = vector.broadcast %4 : vector<1x128xf32> to vector<32x128xf32>
    %6 = arith.addf %3, %5 : vector<32x128xf32>
    %cst = arith.constant 0.000000e+00 : f32
    %7 = vector.broadcast %cst : f32 to vector<32x128xf32>
    %8 = arith.maximumf %6, %7 : vector<32x128xf32>
    %9 = arith.truncf %8 : vector<32x128xf32> to vector<32x128xbf16>
    %c0_5 = arith.constant 0 : index
    %c0_6 = arith.constant 0 : index
    %10 = vector.load %arg5[%c0_5, %c0_6] : memref<32x128xbf16, #tpu.memory_space<vmem>>, vector<32x128xbf16>
    tpu.vector_store %arg5[%c0_5, %c0_6], %9 {strides = array<i32>} : memref<32x128xbf16, #tpu.memory_space<vmem>>, vector<32x128xbf16>,
    return
  }
  func.func @transform_0(%arg0: i32, %arg1: i32) -> (i32, i32) {
    %c0_i32 = arith.constant 0 : i32
    return %arg0, %arg1 : i32, i32
  }
  func.func @transform_1(%arg0: i32, %arg1: i32) -> (i32, i32) {
    %c0_i32 = arith.constant 0 : i32
    %c0_i32_0 = arith.constant 0 : i32
    return %c0_i32, %arg1 : i32, i32
  }
  func.func @transform_2(%arg0: i32, %arg1: i32) -> (i32, i32) {
    %c0_i32 = arith.constant 0 : i32
    %c0_i32_0 = arith.constant 0 : i32
    return %c0_i32, %arg1 : i32, i32
  }
  func.func @transform_3(%arg0: i32, %arg1: i32) -> (i32, i32) {
    %c0_i32 = arith.constant 0 : i32
    return %arg0, %arg1 : i32, i32
  }
}

module attributes {stable_mosaic.version = 11 : i64} {
  func.func @_gemm_kernel(%arg0: i32, %arg1: i32, %arg2: i32, %arg3: memref<32x384xbf16, #tpu.memory_space<vmem>>, %arg4: memref<384x128xbf16, #tpu.memory_space<vmem>>, %arg5: memref<1x128xf32, #tpu.memory_space<vmem>>, %arg6: memref<32x128xf32, #tpu.memory_space<vmem>>, %arg7: memref<32x128xf32, #tpu.memory_space<vmem>>) attributes {dimension_semantics = [#tpu.dimension_semantics<parallel>, #tpu.dimension_semantics<parallel>, #tpu.dimension_semantics<arbitrary>], iteration_bounds = array<i64: 1, 1, 1>, scalar_prefetch = 0 : i64, scratch_operands = 1 : i64, tpu.core_type = #tpu.core_type<tc>, window_params = [{transform_indices = @transform_0, window_bounds = array<i64: 32, 384>}, {transform_indices = @transform_1, window_bounds = array<i64: 384, 128>}, {transform_indices = @transform_2, window_bounds = array<i64: 1, 128>}, {transform_indices = @transform_3, window_bounds = array<i64: 32, 128>}]} {
    %c0_i32 = arith.constant 0 : i32
    %0 = arith.cmpi eq, %arg2, %c0_i32 : i32
    %1 = arith.extui %0 : i1 to i32
    %c0_i32_0 = arith.constant 0 : i32
    %2 = arith.cmpi ne, %1, %c0_i32_0 : i32
    scf.if %2 {
      %cst_10 = arith.constant 0.000000e+00 : f32
      %12 = vector.broadcast %cst_10 : f32 to vector<32x128xf32>
      %c0_11 = arith.constant 0 : index
      %c0_12 = arith.constant 0 : index
      %13 = vector.load %arg7[%c0_11, %c0_12] : memref<32x128xf32, #tpu.memory_space<vmem>>, vector<32x128xf32>
      tpu.vector_store %arg7[%c0_11, %c0_12], %12 {strides = array<i32>} : memref<32x128xf32, #tpu.memory_space<vmem>>, vector<32x128xf32>,
    } else {
    }
    %c0 = arith.constant 0 : index
    %c0_1 = arith.constant 0 : index
    %3 = vector.load %arg7[%c0, %c0_1] : memref<32x128xf32, #tpu.memory_space<vmem>>, vector<32x128xf32>
    %c0_2 = arith.constant 0 : index
    %c0_3 = arith.constant 0 : index
    %4 = vector.load %arg3[%c0_2, %c0_3] : memref<32x384xbf16, #tpu.memory_space<vmem>>, vector<32x384xbf16>
    %c0_4 = arith.constant 0 : index
    %c0_5 = arith.constant 0 : index
    %5 = vector.load %arg4[%c0_4, %c0_5] : memref<384x128xbf16, #tpu.memory_space<vmem>>, vector<384x128xbf16>
    %cst = arith.constant dense<0.000000e+00> : vector<32x128xf32>
    %6 = tpu.matmul %4, %5, %cst {dimension_numbers = #tpu.dot_dimension_numbers<[1], [0], [0], [1], [0, 0, 1, 1], [], []>} : vector<32x384xbf16>, vector<384x128xbf16>, vector<32x128xf32> -> vector<32x128xf32>
    %7 = arith.addf %3, %6 : vector<32x128xf32>
    %c0_6 = arith.constant 0 : index
    %c0_7 = arith.constant 0 : index
    %8 = vector.load %arg7[%c0_6, %c0_7] : memref<32x128xf32, #tpu.memory_space<vmem>>, vector<32x128xf32>
    tpu.vector_store %arg7[%c0_6, %c0_7], %7 {strides = array<i32>} : memref<32x128xf32, #tpu.memory_space<vmem>>, vector<32x128xf32>,
    %c0_i32_8 = arith.constant 0 : i32
    %9 = arith.cmpi eq, %arg2, %c0_i32_8 : i32
    %10 = arith.extui %9 : i1 to i32
    %c0_i32_9 = arith.constant 0 : i32
    %11 = arith.cmpi ne, %10, %c0_i32_9 : i32
    scf.if %11 {
      %c0_10 = arith.constant 0 : index
      %c0_11 = arith.constant 0 : index
      %12 = vector.load %arg7[%c0_10, %c0_11] : memref<32x128xf32, #tpu.memory_space<vmem>>, vector<32x128xf32>
      %c0_12 = arith.constant 0 : index
      %c0_13 = arith.constant 0 : index
      %13 = vector.load %arg5[%c0_12, %c0_13] : memref<1x128xf32, #tpu.memory_space<vmem>>, vector<1x128xf32>
      %14 = vector.broadcast %13 : vector<1x128xf32> to vector<32x128xf32>
      %15 = arith.addf %12, %14 : vector<32x128xf32>
      %c0_14 = arith.constant 0 : index
      %c0_15 = arith.constant 0 : index
      %16 = vector.load %arg6[%c0_14, %c0_15] : memref<32x128xf32, #tpu.memory_space<vmem>>, vector<32x128xf32>
      tpu.vector_store %arg6[%c0_14, %c0_15], %15 {strides = array<i32>} : memref<32x128xf32, #tpu.memory_space<vmem>>, vector<32x128xf32>,
    } else {
    }
    return
  }
  func.func @transform_0(%arg0: i32, %arg1: i32, %arg2: i32) -> (i32, i32) {
    %c0_i32 = arith.constant 0 : i32
    return %arg0, %arg2 : i32, i32
  }
  func.func @transform_1(%arg0: i32, %arg1: i32, %arg2: i32) -> (i32, i32) {
    %c0_i32 = arith.constant 0 : i32
    return %arg2, %arg1 : i32, i32
  }
  func.func @transform_2(%arg0: i32, %arg1: i32, %arg2: i32) -> (i32, i32) {
    %c0_i32 = arith.constant 0 : i32
    %c0_i32_0 = arith.constant 0 : i32
    return %c0_i32, %arg1 : i32, i32
  }
  func.func @transform_3(%arg0: i32, %arg1: i32, %arg2: i32) -> (i32, i32) {
    %c0_i32 = arith.constant 0 : i32
    return %arg0, %arg1 : i32, i32
  }
}

module attributes {stable_mosaic.version = 11 : i64} {
  func.func @_affine_res_kernel(%arg0: i32, %arg1: i32, %arg2: memref<32x128xf32, #tpu.memory_space<vmem>>, %arg3: memref<1x128xf32, #tpu.memory_space<vmem>>, %arg4: memref<1x128xf32, #tpu.memory_space<vmem>>, %arg5: memref<32x128xbf16, #tpu.memory_space<vmem>>, %arg6: memref<32x128xbf16, #tpu.memory_space<vmem>>) attributes {dimension_semantics = [#tpu.dimension_semantics<parallel>, #tpu.dimension_semantics<parallel>], iteration_bounds = array<i64: 1, 1>, scalar_prefetch = 0 : i64, scratch_operands = 0 : i64, tpu.core_type = #tpu.core_type<tc>, window_params = [{transform_indices = @transform_0, window_bounds = array<i64: 32, 128>}, {transform_indices = @transform_1, window_bounds = array<i64: 1, 128>}, {transform_indices = @transform_2, window_bounds = array<i64: 1, 128>}, {transform_indices = @transform_3, window_bounds = array<i64: 32, 128>}, {transform_indices = @transform_4, window_bounds = array<i64: 32, 128>}]} {
    %c0 = arith.constant 0 : index
    %c0_0 = arith.constant 0 : index
    %0 = vector.load %arg2[%c0, %c0_0] : memref<32x128xf32, #tpu.memory_space<vmem>>, vector<32x128xf32>
    %c0_1 = arith.constant 0 : index
    %c0_2 = arith.constant 0 : index
    %1 = vector.load %arg3[%c0_1, %c0_2] : memref<1x128xf32, #tpu.memory_space<vmem>>, vector<1x128xf32>
    %2 = vector.broadcast %1 : vector<1x128xf32> to vector<32x128xf32>
    %3 = arith.mulf %0, %2 : vector<32x128xf32>
    %c0_3 = arith.constant 0 : index
    %c0_4 = arith.constant 0 : index
    %4 = vector.load %arg4[%c0_3, %c0_4] : memref<1x128xf32, #tpu.memory_space<vmem>>, vector<1x128xf32>
    %5 = vector.broadcast %4 : vector<1x128xf32> to vector<32x128xf32>
    %6 = arith.addf %3, %5 : vector<32x128xf32>
    %c0_5 = arith.constant 0 : index
    %c0_6 = arith.constant 0 : index
    %7 = vector.load %arg5[%c0_5, %c0_6] : memref<32x128xbf16, #tpu.memory_space<vmem>>, vector<32x128xbf16>
    %8 = arith.extf %7 : vector<32x128xbf16> to vector<32x128xf32>
    %9 = arith.addf %6, %8 : vector<32x128xf32>
    %10 = arith.truncf %9 : vector<32x128xf32> to vector<32x128xbf16>
    %c0_7 = arith.constant 0 : index
    %c0_8 = arith.constant 0 : index
    %11 = vector.load %arg6[%c0_7, %c0_8] : memref<32x128xbf16, #tpu.memory_space<vmem>>, vector<32x128xbf16>
    tpu.vector_store %arg6[%c0_7, %c0_8], %10 {strides = array<i32>} : memref<32x128xbf16, #tpu.memory_space<vmem>>, vector<32x128xbf16>,
    return
  }
  func.func @transform_0(%arg0: i32, %arg1: i32) -> (i32, i32) {
    %c0_i32 = arith.constant 0 : i32
    return %arg0, %arg1 : i32, i32
  }
  func.func @transform_1(%arg0: i32, %arg1: i32) -> (i32, i32) {
    %c0_i32 = arith.constant 0 : i32
    %c0_i32_0 = arith.constant 0 : i32
    return %c0_i32, %arg1 : i32, i32
  }
  func.func @transform_2(%arg0: i32, %arg1: i32) -> (i32, i32) {
    %c0_i32 = arith.constant 0 : i32
    %c0_i32_0 = arith.constant 0 : i32
    return %c0_i32, %arg1 : i32, i32
  }
  func.func @transform_3(%arg0: i32, %arg1: i32) -> (i32, i32) {
    %c0_i32 = arith.constant 0 : i32
    return %arg0, %arg1 : i32, i32
  }
  func.func @transform_4(%arg0: i32, %arg1: i32) -> (i32, i32) {
    %c0_i32 = arith.constant 0 : i32
    return %arg0, %arg1 : i32, i32
  }
}

module attributes {stable_mosaic.version = 11 : i64} {
  func.func @_gemm_kernel(%arg0: i32, %arg1: i32, %arg2: i32, %arg3: memref<32x128xbf16, #tpu.memory_space<vmem>>, %arg4: memref<128x128xbf16, #tpu.memory_space<vmem>>, %arg5: memref<1x128xf32, #tpu.memory_space<vmem>>, %arg6: memref<32x128xf32, #tpu.memory_space<vmem>>, %arg7: memref<32x128xf32, #tpu.memory_space<vmem>>) attributes {dimension_semantics = [#tpu.dimension_semantics<parallel>, #tpu.dimension_semantics<parallel>, #tpu.dimension_semantics<arbitrary>], iteration_bounds = array<i64: 1, 1, 1>, scalar_prefetch = 0 : i64, scratch_operands = 1 : i64, tpu.core_type = #tpu.core_type<tc>, window_params = [{transform_indices = @transform_0, window_bounds = array<i64: 32, 128>}, {transform_indices = @transform_1, window_bounds = array<i64: 128, 128>}, {transform_indices = @transform_2, window_bounds = array<i64: 1, 128>}, {transform_indices = @transform_3, window_bounds = array<i64: 32, 128>}]} {
    %c0_i32 = arith.constant 0 : i32
    %0 = arith.cmpi eq, %arg2, %c0_i32 : i32
    %1 = arith.extui %0 : i1 to i32
    %c0_i32_0 = arith.constant 0 : i32
    %2 = arith.cmpi ne, %1, %c0_i32_0 : i32
    scf.if %2 {
      %cst_10 = arith.constant 0.000000e+00 : f32
      %12 = vector.broadcast %cst_10 : f32 to vector<32x128xf32>
      %c0_11 = arith.constant 0 : index
      %c0_12 = arith.constant 0 : index
      %13 = vector.load %arg7[%c0_11, %c0_12] : memref<32x128xf32, #tpu.memory_space<vmem>>, vector<32x128xf32>
      tpu.vector_store %arg7[%c0_11, %c0_12], %12 {strides = array<i32>} : memref<32x128xf32, #tpu.memory_space<vmem>>, vector<32x128xf32>,
    } else {
    }
    %c0 = arith.constant 0 : index
    %c0_1 = arith.constant 0 : index
    %3 = vector.load %arg7[%c0, %c0_1] : memref<32x128xf32, #tpu.memory_space<vmem>>, vector<32x128xf32>
    %c0_2 = arith.constant 0 : index
    %c0_3 = arith.constant 0 : index
    %4 = vector.load %arg3[%c0_2, %c0_3] : memref<32x128xbf16, #tpu.memory_space<vmem>>, vector<32x128xbf16>
    %c0_4 = arith.constant 0 : index
    %c0_5 = arith.constant 0 : index
    %5 = vector.load %arg4[%c0_4, %c0_5] : memref<128x128xbf16, #tpu.memory_space<vmem>>, vector<128x128xbf16>
    %cst = arith.constant dense<0.000000e+00> : vector<32x128xf32>
    %6 = tpu.matmul %4, %5, %cst {dimension_numbers = #tpu.dot_dimension_numbers<[1], [0], [0], [1], [0, 0, 1, 1], [], []>} : vector<32x128xbf16>, vector<128x128xbf16>, vector<32x128xf32> -> vector<32x128xf32>
    %7 = arith.addf %3, %6 : vector<32x128xf32>
    %c0_6 = arith.constant 0 : index
    %c0_7 = arith.constant 0 : index
    %8 = vector.load %arg7[%c0_6, %c0_7] : memref<32x128xf32, #tpu.memory_space<vmem>>, vector<32x128xf32>
    tpu.vector_store %arg7[%c0_6, %c0_7], %7 {strides = array<i32>} : memref<32x128xf32, #tpu.memory_space<vmem>>, vector<32x128xf32>,
    %c0_i32_8 = arith.constant 0 : i32
    %9 = arith.cmpi eq, %arg2, %c0_i32_8 : i32
    %10 = arith.extui %9 : i1 to i32
    %c0_i32_9 = arith.constant 0 : i32
    %11 = arith.cmpi ne, %10, %c0_i32_9 : i32
    scf.if %11 {
      %c0_10 = arith.constant 0 : index
      %c0_11 = arith.constant 0 : index
      %12 = vector.load %arg7[%c0_10, %c0_11] : memref<32x128xf32, #tpu.memory_space<vmem>>, vector<32x128xf32>
      %c0_12 = arith.constant 0 : index
      %c0_13 = arith.constant 0 : index
      %13 = vector.load %arg5[%c0_12, %c0_13] : memref<1x128xf32, #tpu.memory_space<vmem>>, vector<1x128xf32>
      %14 = vector.broadcast %13 : vector<1x128xf32> to vector<32x128xf32>
      %15 = arith.addf %12, %14 : vector<32x128xf32>
      %c0_14 = arith.constant 0 : index
      %c0_15 = arith.constant 0 : index
      %16 = vector.load %arg6[%c0_14, %c0_15] : memref<32x128xf32, #tpu.memory_space<vmem>>, vector<32x128xf32>
      tpu.vector_store %arg6[%c0_14, %c0_15], %15 {strides = array<i32>} : memref<32x128xf32, #tpu.memory_space<vmem>>, vector<32x128xf32>,
    } else {
    }
    return
  }
  func.func @transform_0(%arg0: i32, %arg1: i32, %arg2: i32) -> (i32, i32) {
    %c0_i32 = arith.constant 0 : i32
    return %arg0, %arg2 : i32, i32
  }
  func.func @transform_1(%arg0: i32, %arg1: i32, %arg2: i32) -> (i32, i32) {
    %c0_i32 = arith.constant 0 : i32
    return %arg2, %arg1 : i32, i32
  }
  func.func @transform_2(%arg0: i32, %arg1: i32, %arg2: i32) -> (i32, i32) {
    %c0_i32 = arith.constant 0 : i32
    %c0_i32_0 = arith.constant 0 : i32
    return %c0_i32, %arg1 : i32, i32
  }
  func.func @transform_3(%arg0: i32, %arg1: i32, %arg2: i32) -> (i32, i32) {
    %c0_i32 = arith.constant 0 : i32
    return %arg0, %arg1 : i32, i32
  }
}

module attributes {stable_mosaic.version = 11 : i64} {
  func.func @_gemm_kernel(%arg0: i32, %arg1: i32, %arg2: i32, %arg3: memref<256x512xbf16, #tpu.memory_space<vmem>>, %arg4: memref<512x128xbf16, #tpu.memory_space<vmem>>, %arg5: memref<1x128xf32, #tpu.memory_space<vmem>>, %arg6: memref<256x128xf32, #tpu.memory_space<vmem>>, %arg7: memref<256x128xf32, #tpu.memory_space<vmem>>) attributes {dimension_semantics = [#tpu.dimension_semantics<parallel>, #tpu.dimension_semantics<parallel>, #tpu.dimension_semantics<arbitrary>], iteration_bounds = array<i64: 2, 1, 1>, scalar_prefetch = 0 : i64, scratch_operands = 1 : i64, tpu.core_type = #tpu.core_type<tc>, window_params = [{transform_indices = @transform_0, window_bounds = array<i64: 256, 512>}, {transform_indices = @transform_1, window_bounds = array<i64: 512, 128>}, {transform_indices = @transform_2, window_bounds = array<i64: 1, 128>}, {transform_indices = @transform_3, window_bounds = array<i64: 256, 128>}]} {
    %c0_i32 = arith.constant 0 : i32
    %0 = arith.cmpi eq, %arg2, %c0_i32 : i32
    %1 = arith.extui %0 : i1 to i32
    %c0_i32_0 = arith.constant 0 : i32
    %2 = arith.cmpi ne, %1, %c0_i32_0 : i32
    scf.if %2 {
      %cst_10 = arith.constant 0.000000e+00 : f32
      %12 = vector.broadcast %cst_10 : f32 to vector<256x128xf32>
      %c0_11 = arith.constant 0 : index
      %c0_12 = arith.constant 0 : index
      %13 = vector.load %arg7[%c0_11, %c0_12] : memref<256x128xf32, #tpu.memory_space<vmem>>, vector<256x128xf32>
      tpu.vector_store %arg7[%c0_11, %c0_12], %12 {strides = array<i32>} : memref<256x128xf32, #tpu.memory_space<vmem>>, vector<256x128xf32>,
    } else {
    }
    %c0 = arith.constant 0 : index
    %c0_1 = arith.constant 0 : index
    %3 = vector.load %arg7[%c0, %c0_1] : memref<256x128xf32, #tpu.memory_space<vmem>>, vector<256x128xf32>
    %c0_2 = arith.constant 0 : index
    %c0_3 = arith.constant 0 : index
    %4 = vector.load %arg3[%c0_2, %c0_3] : memref<256x512xbf16, #tpu.memory_space<vmem>>, vector<256x512xbf16>
    %c0_4 = arith.constant 0 : index
    %c0_5 = arith.constant 0 : index
    %5 = vector.load %arg4[%c0_4, %c0_5] : memref<512x128xbf16, #tpu.memory_space<vmem>>, vector<512x128xbf16>
    %cst = arith.constant dense<0.000000e+00> : vector<256x128xf32>
    %6 = tpu.matmul %4, %5, %cst {dimension_numbers = #tpu.dot_dimension_numbers<[1], [0], [0], [1], [0, 0, 1, 1], [], []>} : vector<256x512xbf16>, vector<512x128xbf16>, vector<256x128xf32> -> vector<256x128xf32>
    %7 = arith.addf %3, %6 : vector<256x128xf32>
    %c0_6 = arith.constant 0 : index
    %c0_7 = arith.constant 0 : index
    %8 = vector.load %arg7[%c0_6, %c0_7] : memref<256x128xf32, #tpu.memory_space<vmem>>, vector<256x128xf32>
    tpu.vector_store %arg7[%c0_6, %c0_7], %7 {strides = array<i32>} : memref<256x128xf32, #tpu.memory_space<vmem>>, vector<256x128xf32>,
    %c0_i32_8 = arith.constant 0 : i32
    %9 = arith.cmpi eq, %arg2, %c0_i32_8 : i32
    %10 = arith.extui %9 : i1 to i32
    %c0_i32_9 = arith.constant 0 : i32
    %11 = arith.cmpi ne, %10, %c0_i32_9 : i32
    scf.if %11 {
      %c0_10 = arith.constant 0 : index
      %c0_11 = arith.constant 0 : index
      %12 = vector.load %arg7[%c0_10, %c0_11] : memref<256x128xf32, #tpu.memory_space<vmem>>, vector<256x128xf32>
      %c0_12 = arith.constant 0 : index
      %c0_13 = arith.constant 0 : index
      %13 = vector.load %arg5[%c0_12, %c0_13] : memref<1x128xf32, #tpu.memory_space<vmem>>, vector<1x128xf32>
      %14 = vector.broadcast %13 : vector<1x128xf32> to vector<256x128xf32>
      %15 = arith.addf %12, %14 : vector<256x128xf32>
      %16 = math.tanh %15 : vector<256x128xf32>
      %c0_14 = arith.constant 0 : index
      %c0_15 = arith.constant 0 : index
      %17 = vector.load %arg6[%c0_14, %c0_15] : memref<256x128xf32, #tpu.memory_space<vmem>>, vector<256x128xf32>
      tpu.vector_store %arg6[%c0_14, %c0_15], %16 {strides = array<i32>} : memref<256x128xf32, #tpu.memory_space<vmem>>, vector<256x128xf32>,
    } else {
    }
    return
  }
  func.func @transform_0(%arg0: i32, %arg1: i32, %arg2: i32) -> (i32, i32) {
    %c0_i32 = arith.constant 0 : i32
    return %arg0, %arg2 : i32, i32
  }
  func.func @transform_1(%arg0: i32, %arg1: i32, %arg2: i32) -> (i32, i32) {
    %c0_i32 = arith.constant 0 : i32
    return %arg2, %arg1 : i32, i32
  }
  func.func @transform_2(%arg0: i32, %arg1: i32, %arg2: i32) -> (i32, i32) {
    %c0_i32 = arith.constant 0 : i32
    %c0_i32_0 = arith.constant 0 : i32
    return %c0_i32, %arg1 : i32, i32
  }
  func.func @transform_3(%arg0: i32, %arg1: i32, %arg2: i32) -> (i32, i32) {
    %c0_i32 = arith.constant 0 : i32
    return %arg0, %arg1 : i32, i32
  }
}

</mosaic_0001>

<llo_original>
// kernel: resnet_generator_forward.47
$region0: #{resnet_generator_forward.47}
  #allocation0 [shape = 'u32[]', space=smem, size = 0x4, offset = 0x4, fixed_abs, tag = 'smem constant byte address 0x4 - core index']
  #allocation1 [shape = 'u32[72,128]{1,0:T(1,128)}', space=vmem, size = 0x9000, scoped, tag = 'internal scratch']
  %s0 = inlined_call_operand.vmem [shape: f32[512,128], index: 0, kind: input, shape index: {}]
  %s1 = inlined_call_operand.vmem [shape: f32[2,128], index: 1, kind: output, shape index: {}]
  %s2 = sld [smem:[#allocation0]]
  $region18: #{resnet_generator_forward.47} parent=0
    _
  %s4 = ssub.s32 1, %s2
  %s5 = scalar_select 0, %s4, %s2
  // Predicated region
  $region2: #{resnet_generator_forward.47} parent=0 // pred_check
    _
  $region3: #{resnet_generator_forward.47} parent=0 // pred_check_branch
    %7 = sbr.rel (0) target = $region5
  $region4: #{resnet_generator_forward.47} parent=0 // pred_region
    _
  $region5: #{resnet_generator_forward.47} parent=0 // pred_fallthru
    _
  %p8 = scmp.eq.s32.totalorder 0, 0
  // Predicated region
  $region6: #{resnet_generator_forward.47} parent=0 // pred_check
    %p9 = pneg %p8
  $region7: #{resnet_generator_forward.47} parent=0 // pred_check_branch
    %11 = sbr.rel (%p9) target = $region9
  $region8: #{resnet_generator_forward.47} parent=0 // pred_region
    %12 = vst [vmem:[%s1] sm:$0x3] 0.0
  $region9: #{resnet_generator_forward.47} parent=0 // pred_fallthru
    _
  %v13 = vld [vmem:[%s0] sm:$0xff]
  %v14 = vld [vmem:[%s0 + $0x8] sm:$0xff]
  %v15 = vld [vmem:[%s0 + $0x10] sm:$0xff]
  %v16 = vld [vmem:[%s0 + $0x18] sm:$0xff]
  %v17 = vld [vmem:[%s0 + $0x20] sm:$0xff]
  %v18 = vld [vmem:[%s0 + $0x28] sm:$0xff]
  %v19 = vld [vmem:[%s0 + $0x30] sm:$0xff]
  %v20 = vld [vmem:[%s0 + $0x38] sm:$0xff]
  %v21 = vld [vmem:[%s0 + $0x40] sm:$0xff]
  %v22 = vld [vmem:[%s0 + $0x48] sm:$0xff]
  %v23 = vld [vmem:[%s0 + $0x50] sm:$0xff]
  %v24 = vld [vmem:[%s0 + $0x58] sm:$0xff]
  %v25 = vld [vmem:[%s0 + $0x60] sm:$0xff]
  %v26 = vld [vmem:[%s0 + $0x68] sm:$0xff]
  %v27 = vld [vmem:[%s0 + $0x70] sm:$0xff]
  %v28 = vld [vmem:[%s0 + $0x78] sm:$0xff]
  %v29 = vld [vmem:[%s0 + $0x80] sm:$0xff]
  %v30 = vld [vmem:[%s0 + $0x88] sm:$0xff]
  %v31 = vld [vmem:[%s0 + $0x90] sm:$0xff]
  %v32 = vld [vmem:[%s0 + $0x98] sm:$0xff]
  %v33 = vld [vmem:[%s0 + $0xa0] sm:$0xff]
  %v34 = vld [vmem:[%s0 + $0xa8] sm:$0xff]
  %v35 = vld [vmem:[%s0 + $0xb0] sm:$0xff]
  %v36 = vld [vmem:[%s0 + $0xb8] sm:$0xff]
  %v37 = vld [vmem:[%s0 + $0xc0] sm:$0xff]
  %v38 = vld [vmem:[%s0 + $0xc8] sm:$0xff]
  %v39 = vld [vmem:[%s0 + $0xd0] sm:$0xff]
  %v40 = vld [vmem:[%s0 + $0xd8] sm:$0xff]
  %v41 = vld [vmem:[%s0 + $0xe0] sm:$0xff]
  %v42 = vld [vmem:[%s0 + $0xe8] sm:$0xff]
  %v43 = vld [vmem:[%s0 + $0xf0] sm:$0xff]
  %v44 = vld [vmem:[%s0 + $0xf8] sm:$0xff]
  %v45 = vld [vmem:[%s0 + $0x100] sm:$0xff]
  %v46 = vld [vmem:[%s0 + $0x108] sm:$0xff]
  %v47 = vld [vmem:[%s0 + $0x110] sm:$0xff]
  %v48 = vld [vmem:[%s0 + $0x118] sm:$0xff]
  %v49 = vld [vmem:[%s0 + $0x120] sm:$0xff]
  %v50 = vld [vmem:[%s0 + $0x128] sm:$0xff]
  %v51 = vld [vmem:[%s0 + $0x130] sm:$0xff]
  %v52 = vld [vmem:[%s0 + $0x138] sm:$0xff]
  %v53 = vld [vmem:[%s0 + $0x140] sm:$0xff]
  %v54 = vld [vmem:[%s0 + $0x148] sm:$0xff]
  %v55 = vld [vmem:[%s0 + $0x150] sm:$0xff]
  %v56 = vld [vmem:[%s0 + $0x158] sm:$0xff]
  %v57 = vld [vmem:[%s0 + $0x160] sm:$0xff]
  %v58 = vld [vmem:[%s0 + $0x168] sm:$0xff]
  %v59 = vld [vmem:[%s0 + $0x170] sm:$0xff]
  %v60 = vld [vmem:[%s0 + $0x178] sm:$0xff]
  %v61 = vld [vmem:[%s0 + $0x180] sm:$0xff]
  %v62 = vld [vmem:[%s0 + $0x188] sm:$0xff]
  %v63 = vld [vmem:[%s0 + $0x190] sm:$0xff]
  %v64 = vld [vmem:[%s0 + $0x198] sm:$0xff]
  %v65 = vld [vmem:[%s0 + $0x1a0] sm:$0xff]
  %v66 = vld [vmem:[%s0 + $0x1a8] sm:$0xff]
  %v67 = vld [vmem:[%s0 + $0x1b0] sm:$0xff]
  %v68 = vld [vmem:[%s0 + $0x1b8] sm:$0xff]
  %v69 = vld [vmem:[%s0 + $0x1c0] sm:$0xff]
  %v70 = vld [vmem:[%s0 + $0x1c8] sm:$0xff]
  %v71 = vld [vmem:[%s0 + $0x1d0] sm:$0xff]
  %v72 = vld [vmem:[%s0 + $0x1d8] sm:$0xff]
  %v73 = vld [vmem:[%s0 + $0x1e0] sm:$0xff]
  %v74 = vld [vmem:[%s0 + $0x1e8] sm:$0xff]
  %v75 = vld [vmem:[%s0 + $0x1f0] sm:$0xff]
  %v76 = vld [vmem:[%s0 + $0x1f8] sm:$0xff]
  %v77 = vadd.f32 %v13, %v14
  %v78 = vadd.f32 %v77, %v15
  %v79 = vadd.f32 %v78, %v16
  %v80 = vadd.f32 %v79, %v17
  %v81 = vadd.f32 %v80, %v18
  %v82 = vadd.f32 %v81, %v19
  %v83 = vadd.f32 %v82, %v20
  %v84 = vadd.f32 %v83, %v21
  %v85 = vadd.f32 %v84, %v22
  %v86 = vadd.f32 %v85, %v23
  %v87 = vadd.f32 %v86, %v24
  %v88 = vadd.f32 %v87, %v25
  %v89 = vadd.f32 %v88, %v26
  %v90 = vadd.f32 %v89, %v27
  %v91 = vadd.f32 %v90, %v28
  %v92 = vadd.f32 %v91, %v29
  %v93 = vadd.f32 %v92, %v30
  %v94 = vadd.f32 %v93, %v31
  %v95 = vadd.f32 %v94, %v32
  %v96 = vadd.f32 %v95, %v33
  %v97 = vadd.f32 %v96, %v34
  %v98 = vadd.f32 %v97, %v35
  %v99 = vadd.f32 %v98, %v36
  %v100 = vadd.f32 %v99, %v37
  %v101 = vadd.f32 %v100, %v38
  %v102 = vadd.f32 %v101, %v39
  %v103 = vadd.f32 %v102, %v40
  %v104 = vadd.f32 %v103, %v41
  %v105 = vadd.f32 %v104, %v42
  %v106 = vadd.f32 %v105, %v43
  %v107 = vadd.f32 %v106, %v44
  %v108 = vadd.f32 %v107, %v45
  %v109 = vadd.f32 %v108, %v46
  %v110 = vadd.f32 %v109, %v47
  %v111 = vadd.f32 %v110, %v48
  %v112 = vadd.f32 %v111, %v49
  %v113 = vadd.f32 %v112, %v50
  %v114 = vadd.f32 %v113, %v51
  %v115 = vadd.f32 %v114, %v52
  %v116 = vadd.f32 %v115, %v53
  %v117 = vadd.f32 %v116, %v54
  %v118 = vadd.f32 %v117, %v55
  %v119 = vadd.f32 %v118, %v56
  %v120 = vadd.f32 %v119, %v57
  %v121 = vadd.f32 %v120, %v58
  %v122 = vadd.f32 %v121, %v59
  %v123 = vadd.f32 %v122, %v60
  %v124 = vadd.f32 %v123, %v61
  %v125 = vadd.f32 %v124, %v62
  %v126 = vadd.f32 %v125, %v63
  %v127 = vadd.f32 %v126, %v64
  %v128 = vadd.f32 %v127, %v65
  %v129 = vadd.f32 %v128, %v66
  %v130 = vadd.f32 %v129, %v67
  %v131 = vadd.f32 %v130, %v68
  %v132 = vadd.f32 %v131, %v69
  %v133 = vadd.f32 %v132, %v70
  %v134 = vadd.f32 %v133, %v71
  %v135 = vadd.f32 %v134, %v72
  %v136 = vadd.f32 %v135, %v73
  %v137 = vadd.f32 %v136, %v74
  %v138 = vadd.f32 %v137, %v75
  %v139 = vadd.f32 %v138, %v76
  %v140 = vrot.slane %v139, 4
  %v141 = vadd.f32 %v139, %v140
  %v142 = vrot.slane %v141, 2
  %v143 = vadd.f32 %v141, %v142
  %v144 = vrot.slane %v143, 1
  %v145 = vadd.f32 %v143, %v144
  %v146 = vmul.f32 %v13, %v13
  %v147 = vmul.f32 %v14, %v14
  %v148 = vmul.f32 %v15, %v15
  %v149 = vmul.f32 %v16, %v16
  %v150 = vmul.f32 %v17, %v17
  %v151 = vmul.f32 %v18, %v18
  %v152 = vmul.f32 %v19, %v19
  %v153 = vmul.f32 %v20, %v20
  %v154 = vmul.f32 %v21, %v21
  %v155 = vmul.f32 %v22, %v22
  %v156 = vmul.f32 %v23, %v23
  %v157 = vmul.f32 %v24, %v24
  %v158 = vmul.f32 %v25, %v25
  %v159 = vmul.f32 %v26, %v26
  %v160 = vmul.f32 %v27, %v27
  %v161 = vmul.f32 %v28, %v28
  %v162 = vmul.f32 %v29, %v29
  %v163 = vmul.f32 %v30, %v30
  %v164 = vmul.f32 %v31, %v31
  %v165 = vmul.f32 %v32, %v32
  %v166 = vmul.f32 %v33, %v33
  %v167 = vmul.f32 %v34, %v34
  %v168 = vmul.f32 %v35, %v35
  %v169 = vmul.f32 %v36, %v36
  %v170 = vmul.f32 %v37, %v37
  %v171 = vmul.f32 %v38, %v38
  %v172 = vmul.f32 %v39, %v39
  %v173 = vmul.f32 %v40, %v40
  %v174 = vmul.f32 %v41, %v41
  %v175 = vmul.f32 %v42, %v42
  %v176 = vmul.f32 %v43, %v43
  %v177 = vmul.f32 %v44, %v44
  %v178 = vmul.f32 %v45, %v45
  %v179 = vmul.f32 %v46, %v46
  %v180 = vmul.f32 %v47, %v47
  %v181 = vmul.f32 %v48, %v48
  %v182 = vmul.f32 %v49, %v49
  %v183 = vmul.f32 %v50, %v50
  %v184 = vmul.f32 %v51, %v51
  %v185 = vmul.f32 %v52, %v52
  %v186 = vmul.f32 %v53, %v53
  %v187 = vmul.f32 %v54, %v54
  %v188 = vmul.f32 %v55, %v55
  %v189 = vmul.f32 %v56, %v56
  %v190 = vmul.f32 %v57, %v57
  %v191 = vmul.f32 %v58, %v58
  %v192 = vmul.f32 %v59, %v59
  %v193 = vmul.f32 %v60, %v60
  %v194 = vmul.f32 %v61, %v61
  %v195 = vmul.f32 %v62, %v62
  %v196 = vmul.f32 %v63, %v63
  %v197 = vmul.f32 %v64, %v64
  %v198 = vmul.f32 %v65, %v65
  %v199 = vmul.f32 %v66, %v66
  %v200 = vmul.f32 %v67, %v67
  %v201 = vmul.f32 %v68, %v68
  %v202 = vmul.f32 %v69, %v69
  %v203 = vmul.f32 %v70, %v70
  %v204 = vmul.f32 %v71, %v71
  %v205 = vmul.f32 %v72, %v72
  %v206 = vmul.f32 %v73, %v73
  %v207 = vmul.f32 %v74, %v74
  %v208 = vmul.f32 %v75, %v75
  %v209 = vmul.f32 %v76, %v76
  %v210 = vadd.f32 %v146, %v147
  %v211 = vadd.f32 %v210, %v148
  %v212 = vadd.f32 %v211, %v149
  %v213 = vadd.f32 %v212, %v150
  %v214 = vadd.f32 %v213, %v151
  %v215 = vadd.f32 %v214, %v152
  %v216 = vadd.f32 %v215, %v153
  %v217 = vadd.f32 %v216, %v154
  %v218 = vadd.f32 %v217, %v155
  %v219 = vadd.f32 %v218, %v156
  %v220 = vadd.f32 %v219, %v157
  %v221 = vadd.f32 %v220, %v158
  %v222 = vadd.f32 %v221, %v159
  %v223 = vadd.f32 %v222, %v160
  %v224 = vadd.f32 %v223, %v161
  %v225 = vadd.f32 %v224, %v162
  %v226 = vadd.f32 %v225, %v163
  %v227 = vadd.f32 %v226, %v164
  %v228 = vadd.f32 %v227, %v165
  %v229 = vadd.f32 %v228, %v166
  %v230 = vadd.f32 %v229, %v167
  %v231 = vadd.f32 %v230, %v168
  %v232 = vadd.f32 %v231, %v169
  %v233 = vadd.f32 %v232, %v170
  %v234 = vadd.f32 %v233, %v171
  %v235 = vadd.f32 %v234, %v172
  %v236 = vadd.f32 %v235, %v173
  %v237 = vadd.f32 %v236, %v174
  %v238 = vadd.f32 %v237, %v175
  %v239 = vadd.f32 %v238, %v176
  %v240 = vadd.f32 %v239, %v177
  %v241 = vadd.f32 %v240, %v178
  %v242 = vadd.f32 %v241, %v179
  %v243 = vadd.f32 %v242, %v180
  %v244 = vadd.f32 %v243, %v181
  %v245 = vadd.f32 %v244, %v182
  %v246 = vadd.f32 %v245, %v183
  %v247 = vadd.f32 %v246, %v184
  %v248 = vadd.f32 %v247, %v185
  %v249 = vadd.f32 %v248, %v186
  %v250 = vadd.f32 %v249, %v187
  %v251 = vadd.f32 %v250, %v188
  %v252 = vadd.f32 %v251, %v189
  %v253 = vadd.f32 %v252, %v190
  %v254 = vadd.f32 %v253, %v191
  %v255 = vadd.f32 %v254, %v192
  %v256 = vadd.f32 %v255, %v193
  %v257 = vadd.f32 %v256, %v194
  %v258 = vadd.f32 %v257, %v195
  %v259 = vadd.f32 %v258, %v196
  %v260 = vadd.f32 %v259, %v197
  %v261 = vadd.f32 %v260, %v198
  %v262 = vadd.f32 %v261, %v199
  %v263 = vadd.f32 %v262, %v200
  %v264 = vadd.f32 %v263, %v201
  %v265 = vadd.f32 %v264, %v202
  %v266 = vadd.f32 %v265, %v203
  %v267 = vadd.f32 %v266, %v204
  %v268 = vadd.f32 %v267, %v205
  %v269 = vadd.f32 %v268, %v206
  %v270 = vadd.f32 %v269, %v207
  %v271 = vadd.f32 %v270, %v208
  %v272 = vadd.f32 %v271, %v209
  %v273 = vrot.slane %v272, 4
  %v274 = vadd.f32 %v272, %v273
  %v275 = vrot.slane %v274, 2
  %v276 = vadd.f32 %v274, %v275
  %v277 = vrot.slane %v276, 1
  %v278 = vadd.f32 %v276, %v277
  %v279 = vld [vmem:[%s1] sm:$0x3]
  %vm280 = vcmask 1040384
  %v281 = vsel %vm280, %v145, %v278
  %v282 = vadd.f32 %v279, %v281
  %283 = vst [vmem:[%s1] sm:$0x3] %v282
  // Predicated region
  $region10: #{resnet_generator_forward.47} parent=0 // pred_check
    _
  $region11: #{resnet_generator_forward.47} parent=0 // pred_check_branch
    %285 = sbr.rel (0) target = $region13
  $region12: #{resnet_generator_forward.47} parent=0 // pred_region
    _
  $region13: #{resnet_generator_forward.47} parent=0 // pred_fallthru
    _
  // Predicated region
  $region14: #{resnet_generator_forward.47} parent=0 // pred_check
    _
  $region15: #{resnet_generator_forward.47} parent=0 // pred_check_branch
    %287 = sbr.rel (0) target = $region17
  $region16: #{resnet_generator_forward.47} parent=0 // pred_region
    _
  $region17: #{resnet_generator_forward.47} parent=0 // pred_fallthru
    _

// kernel: resnet_generator_forward.46
$region0: #{resnet_generator_forward.46}
  #allocation0 [shape = 'u32[]', space=smem, size = 0x4, offset = 0x4, fixed_abs, tag = 'smem constant byte address 0x4 - core index']
  #allocation1 [shape = 'u32[72,128]{1,0:T(1,128)}', space=vmem, size = 0x9000, scoped, tag = 'internal scratch']
  #allocation2 [shape = 'f32[256,128]{1,0:T(8,128)}', space=vmem, size = 0x20000, scoped, tag = 'scratch operand']
  %s0 = inlined_call_operand.vmem [shape: bf16[512,256], index: 0, kind: input, shape index: {}]
  %s1 = inlined_call_operand.vmem [shape: bf16[256,128], index: 1, kind: input, shape index: {}]
  %s2 = inlined_call_operand.vmem [shape: f32[1,128], index: 2, kind: input, shape index: {}]
  %s3 = inlined_call_operand.vmem [shape: f32[512,128], index: 3, kind: output, shape index: {}]
  %s4 = sld [smem:[#allocation0]]
  $region53: #{resnet_generator_forward.46} parent=0
    _
  %s6 = ssub.s32 1, %s4
  %s7 = scalar_select 0, %s6, %s4
  loop: start=0, step=1, limit=4
  $region2: #{resnet_generator_forward.46} parent=0 // loop_pre_header
    _
  $region3: #{resnet_generator_forward.46} parent=0 // loop_header
    %s9 = sphi 0, %s13
    %p10 = scmp.ge.s32.totalorder %s9, 4
    %s16 = sphi 0, %s35
    %s17 = sphi 0, %s31
    %s18 = sphi 0, %s27
    %s19 = sphi 0, %s16
    %s20 = sphi 0, %s17
    %s21 = sphi 0, %s18
    %s22 = sphi 0, %s19
    %s23 = sphi 0, %s20
    %s24 = sphi 0, %s21
    %s40 = sphi 0, %s42
    %s43 = sphi 0, %s40
    %s44 = sphi 0, %s43
    %s60 = sphi 0, %s44
    %s68 = sphi 0, %s70
    %s71 = sphi 0, %s68
    %s72 = sphi 0, %s71
    %s88 = sphi 0, %s72
    %s94 = sphi 0, %s96
    %s97 = sphi 0, %s94
    %s98 = sphi 0, %s97
    %s114 = sphi 0, %s98
    %s122 = sphi 0, %s124
    %s125 = sphi 0, %s122
    %s126 = sphi 0, %s125
    %s142 = sphi 0, %s126
  $region4: #{resnet_generator_forward.46} parent=0 // loop_header_branch
    %12 = sbr.rel (%p10) target = $region8
  $region5: #{resnet_generator_forward.46} parent=0 // loop_body
    %s14 = ssub.s32 %s9, 1
    %s15 = ssub.s32 %s9, 2
    %s25 = sadd.s32 1, %s18
    %p26 = scmp.ge.s32.totalorder %s25, 1
    %s27 = scalar_select %p26, 0, %s25
    %s28 = sadd.s32 1, %s17
    %s29 = scalar_select %p26, %s28, %s17
    %p30 = scmp.ge.s32.totalorder %s29, 1
    %s31 = scalar_select %p30, 0, %s29
    %s32 = sadd.s32 1, %s16
    %s33 = scalar_select %p30, %s32, %s16
    %p34 = scmp.ge.s32.totalorder %s33, 2
    %s35 = scalar_select %p34, 0, %s33
    %s36 = ssub.s32 %s16, %s35
    %s37 = ssub.s32 %s18, %s27
    %s38 = sor.u32 %s36, %s37
    %p39 = scmp.eq.s32.totalorder %s38, 0
    %s41 = sadd.s32 %s40, 1
    %s42 = scalar_select %p39, %s40, %s41
    %p45 = pneg %p39
    %p46 = scmp.eq.s32.totalorder %s9, 1
    %p47 = por %p45, %p46
    %p48 = scmp.ne.s32.totalorder %s40, %s43
    %p49 = scmp.eq.s32.totalorder %s9, 0
    %p50 = por %p48, %p49
    %p51 = scmp.ne.s32.totalorder %s40, %s43
    %p52 = scmp.eq.s32.totalorder %s14, 1
    %p53 = por %p51, %p52
    %p54 = scmp.ne.s32.totalorder %s43, %s44
    %p55 = scmp.eq.s32.totalorder %s14, 0
    %p56 = por %p54, %p55
    %p57 = scmp.ne.s32.totalorder %s43, %s44
    %p58 = scmp.eq.s32.totalorder %s15, 1
    %p59 = por %p57, %p58
    %p61 = scmp.ne.s32.totalorder %s44, %s60
    %p62 = scmp.eq.s32.totalorder %s15, 0
    %p63 = por %p61, %p62
    %s64 = ssub.s32 %s18, %s27
    %s65 = ssub.s32 %s17, %s31
    %s66 = sor.u32 %s64, %s65
    %p67 = scmp.eq.s32.totalorder %s66, 0
    %s69 = sadd.s32 %s68, 1
    %s70 = scalar_select %p67, %s68, %s69
    %p73 = pneg %p67
    %p74 = scmp.eq.s32.totalorder %s9, 1
    %p75 = por %p73, %p74
    %p76 = scmp.ne.s32.totalorder %s68, %s71
    %p77 = scmp.eq.s32.totalorder %s9, 0
    %p78 = por %p76, %p77
    %p79 = scmp.ne.s32.totalorder %s68, %s71
    %p80 = scmp.eq.s32.totalorder %s14, 1
    %p81 = por %p79, %p80
    %p82 = scmp.ne.s32.totalorder %s71, %s72
    %p83 = scmp.eq.s32.totalorder %s14, 0
    %p84 = por %p82, %p83
    %p85 = scmp.ne.s32.totalorder %s71, %s72
    %p86 = scmp.eq.s32.totalorder %s15, 1
    %p87 = por %p85, %p86
    %p89 = scmp.ne.s32.totalorder %s72, %s88
    %p90 = scmp.eq.s32.totalorder %s15, 0
    %p91 = por %p89, %p90
    %s92 = ssub.s32 %s17, %s31
    %p93 = scmp.eq.s32.totalorder %s92, 0
    %s95 = sadd.s32 %s94, 1
    %s96 = scalar_select %p93, %s94, %s95
    %p99 = pneg %p93
    %p100 = scmp.eq.s32.totalorder %s9, 1
    %p101 = por %p99, %p100
    %p102 = scmp.ne.s32.totalorder %s94, %s97
    %p103 = scmp.eq.s32.totalorder %s9, 0
    %p104 = por %p102, %p103
    %p105 = scmp.ne.s32.totalorder %s94, %s97
    %p106 = scmp.eq.s32.totalorder %s14, 1
    %p107 = por %p105, %p106
    %p108 = scmp.ne.s32.totalorder %s97, %s98
    %p109 = scmp.eq.s32.totalorder %s14, 0
    %p110 = por %p108, %p109
    %p111 = scmp.ne.s32.totalorder %s97, %s98
    %p112 = scmp.eq.s32.totalorder %s15, 1
    %p113 = por %p111, %p112
    %p115 = scmp.ne.s32.totalorder %s98, %s114
    %p116 = scmp.eq.s32.totalorder %s15, 0
    %p117 = por %p115, %p116
    %s118 = ssub.s32 %s16, %s35
    %s119 = ssub.s32 %s17, %s31
    %s120 = sor.u32 %s118, %s119
    %p121 = scmp.eq.s32.totalorder %s120, 0
    %s123 = sadd.s32 %s122, 1
    %s124 = scalar_select %p121, %s122, %s123
    %p127 = pneg %p121
    %p128 = scmp.eq.s32.totalorder %s9, 1
    %p129 = por %p127, %p128
    %p130 = scmp.ne.s32.totalorder %s122, %s125
    %p131 = scmp.eq.s32.totalorder %s9, 0
    %p132 = por %p130, %p131
    %p133 = scmp.ne.s32.totalorder %s122, %s125
    %p134 = scmp.eq.s32.totalorder %s14, 1
    %p135 = por %p133, %p134
    %p136 = scmp.ne.s32.totalorder %s125, %s126
    %p137 = scmp.eq.s32.totalorder %s14, 0
    %p138 = por %p136, %p137
    %p139 = scmp.ne.s32.totalorder %s125, %s126
    %p140 = scmp.eq.s32.totalorder %s15, 1
    %p141 = por %p139, %p140
    %p143 = scmp.ne.s32.totalorder %s126, %s142
    %p144 = scmp.eq.s32.totalorder %s15, 0
    %p145 = por %p143, %p144
    %p146 = scmp.le.s32.totalorder 1, %s9
    %p147 = scmp.lt.s32.totalorder %s9, 3
    %p148 = pnand %p146, %p147
    %p149 = pneg %p148
    // Predicated region
    $region9: #{resnet_generator_forward.46} parent=5 // pred_check
      _
    $region10: #{resnet_generator_forward.46} parent=5 // pred_check_branch
      %151 = sbr.rel (%p148) target = $region12
    $region11: #{resnet_generator_forward.46} parent=5 // pred_region
      %s152 = ssub.s32 %s9, 1
      // Predicated region
      $region13: #{resnet_generator_forward.46} parent=11 // pred_check
        %p153 = pneg %p84
      $region14: #{resnet_generator_forward.46} parent=11 // pred_check_branch
        %155 = sbr.rel (%p153) target = $region16
      $region15: #{resnet_generator_forward.46} parent=11 // pred_region
        %s156 = smul.u32 32, %s21
        %p157 = scmp.lt.s32.totalorder %s156, 31
        %s158 = scalar_select %p157, %s156, 31
        %p159 = scmp.lt.s32.totalorder %s20, 0
        %s160 = scalar_select %p159, %s20, 0
        %s161 = sadd.s32 %s160, %s158
        %s162 = smul.addr %s161, 4
        %s163 = scalar_lea.vmem %s1, %s162
        %s164 = smul.u32 32, %s21
      $region16: #{resnet_generator_forward.46} parent=11 // pred_fallthru
        _
      // Predicated region
      $region17: #{resnet_generator_forward.46} parent=11 // pred_check
        %p165 = pneg %p110
      $region18: #{resnet_generator_forward.46} parent=11 // pred_check_branch
        %167 = sbr.rel (%p165) target = $region20
      $region19: #{resnet_generator_forward.46} parent=11 // pred_region
        %p168 = scmp.lt.s32.totalorder %s20, 0
        %s169 = scalar_select %p168, %s20, 0
        %s170 = scalar_lea.vmem %s2, %s169
      $region20: #{resnet_generator_forward.46} parent=11 // pred_fallthru
        _
    $region12: #{resnet_generator_forward.46} parent=5 // pred_fallthru
      _
    %p171 = scmp.lt.s32.totalorder %s9, 2
    // Predicated region
    $region21: #{resnet_generator_forward.46} parent=5 // pred_check
      %p172 = pneg %p171
    $region22: #{resnet_generator_forward.46} parent=5 // pred_check_branch
      %174 = sbr.rel (%p172) target = $region24
    $region23: #{resnet_generator_forward.46} parent=5 // pred_region
      // Predicated region
      $region25: #{resnet_generator_forward.46} parent=23 // pred_check
        %p175 = pneg %p50
      $region26: #{resnet_generator_forward.46} parent=23 // pred_check_branch
        %177 = sbr.rel (%p175) target = $region28
      $region27: #{resnet_generator_forward.46} parent=23 // pred_region
        %s178 = smul.u32 32, %s16
        %s179 = smul.u32 2, %s18
        %p180 = scmp.lt.s32.totalorder %s178, 63
        %s181 = scalar_select %p180, %s178, 63
        %p182 = scmp.lt.s32.totalorder %s179, 1
        %s183 = scalar_select %p182, %s179, 1
        %s184 = smul.addr %s181, 2
        %s185 = sadd.s32 %s183, %s184
        %s186 = smul.addr %s185, 4
        %s187 = scalar_lea.vmem %s0, %s186
        %s188 = smul.u32 32, %s16
        %s189 = smul.u32 2, %s18
      $region28: #{resnet_generator_forward.46} parent=23 // pred_fallthru
        _
    $region24: #{resnet_generator_forward.46} parent=5 // pred_fallthru
      _
    %p190 = scmp.le.s32.totalorder 1, %s9
    %p191 = scmp.lt.s32.totalorder %s9, 3
    %p192 = pnand %p190, %p191
    %p193 = pneg %p192
    // Predicated region
    $region29: #{resnet_generator_forward.46} parent=5 // pred_check
      _
    $region30: #{resnet_generator_forward.46} parent=5 // pred_check_branch
      %195 = sbr.rel (%p192) target = $region32
    $region31: #{resnet_generator_forward.46} parent=5 // pred_region
      %s196 = ssub.s32 %s9, 1
      %s197 = smul.u32 32, %s19
      %s198 = smul.u32 2, %s21
      %p199 = scmp.lt.s32.totalorder %s197, 63
      %s200 = scalar_select %p199, %s197, 63
      %p201 = scmp.lt.s32.totalorder %s198, 1
      %s202 = scalar_select %p201, %s198, 1
      %s203 = smul.addr %s200, 2
      %s204 = sadd.s32 %s202, %s203
      %s205 = smul.addr %s204, 4
      %s206 = scalar_lea.vmem %s0, %s205
      %p207 = pneg %p56
      %p208 = pneg %p53
      %s209 = smul.u32 32, %s21
      %p210 = scmp.lt.s32.totalorder %s209, 31
      %s211 = scalar_select %p210, %s209, 31
      %p212 = scmp.lt.s32.totalorder %s20, 0
      %s213 = scalar_select %p212, %s20, 0
      %s214 = sadd.s32 %s213, %s211
      %s215 = smul.addr %s214, 4
      %s216 = scalar_lea.vmem %s1, %s215
      %p217 = pneg %p84
      %p218 = pneg %p81
      %p219 = scmp.lt.s32.totalorder %s20, 0
      %s220 = scalar_select %p219, %s20, 0
      %s221 = scalar_lea.vmem %s2, %s220
      %p222 = pneg %p110
      %p223 = pneg %p107
      %p224 = pneg %p138
      %p225 = pneg %p135
      %s226 = smul.u32 32, %s19
      %p227 = scmp.lt.s32.totalorder %s226, 63
      %s228 = scalar_select %p227, %s226, 63
      %p229 = scmp.lt.s32.totalorder %s20, 0
      %s230 = scalar_select %p229, %s20, 0
      %s231 = sadd.s32 %s230, %s228
      %s232 = smul.addr %s231, 8
      %s233 = scalar_lea.vmem %s3, %s232
      %s234 = smul.u32 32, %s19
      %s235 = smul.u32 2, %s21
      %p236 = scmp.lt.s32.totalorder %s234, 63
      %s237 = scalar_select %p236, %s234, 63
      %p238 = scmp.lt.s32.totalorder %s235, 1
      %s239 = scalar_select %p238, %s235, 1
      %s240 = smul.addr %s237, 2
      %s241 = sadd.s32 %s239, %s240
      %s242 = smul.addr %s241, 4
      %s243 = scalar_lea.vmem %s0, %s242
      %s244 = smul.u32 32, %s19
      %s245 = smul.u32 2, %s21
      %s246 = smul.u32 32, %s21
      %p247 = scmp.lt.s32.totalorder %s246, 31
      %s248 = scalar_select %p247, %s246, 31
      %p249 = scmp.lt.s32.totalorder %s20, 0
      %s250 = scalar_select %p249, %s20, 0
      %s251 = sadd.s32 %s250, %s248
      %s252 = smul.addr %s251, 4
      %s253 = scalar_lea.vmem %s1, %s252
      %s254 = smul.u32 32, %s21
      %p255 = scmp.lt.s32.totalorder %s20, 0
      %s256 = scalar_select %p255, %s20, 0
      %s257 = scalar_lea.vmem %s2, %s256
      %s258 = smul.u32 32, %s19
      %p259 = scmp.lt.s32.totalorder %s258, 63
      %s260 = scalar_select %p259, %s258, 63
      %p261 = scmp.lt.s32.totalorder %s20, 0
      %s262 = scalar_select %p261, %s20, 0
      %s263 = sadd.s32 %s262, %s260
      %s264 = smul.addr %s263, 8
      %s265 = scalar_lea.vmem %s3, %s264
      %s266 = smul.u32 32, %s19
      %p267 = scmp.eq.s32.totalorder %s21, 0
      // Predicated region
      $region33: #{resnet_generator_forward.46} parent=31 // pred_check
        %p268 = pneg %p267
      $region34: #{resnet_generator_forward.46} parent=31 // pred_check_branch
        %270 = sbr.rel (%p268) target = $region36
      $region35: #{resnet_generator_forward.46} parent=31 // pred_region
        %271 = vst [vmem:[#allocation2] sm:$0xff] 0.0
        %272 = vst [vmem:[#allocation2 + $0x8] sm:$0xff] 0.0
        %273 = vst [vmem:[#allocation2 + $0x10] sm:$0xff] 0.0
        %274 = vst [vmem:[#allocation2 + $0x18] sm:$0xff] 0.0
        %275 = vst [vmem:[#allocation2 + $0x20] sm:$0xff] 0.0
        %276 = vst [vmem:[#allocation2 + $0x28] sm:$0xff] 0.0
        %277 = vst [vmem:[#allocation2 + $0x30] sm:$0xff] 0.0
        %278 = vst [vmem:[#allocation2 + $0x38] sm:$0xff] 0.0
        %279 = vst [vmem:[#allocation2 + $0x40] sm:$0xff] 0.0
        %280 = vst [vmem:[#allocation2 + $0x48] sm:$0xff] 0.0
        %281 = vst [vmem:[#allocation2 + $0x50] sm:$0xff] 0.0
        %282 = vst [vmem:[#allocation2 + $0x58] sm:$0xff] 0.0
        %283 = vst [vmem:[#allocation2 + $0x60] sm:$0xff] 0.0
        %284 = vst [vmem:[#allocation2 + $0x68] sm:$0xff] 0.0
        %285 = vst [vmem:[#allocation2 + $0x70] sm:$0xff] 0.0
        %286 = vst [vmem:[#allocation2 + $0x78] sm:$0xff] 0.0
        %287 = vst [vmem:[#allocation2 + $0x80] sm:$0xff] 0.0
        %288 = vst [vmem:[#allocation2 + $0x88] sm:$0xff] 0.0
        %289 = vst [vmem:[#allocation2 + $0x90] sm:$0xff] 0.0
        %290 = vst [vmem:[#allocation2 + $0x98] sm:$0xff] 0.0
        %291 = vst [vmem:[#allocation2 + $0xa0] sm:$0xff] 0.0
        %292 = vst [vmem:[#allocation2 + $0xa8] sm:$0xff] 0.0
        %293 = vst [vmem:[#allocation2 + $0xb0] sm:$0xff] 0.0
        %294 = vst [vmem:[#allocation2 + $0xb8] sm:$0xff] 0.0
        %295 = vst [vmem:[#allocation2 + $0xc0] sm:$0xff] 0.0
        %296 = vst [vmem:[#allocation2 + $0xc8] sm:$0xff] 0.0
        %297 = vst [vmem:[#allocation2 + $0xd0] sm:$0xff] 0.0
        %298 = vst [vmem:[#allocation2 + $0xd8] sm:$0xff] 0.0
        %299 = vst [vmem:[#allocation2 + $0xe0] sm:$0xff] 0.0
        %300 = vst [vmem:[#allocation2 + $0xe8] sm:$0xff] 0.0
        %301 = vst [vmem:[#allocation2 + $0xf0] sm:$0xff] 0.0
        %302 = vst [vmem:[#allocation2 + $0xf8] sm:$0xff] 0.0
      $region36: #{resnet_generator_forward.46} parent=31 // pred_fallthru
        _
      %v303 = vld [vmem:[#allocation2] sm:$0xff]
      %v304 = vld [vmem:[#allocation2 + $0x8] sm:$0xff]
      %v305 = vld [vmem:[#allocation2 + $0x10] sm:$0xff]
      %v306 = vld [vmem:[#allocation2 + $0x18] sm:$0xff]
      %v307 = vld [vmem:[#allocation2 + $0x20] sm:$0xff]
      %v308 = vld [vmem:[#allocation2 + $0x28] sm:$0xff]
      %v309 = vld [vmem:[#allocation2 + $0x30] sm:$0xff]
      %v310 = vld [vmem:[#allocation2 + $0x38] sm:$0xff]
      %v311 = vld [vmem:[#allocation2 + $0x40] sm:$0xff]
      %v312 = vld [vmem:[#allocation2 + $0x48] sm:$0xff]
      %v313 = vld [vmem:[#allocation2 + $0x50] sm:$0xff]
      %v314 = vld [vmem:[#allocation2 + $0x58] sm:$0xff]
      %v315 = vld [vmem:[#allocation2 + $0x60] sm:$0xff]
      %v316 = vld [vmem:[#allocation2 + $0x68] sm:$0xff]
      %v317 = vld [vmem:[#allocation2 + $0x70] sm:$0xff]
      %v318 = vld [vmem:[#allocation2 + $0x78] sm:$0xff]
      %v319 = vld [vmem:[#allocation2 + $0x80] sm:$0xff]
      %v320 = vld [vmem:[#allocation2 + $0x88] sm:$0xff]
      %v321 = vld [vmem:[#allocation2 + $0x90] sm:$0xff]
      %v322 = vld [vmem:[#allocation2 + $0x98] sm:$0xff]
      %v323 = vld [vmem:[#allocation2 + $0xa0] sm:$0xff]
      %v324 = vld [vmem:[#allocation2 + $0xa8] sm:$0xff]
      %v325 = vld [vmem:[#allocation2 + $0xb0] sm:$0xff]
      %v326 = vld [vmem:[#allocation2 + $0xb8] sm:$0xff]
      %v327 = vld [vmem:[#allocation2 + $0xc0] sm:$0xff]
      %v328 = vld [vmem:[#allocation2 + $0xc8] sm:$0xff]
      %v329 = vld [vmem:[#allocation2 + $0xd0] sm:$0xff]
      %v330 = vld [vmem:[#allocation2 + $0xd8] sm:$0xff]
      %v331 = vld [vmem:[#allocation2 + $0xe0] sm:$0xff]
      %v332 = vld [vmem:[#allocation2 + $0xe8] sm:$0xff]
      %v333 = vld [vmem:[#allocation2 + $0xf0] sm:$0xff]
      %v334 = vld [vmem:[#allocation2 + $0xf8] sm:$0xff]
      %v335 = vld [vmem:[%s243] sm:$0xff]
      %v336 = vld [vmem:[%s243 + $0x8] sm:$0xff]
      %v337 = vld [vmem:[%s243 + $0x10] sm:$0xff]
      %v338 = vld [vmem:[%s243 + $0x18] sm:$0xff]
      %v339 = vld [vmem:[%s243 + $0x20] sm:$0xff]
      %v340 = vld [vmem:[%s243 + $0x28] sm:$0xff]
      %v341 = vld [vmem:[%s243 + $0x30] sm:$0xff]
      %v342 = vld [vmem:[%s243 + $0x38] sm:$0xff]
      %v343 = vld [vmem:[%s243 + $0x40] sm:$0xff]
      %v344 = vld [vmem:[%s243 + $0x48] sm:$0xff]
      %v345 = vld [vmem:[%s243 + $0x50] sm:$0xff]
      %v346 = vld [vmem:[%s243 + $0x58] sm:$0xff]
      %v347 = vld [vmem:[%s243 + $0x60] sm:$0xff]
      %v348 = vld [vmem:[%s243 + $0x68] sm:$0xff]
      %v349 = vld [vmem:[%s243 + $0x70] sm:$0xff]
      %v350 = vld [vmem:[%s243 + $0x78] sm:$0xff]
      %v351 = vld [vmem:[%s243 + $0x80] sm:$0xff]
      %v352 = vld [vmem:[%s243 + $0x88] sm:$0xff]
      %v353 = vld [vmem:[%s243 + $0x90] sm:$0xff]
      %v354 = vld [vmem:[%s243 + $0x98] sm:$0xff]
      %v355 = vld [vmem:[%s243 + $0xa0] sm:$0xff]
      %v356 = vld [vmem:[%s243 + $0xa8] sm:$0xff]
      %v357 = vld [vmem:[%s243 + $0xb0] sm:$0xff]
      %v358 = vld [vmem:[%s243 + $0xb8] sm:$0xff]
      %v359 = vld [vmem:[%s243 + $0xc0] sm:$0xff]
      %v360 = vld [vmem:[%s243 + $0xc8] sm:$0xff]
      %v361 = vld [vmem:[%s243 + $0xd0] sm:$0xff]
      %v362 = vld [vmem:[%s243 + $0xd8] sm:$0xff]
      %v363 = vld [vmem:[%s243 + $0xe0] sm:$0xff]
      %v364 = vld [vmem:[%s243 + $0xe8] sm:$0xff]
      %v365 = vld [vmem:[%s243 + $0xf0] sm:$0xff]
      %v366 = vld [vmem:[%s243 + $0xf8] sm:$0xff]
      %v367 = vld [vmem:[%s253] sm:$0xf]
      %v368 = vld [vmem:[%s253 + $0x4] sm:$0xf]
      %v369 = vld [vmem:[%s253 + $0x8] sm:$0xf]
      %v370 = vld [vmem:[%s253 + $0xc] sm:$0xf]
      %v371 = vld [vmem:[%s253 + $0x10] sm:$0xf]
      %v372 = vld [vmem:[%s253 + $0x14] sm:$0xf]
      %v373 = vld [vmem:[%s253 + $0x18] sm:$0xf]
      %v374 = vld [vmem:[%s253 + $0x1c] sm:$0xf]
      %v375 = vld [vmem:[%s253 + $0x20] sm:$0xf]
      %v376 = vld [vmem:[%s253 + $0x24] sm:$0xf]
      %v377 = vld [vmem:[%s253 + $0x28] sm:$0xf]
      %v378 = vld [vmem:[%s253 + $0x2c] sm:$0xf]
      %v379 = vld [vmem:[%s253 + $0x30] sm:$0xf]
      %v380 = vld [vmem:[%s253 + $0x34] sm:$0xf]
      %v381 = vld [vmem:[%s253 + $0x38] sm:$0xf]
      %v382 = vld [vmem:[%s253 + $0x3c] sm:$0xf]
      %v383 = vld [vmem:[%s253 + $0x40] sm:$0xf]
      %v384 = vld [vmem:[%s253 + $0x44] sm:$0xf]
      %v385 = vld [vmem:[%s253 + $0x48] sm:$0xf]
      %v386 = vld [vmem:[%s253 + $0x4c] sm:$0xf]
      %v387 = vld [vmem:[%s253 + $0x50] sm:$0xf]
      %v388 = vld [vmem:[%s253 + $0x54] sm:$0xf]
      %v389 = vld [vmem:[%s253 + $0x58] sm:$0xf]
      %v390 = vld [vmem:[%s253 + $0x5c] sm:$0xf]
      %v391 = vld [vmem:[%s253 + $0x60] sm:$0xf]
      %v392 = vld [vmem:[%s253 + $0x64] sm:$0xf]
      %v393 = vld [vmem:[%s253 + $0x68] sm:$0xf]
      %v394 = vld [vmem:[%s253 + $0x6c] sm:$0xf]
      %v395 = vld [vmem:[%s253 + $0x70] sm:$0xf]
      %v396 = vld [vmem:[%s253 + $0x74] sm:$0xf]
      %v397 = vld [vmem:[%s253 + $0x78] sm:$0xf]
      %v398 = vld [vmem:[%s253 + $0x7c] sm:$0xf]
      %v431 = vunpack.c.l.b16 %v335
      %v432 = vunpack.c.h.b16 %v335
      %v433 = vunpack.c.l.b16 %v336
      %v434 = vunpack.c.h.b16 %v336
      %v435 = vunpack.c.l.b16 %v337
      %v436 = vunpack.c.h.b16 %v337
      %v437 = vunpack.c.l.b16 %v338
      %v438 = vunpack.c.h.b16 %v338
      %v439 = vunpack.c.l.b16 %v339
      %v440 = vunpack.c.h.b16 %v339
      %v441 = vunpack.c.l.b16 %v340
      %v442 = vunpack.c.h.b16 %v340
      %v443 = vunpack.c.l.b16 %v341
      %v444 = vunpack.c.h.b16 %v341
      %v445 = vunpack.c.l.b16 %v342
      %v446 = vunpack.c.h.b16 %v342
      %v447 = vunpack.c.l.b16 %v343
      %v448 = vunpack.c.h.b16 %v343
      %v449 = vunpack.c.l.b16 %v344
      %v450 = vunpack.c.h.b16 %v344
      %v451 = vunpack.c.l.b16 %v345
      %v452 = vunpack.c.h.b16 %v345
      %v453 = vunpack.c.l.b16 %v346
      %v454 = vunpack.c.h.b16 %v346
      %v455 = vunpack.c.l.b16 %v347
      %v456 = vunpack.c.h.b16 %v347
      %v457 = vunpack.c.l.b16 %v348
      %v458 = vunpack.c.h.b16 %v348
      %v459 = vunpack.c.l.b16 %v349
      %v460 = vunpack.c.h.b16 %v349
      %v461 = vunpack.c.l.b16 %v350
      %v462 = vunpack.c.h.b16 %v350
      %v463 = vunpack.c.l.b16 %v351
      %v464 = vunpack.c.h.b16 %v351
      %v465 = vunpack.c.l.b16 %v352
      %v466 = vunpack.c.h.b16 %v352
      %v467 = vunpack.c.l.b16 %v353
      %v468 = vunpack.c.h.b16 %v353
      %v469 = vunpack.c.l.b16 %v354
      %v470 = vunpack.c.h.b16 %v354
      %v471 = vunpack.c.l.b16 %v355
      %v472 = vunpack.c.h.b16 %v355
      %v473 = vunpack.c.l.b16 %v356
      %v474 = vunpack.c.h.b16 %v356
      %v475 = vunpack.c.l.b16 %v357
      %v476 = vunpack.c.h.b16 %v357
      %v477 = vunpack.c.l.b16 %v358
      %v478 = vunpack.c.h.b16 %v358
      %v479 = vunpack.c.l.b16 %v359
      %v480 = vunpack.c.h.b16 %v359
      %v481 = vunpack.c.l.b16 %v360
      %v482 = vunpack.c.h.b16 %v360
      %v483 = vunpack.c.l.b16 %v361
      %v484 = vunpack.c.h.b16 %v361
      %v485 = vunpack.c.l.b16 %v362
      %v486 = vunpack.c.h.b16 %v362
      %v487 = vunpack.c.l.b16 %v363
      %v488 = vunpack.c.h.b16 %v363
      %v489 = vunpack.c.l.b16 %v364
      %v490 = vunpack.c.h.b16 %v364
      %v491 = vunpack.c.l.b16 %v365
      %v492 = vunpack.c.h.b16 %v365
      %v493 = vunpack.c.l.b16 %v366
      %v494 = vunpack.c.h.b16 %v366
      %v495 = vpack.c.b16 %v433, %v431
      %v496 = vpack.c.b16 %v434, %v432
      %v497 = vpack.c.b16 %v437, %v435
      %v498 = vpack.c.b16 %v438, %v436
      %v499 = vpack.c.b16 %v441, %v439
      %v500 = vpack.c.b16 %v442, %v440
      %v501 = vpack.c.b16 %v445, %v443
      %v502 = vpack.c.b16 %v446, %v444
      %v503 = vpack.c.b16 %v449, %v447
      %v504 = vpack.c.b16 %v450, %v448
      %v505 = vpack.c.b16 %v453, %v451
      %v506 = vpack.c.b16 %v454, %v452
      %v507 = vpack.c.b16 %v457, %v455
      %v508 = vpack.c.b16 %v458, %v456
      %v509 = vpack.c.b16 %v461, %v459
      %v510 = vpack.c.b16 %v462, %v460
      %v511 = vpack.c.b16 %v465, %v463
      %v512 = vpack.c.b16 %v466, %v464
      %v513 = vpack.c.b16 %v469, %v467
      %v514 = vpack.c.b16 %v470, %v468
      %v515 = vpack.c.b16 %v473, %v471
      %v516 = vpack.c.b16 %v474, %v472
      %v517 = vpack.c.b16 %v477, %v475
      %v518 = vpack.c.b16 %v478, %v476
      %v519 = vpack.c.b16 %v481, %v479
      %v520 = vpack.c.b16 %v482, %v480
      %v521 = vpack.c.b16 %v485, %v483
      %v522 = vpack.c.b16 %v486, %v484
      %v523 = vpack.c.b16 %v489, %v487
      %v524 = vpack.c.b16 %v490, %v488
      %v525 = vpack.c.b16 %v493, %v491
      %v526 = vpack.c.b16 %v494, %v492
      %v591 = vunpack.c.l.b16 %v367
      %v592 = vunpack.c.l.b16 %v368
      %v593 = vunpack.c.l.b16 %v369
      %v594 = vunpack.c.l.b16 %v370
      %v595 = vunpack.c.l.b16 %v371
      %v596 = vunpack.c.l.b16 %v372
      %v597 = vunpack.c.l.b16 %v373
      %v598 = vunpack.c.l.b16 %v374
      %v599 = vunpack.c.l.b16 %v375
      %v600 = vunpack.c.l.b16 %v376
      %v601 = vunpack.c.l.b16 %v377
      %v602 = vunpack.c.l.b16 %v378
      %v603 = vunpack.c.l.b16 %v379
      %v604 = vunpack.c.l.b16 %v380
      %v605 = vunpack.c.l.b16 %v381
      %v606 = vunpack.c.l.b16 %v382
      %v607 = vunpack.c.l.b16 %v383
      %v608 = vunpack.c.l.b16 %v384
      %v609 = vunpack.c.l.b16 %v385
      %v610 = vunpack.c.l.b16 %v386
      %v611 = vunpack.c.l.b16 %v387
      %v612 = vunpack.c.l.b16 %v388
      %v613 = vunpack.c.l.b16 %v389
      %v614 = vunpack.c.l.b16 %v390
      %v615 = vunpack.c.l.b16 %v391
      %v616 = vunpack.c.l.b16 %v392
      %v617 = vunpack.c.l.b16 %v393
      %v618 = vunpack.c.l.b16 %v394
      %v619 = vunpack.c.l.b16 %v395
      %v620 = vunpack.c.l.b16 %v396
      %v621 = vunpack.c.l.b16 %v397
      %v622 = vunpack.c.l.b16 %v398
      %v623 = vpack.c.b16 %v592, %v591
      %v624 = vpack.c.b16 %v594, %v593
      %v625 = vpack.c.b16 %v596, %v595
      %v626 = vpack.c.b16 %v598, %v597
      %v627 = vpack.c.b16 %v600, %v599
      %v628 = vpack.c.b16 %v602, %v601
      %v629 = vpack.c.b16 %v604, %v603
      %v630 = vpack.c.b16 %v606, %v605
      %v631 = vpack.c.b16 %v608, %v607
      %v632 = vpack.c.b16 %v610, %v609
      %v633 = vpack.c.b16 %v612, %v611
      %v634 = vpack.c.b16 %v614, %v613
      %v635 = vpack.c.b16 %v616, %v615
      %v636 = vpack.c.b16 %v618, %v617
      %v637 = vpack.c.b16 %v620, %v619
      %v638 = vpack.c.b16 %v622, %v621
      %655 = vmatpush.bf16.msra.mxu0 %v630
      %656 = vmatpush.bf16.msra.mxu0 %v629
      %657 = vmatpush.bf16.msra.mxu0 %v628
      %658 = vmatpush.bf16.msra.mxu0 %v627
      %659 = vmatpush.bf16.msra.mxu0 %v626
      %660 = vmatpush.bf16.msra.mxu0 %v625
      %661 = vmatpush.bf16.msra.mxu0 %v624
      %662 = vmatpush.bf16.msra.mxu0 %v623
      %663 = vmatmul.bf16.gmra.mxu0 %v495
      %v664 = vpop.f32.mrf.mxu0
      %v665 = vadd.f32 0.0, %v664
      %v666 = vpop.f32.mrf.mxu0
      %v667 = vadd.f32 0.0, %v666
      %668 = vmatmul.bf16.gmra.mxu0 %v497
      %v669 = vpop.f32.mrf.mxu0
      %v670 = vadd.f32 0.0, %v669
      %v671 = vpop.f32.mrf.mxu0
      %v672 = vadd.f32 0.0, %v671
      %673 = vmatmul.bf16.gmra.mxu0 %v499
      %v674 = vpop.f32.mrf.mxu0
      %v675 = vadd.f32 0.0, %v674
      %v676 = vpop.f32.mrf.mxu0
      %v677 = vadd.f32 0.0, %v676
      %678 = vmatmul.bf16.gmra.mxu0 %v501
      %v679 = vpop.f32.mrf.mxu0
      %v680 = vadd.f32 0.0, %v679
      %v681 = vpop.f32.mrf.mxu0
      %v682 = vadd.f32 0.0, %v681
      %683 = vmatmul.bf16.gmra.mxu0 %v503
      %v684 = vpop.f32.mrf.mxu0
      %v685 = vadd.f32 0.0, %v684
      %v686 = vpop.f32.mrf.mxu0
      %v687 = vadd.f32 0.0, %v686
      %688 = vmatmul.bf16.gmra.mxu0 %v505
      %v689 = vpop.f32.mrf.mxu0
      %v690 = vadd.f32 0.0, %v689
      %v691 = vpop.f32.mrf.mxu0
      %v692 = vadd.f32 0.0, %v691
      %693 = vmatmul.bf16.gmra.mxu0 %v507
      %v694 = vpop.f32.mrf.mxu0
      %v695 = vadd.f32 0.0, %v694
      %v696 = vpop.f32.mrf.mxu0
      %v697 = vadd.f32 0.0, %v696
      %698 = vmatmul.bf16.gmra.mxu0 %v509
      %v699 = vpop.f32.mrf.mxu0
      %v700 = vadd.f32 0.0, %v699
      %v701 = vpop.f32.mrf.mxu0
      %v702 = vadd.f32 0.0, %v701
      %703 = vmatmul.bf16.gmra.mxu0 %v511
      %v704 = vpop.f32.mrf.mxu0
      %v705 = vadd.f32 0.0, %v704
      %v706 = vpop.f32.mrf.mxu0
      %v707 = vadd.f32 0.0, %v706
      %708 = vmatmul.bf16.gmra.mxu0 %v513
      %v709 = vpop.f32.mrf.mxu0
      %v710 = vadd.f32 0.0, %v709
      %v711 = vpop.f32.mrf.mxu0
      %v712 = vadd.f32 0.0, %v711
      %713 = vmatmul.bf16.gmra.mxu0 %v515
      %v714 = vpop.f32.mrf.mxu0
      %v715 = vadd.f32 0.0, %v714
      %v716 = vpop.f32.mrf.mxu0
      %v717 = vadd.f32 0.0, %v716
      %718 = vmatmul.bf16.gmra.mxu0 %v517
      %v719 = vpop.f32.mrf.mxu0
      %v720 = vadd.f32 0.0, %v719
      %v721 = vpop.f32.mrf.mxu0
      %v722 = vadd.f32 0.0, %v721
      %723 = vmatmul.bf16.gmra.mxu0 %v519
      %v724 = vpop.f32.mrf.mxu0
      %v725 = vadd.f32 0.0, %v724
      %v726 = vpop.f32.mrf.mxu0
      %v727 = vadd.f32 0.0, %v726
      %728 = vmatmul.bf16.gmra.mxu0 %v521
      %v729 = vpop.f32.mrf.mxu0
      %v730 = vadd.f32 0.0, %v729
      %v731 = vpop.f32.mrf.mxu0
      %v732 = vadd.f32 0.0, %v731
      %733 = vmatmul.bf16.gmra.mxu0 %v523
      %v734 = vpop.f32.mrf.mxu0
      %v735 = vadd.f32 0.0, %v734
      %v736 = vpop.f32.mrf.mxu0
      %v737 = vadd.f32 0.0, %v736
      %738 = vmatmul.bf16.gmra.mxu0 %v525
      %v739 = vpop.f32.mrf.mxu0
      %v740 = vadd.f32 0.0, %v739
      %v741 = vpop.f32.mrf.mxu0
      %v742 = vadd.f32 0.0, %v741
      %743 = vdwg.mxu0
      %744 = vmatpush.bf16.msra.mxu0 %v638
      %745 = vmatpush.bf16.msra.mxu0 %v637
      %746 = vmatpush.bf16.msra.mxu0 %v636
      %747 = vmatpush.bf16.msra.mxu0 %v635
      %748 = vmatpush.bf16.msra.mxu0 %v634
      %749 = vmatpush.bf16.msra.mxu0 %v633
      %750 = vmatpush.bf16.msra.mxu0 %v632
      %751 = vmatpush.bf16.msra.mxu0 %v631
      %752 = vmatmul.bf16.gmra.mxu0 %v496
      %v753 = vpop.f32.mrf.mxu0
      %v754 = vadd.f32 %v665, %v753
      %v755 = vpop.f32.mrf.mxu0
      %v756 = vadd.f32 %v667, %v755
      %757 = vmatmul.bf16.gmra.mxu0 %v498
      %v758 = vpop.f32.mrf.mxu0
      %v759 = vadd.f32 %v670, %v758
      %v760 = vpop.f32.mrf.mxu0
      %v761 = vadd.f32 %v672, %v760
      %762 = vmatmul.bf16.gmra.mxu0 %v500
      %v763 = vpop.f32.mrf.mxu0
      %v764 = vadd.f32 %v675, %v763
      %v765 = vpop.f32.mrf.mxu0
      %v766 = vadd.f32 %v677, %v765
      %767 = vmatmul.bf16.gmra.mxu0 %v502
      %v768 = vpop.f32.mrf.mxu0
      %v769 = vadd.f32 %v680, %v768
      %v770 = vpop.f32.mrf.mxu0
      %v771 = vadd.f32 %v682, %v770
      %772 = vmatmul.bf16.gmra.mxu0 %v504
      %v773 = vpop.f32.mrf.mxu0
      %v774 = vadd.f32 %v685, %v773
      %v775 = vpop.f32.mrf.mxu0
      %v776 = vadd.f32 %v687, %v775
      %777 = vmatmul.bf16.gmra.mxu0 %v506
      %v778 = vpop.f32.mrf.mxu0
      %v779 = vadd.f32 %v690, %v778
      %v780 = vpop.f32.mrf.mxu0
      %v781 = vadd.f32 %v692, %v780
      %782 = vmatmul.bf16.gmra.mxu0 %v508
      %v783 = vpop.f32.mrf.mxu0
      %v784 = vadd.f32 %v695, %v783
      %v785 = vpop.f32.mrf.mxu0
      %v786 = vadd.f32 %v697, %v785
      %787 = vmatmul.bf16.gmra.mxu0 %v510
      %v788 = vpop.f32.mrf.mxu0
      %v789 = vadd.f32 %v700, %v788
      %v790 = vpop.f32.mrf.mxu0
      %v791 = vadd.f32 %v702, %v790
      %792 = vmatmul.bf16.gmra.mxu0 %v512
      %v793 = vpop.f32.mrf.mxu0
      %v794 = vadd.f32 %v705, %v793
      %v795 = vpop.f32.mrf.mxu0
      %v796 = vadd.f32 %v707, %v795
      %797 = vmatmul.bf16.gmra.mxu0 %v514
      %v798 = vpop.f32.mrf.mxu0
      %v799 = vadd.f32 %v710, %v798
      %v800 = vpop.f32.mrf.mxu0
      %v801 = vadd.f32 %v712, %v800
      %802 = vmatmul.bf16.gmra.mxu0 %v516
      %v803 = vpop.f32.mrf.mxu0
      %v804 = vadd.f32 %v715, %v803
      %v805 = vpop.f32.mrf.mxu0
      %v806 = vadd.f32 %v717, %v805
      %807 = vmatmul.bf16.gmra.mxu0 %v518
      %v808 = vpop.f32.mrf.mxu0
      %v809 = vadd.f32 %v720, %v808
      %v810 = vpop.f32.mrf.mxu0
      %v811 = vadd.f32 %v722, %v810
      %812 = vmatmul.bf16.gmra.mxu0 %v520
      %v813 = vpop.f32.mrf.mxu0
      %v814 = vadd.f32 %v725, %v813
      %v815 = vpop.f32.mrf.mxu0
      %v816 = vadd.f32 %v727, %v815
      %817 = vmatmul.bf16.gmra.mxu0 %v522
      %v818 = vpop.f32.mrf.mxu0
      %v819 = vadd.f32 %v730, %v818
      %v820 = vpop.f32.mrf.mxu0
      %v821 = vadd.f32 %v732, %v820
      %822 = vmatmul.bf16.gmra.mxu0 %v524
      %v823 = vpop.f32.mrf.mxu0
      %v824 = vadd.f32 %v735, %v823
      %v825 = vpop.f32.mrf.mxu0
      %v826 = vadd.f32 %v737, %v825
      %827 = vmatmul.bf16.gmra.mxu0 %v526
      %v828 = vpop.f32.mrf.mxu0
      %v829 = vadd.f32 %v740, %v828
      %v830 = vpop.f32.mrf.mxu0
      %v831 = vadd.f32 %v742, %v830
      %832 = vdwg.mxu0
      %v833 = vadd.f32 %v303, %v754
      %v834 = vadd.f32 %v304, %v756
      %v835 = vadd.f32 %v305, %v759
      %v836 = vadd.f32 %v306, %v761
      %v837 = vadd.f32 %v307, %v764
      %v838 = vadd.f32 %v308, %v766
      %v839 = vadd.f32 %v309, %v769
      %v840 = vadd.f32 %v310, %v771
      %v841 = vadd.f32 %v311, %v774
      %v842 = vadd.f32 %v312, %v776
      %v843 = vadd.f32 %v313, %v779
      %v844 = vadd.f32 %v314, %v781
      %v845 = vadd.f32 %v315, %v784
      %v846 = vadd.f32 %v316, %v786
      %v847 = vadd.f32 %v317, %v789
      %v848 = vadd.f32 %v318, %v791
      %v849 = vadd.f32 %v319, %v794
      %v850 = vadd.f32 %v320, %v796
      %v851 = vadd.f32 %v321, %v799
      %v852 = vadd.f32 %v322, %v801
      %v853 = vadd.f32 %v323, %v804
      %v854 = vadd.f32 %v324, %v806
      %v855 = vadd.f32 %v325, %v809
      %v856 = vadd.f32 %v326, %v811
      %v857 = vadd.f32 %v327, %v814
      %v858 = vadd.f32 %v328, %v816
      %v859 = vadd.f32 %v329, %v819
      %v860 = vadd.f32 %v330, %v821
      %v861 = vadd.f32 %v331, %v824
      %v862 = vadd.f32 %v332, %v826
      %v863 = vadd.f32 %v333, %v829
      %v864 = vadd.f32 %v334, %v831
      %865 = vst [vmem:[#allocation2] sm:$0xff] %v833
      %866 = vst [vmem:[#allocation2 + $0x8] sm:$0xff] %v834
      %867 = vst [vmem:[#allocation2 + $0x10] sm:$0xff] %v835
      %868 = vst [vmem:[#allocation2 + $0x18] sm:$0xff] %v836
      %869 = vst [vmem:[#allocation2 + $0x20] sm:$0xff] %v837
      %870 = vst [vmem:[#allocation2 + $0x28] sm:$0xff] %v838
      %871 = vst [vmem:[#allocation2 + $0x30] sm:$0xff] %v839
      %872 = vst [vmem:[#allocation2 + $0x38] sm:$0xff] %v840
      %873 = vst [vmem:[#allocation2 + $0x40] sm:$0xff] %v841
      %874 = vst [vmem:[#allocation2 + $0x48] sm:$0xff] %v842
      %875 = vst [vmem:[#allocation2 + $0x50] sm:$0xff] %v843
      %876 = vst [vmem:[#allocation2 + $0x58] sm:$0xff] %v844
      %877 = vst [vmem:[#allocation2 + $0x60] sm:$0xff] %v845
      %878 = vst [vmem:[#allocation2 + $0x68] sm:$0xff] %v846
      %879 = vst [vmem:[#allocation2 + $0x70] sm:$0xff] %v847
      %880 = vst [vmem:[#allocation2 + $0x78] sm:$0xff] %v848
      %881 = vst [vmem:[#allocation2 + $0x80] sm:$0xff] %v849
      %882 = vst [vmem:[#allocation2 + $0x88] sm:$0xff] %v850
      %883 = vst [vmem:[#allocation2 + $0x90] sm:$0xff] %v851
      %884 = vst [vmem:[#allocation2 + $0x98] sm:$0xff] %v852
      %885 = vst [vmem:[#allocation2 + $0xa0] sm:$0xff] %v853
      %886 = vst [vmem:[#allocation2 + $0xa8] sm:$0xff] %v854
      %887 = vst [vmem:[#allocation2 + $0xb0] sm:$0xff] %v855
      %888 = vst [vmem:[#allocation2 + $0xb8] sm:$0xff] %v856
      %889 = vst [vmem:[#allocation2 + $0xc0] sm:$0xff] %v857
      %890 = vst [vmem:[#allocation2 + $0xc8] sm:$0xff] %v858
      %891 = vst [vmem:[#allocation2 + $0xd0] sm:$0xff] %v859
      %892 = vst [vmem:[#allocation2 + $0xd8] sm:$0xff] %v860
      %893 = vst [vmem:[#allocation2 + $0xe0] sm:$0xff] %v861
      %894 = vst [vmem:[#allocation2 + $0xe8] sm:$0xff] %v862
      %895 = vst [vmem:[#allocation2 + $0xf0] sm:$0xff] %v863
      %896 = vst [vmem:[#allocation2 + $0xf8] sm:$0xff] %v864
      // Predicated region
      $region37: #{resnet_generator_forward.46} parent=31 // pred_check
        %p897 = pneg %p267
      $region38: #{resnet_generator_forward.46} parent=31 // pred_check_branch
        %899 = sbr.rel (%p897) target = $region40
      $region39: #{resnet_generator_forward.46} parent=31 // pred_region
        %v900 = vld [vmem:[#allocation2] sm:$0xff]
        %v901 = vld [vmem:[#allocation2 + $0x8] sm:$0xff]
        %v902 = vld [vmem:[#allocation2 + $0x10] sm:$0xff]
        %v903 = vld [vmem:[#allocation2 + $0x18] sm:$0xff]
        %v904 = vld [vmem:[#allocation2 + $0x20] sm:$0xff]
        %v905 = vld [vmem:[#allocation2 + $0x28] sm:$0xff]
        %v906 = vld [vmem:[#allocation2 + $0x30] sm:$0xff]
        %v907 = vld [vmem:[#allocation2 + $0x38] sm:$0xff]
        %v908 = vld [vmem:[#allocation2 + $0x40] sm:$0xff]
        %v909 = vld [vmem:[#allocation2 + $0x48] sm:$0xff]
        %v910 = vld [vmem:[#allocation2 + $0x50] sm:$0xff]
        %v911 = vld [vmem:[#allocation2 + $0x58] sm:$0xff]
        %v912 = vld [vmem:[#allocation2 + $0x60] sm:$0xff]
        %v913 = vld [vmem:[#allocation2 + $0x68] sm:$0xff]
        %v914 = vld [vmem:[#allocation2 + $0x70] sm:$0xff]
        %v915 = vld [vmem:[#allocation2 + $0x78] sm:$0xff]
        %v916 = vld [vmem:[#allocation2 + $0x80] sm:$0xff]
        %v917 = vld [vmem:[#allocation2 + $0x88] sm:$0xff]
        %v918 = vld [vmem:[#allocation2 + $0x90] sm:$0xff]
        %v919 = vld [vmem:[#allocation2 + $0x98] sm:$0xff]
        %v920 = vld [vmem:[#allocation2 + $0xa0] sm:$0xff]
        %v921 = vld [vmem:[#allocation2 + $0xa8] sm:$0xff]
        %v922 = vld [vmem:[#allocation2 + $0xb0] sm:$0xff]
        %v923 = vld [vmem:[#allocation2 + $0xb8] sm:$0xff]
        %v924 = vld [vmem:[#allocation2 + $0xc0] sm:$0xff]
        %v925 = vld [vmem:[#allocation2 + $0xc8] sm:$0xff]
        %v926 = vld [vmem:[#allocation2 + $0xd0] sm:$0xff]
        %v927 = vld [vmem:[#allocation2 + $0xd8] sm:$0xff]
        %v928 = vld [vmem:[#allocation2 + $0xe0] sm:$0xff]
        %v929 = vld [vmem:[#allocation2 + $0xe8] sm:$0xff]
        %v930 = vld [vmem:[#allocation2 + $0xf0] sm:$0xff]
        %v931 = vld [vmem:[#allocation2 + $0xf8] sm:$0xff]
        %v932 = vld [vmem:[%s257] sm:$0x1]
        %v934 = vperm.slane %v932, 0
        %v936 = vadd.f32 %v900, %v934
        %v937 = vadd.f32 %v901, %v934
        %v938 = vadd.f32 %v902, %v934
        %v939 = vadd.f32 %v903, %v934
        %v940 = vadd.f32 %v904, %v934
        %v941 = vadd.f32 %v905, %v934
        %v942 = vadd.f32 %v906, %v934
        %v943 = vadd.f32 %v907, %v934
        %v944 = vadd.f32 %v908, %v934
        %v945 = vadd.f32 %v909, %v934
        %v946 = vadd.f32 %v910, %v934
        %v947 = vadd.f32 %v911, %v934
        %v948 = vadd.f32 %v912, %v934
        %v949 = vadd.f32 %v913, %v934
        %v950 = vadd.f32 %v914, %v934
        %v951 = vadd.f32 %v915, %v934
        %v952 = vadd.f32 %v916, %v934
        %v953 = vadd.f32 %v917, %v934
        %v954 = vadd.f32 %v918, %v934
        %v955 = vadd.f32 %v919, %v934
        %v956 = vadd.f32 %v920, %v934
        %v957 = vadd.f32 %v921, %v934
        %v958 = vadd.f32 %v922, %v934
        %v959 = vadd.f32 %v923, %v934
        %v960 = vadd.f32 %v924, %v934
        %v961 = vadd.f32 %v925, %v934
        %v962 = vadd.f32 %v926, %v934
        %v963 = vadd.f32 %v927, %v934
        %v964 = vadd.f32 %v928, %v934
        %v965 = vadd.f32 %v929, %v934
        %v966 = vadd.f32 %v930, %v934
        %v967 = vadd.f32 %v931, %v934
        %968 = vst [vmem:[%s265] sm:$0xff] %v936
        %969 = vst [vmem:[%s265 + $0x8] sm:$0xff] %v937
        %970 = vst [vmem:[%s265 + $0x10] sm:$0xff] %v938
        %971 = vst [vmem:[%s265 + $0x18] sm:$0xff] %v939
        %972 = vst [vmem:[%s265 + $0x20] sm:$0xff] %v940
        %973 = vst [vmem:[%s265 + $0x28] sm:$0xff] %v941
        %974 = vst [vmem:[%s265 + $0x30] sm:$0xff] %v942
        %975 = vst [vmem:[%s265 + $0x38] sm:$0xff] %v943
        %976 = vst [vmem:[%s265 + $0x40] sm:$0xff] %v944
        %977 = vst [vmem:[%s265 + $0x48] sm:$0xff] %v945
        %978 = vst [vmem:[%s265 + $0x50] sm:$0xff] %v946
        %979 = vst [vmem:[%s265 + $0x58] sm:$0xff] %v947
        %980 = vst [vmem:[%s265 + $0x60] sm:$0xff] %v948
        %981 = vst [vmem:[%s265 + $0x68] sm:$0xff] %v949
        %982 = vst [vmem:[%s265 + $0x70] sm:$0xff] %v950
        %983 = vst [vmem:[%s265 + $0x78] sm:$0xff] %v951
        %984 = vst [vmem:[%s265 + $0x80] sm:$0xff] %v952
        %985 = vst [vmem:[%s265 + $0x88] sm:$0xff] %v953
        %986 = vst [vmem:[%s265 + $0x90] sm:$0xff] %v954
        %987 = vst [vmem:[%s265 + $0x98] sm:$0xff] %v955
        %988 = vst [vmem:[%s265 + $0xa0] sm:$0xff] %v956
        %989 = vst [vmem:[%s265 + $0xa8] sm:$0xff] %v957
        %990 = vst [vmem:[%s265 + $0xb0] sm:$0xff] %v958
        %991 = vst [vmem:[%s265 + $0xb8] sm:$0xff] %v959
        %992 = vst [vmem:[%s265 + $0xc0] sm:$0xff] %v960
        %993 = vst [vmem:[%s265 + $0xc8] sm:$0xff] %v961
        %994 = vst [vmem:[%s265 + $0xd0] sm:$0xff] %v962
        %995 = vst [vmem:[%s265 + $0xd8] sm:$0xff] %v963
        %996 = vst [vmem:[%s265 + $0xe0] sm:$0xff] %v964
        %997 = vst [vmem:[%s265 + $0xe8] sm:$0xff] %v965
        %998 = vst [vmem:[%s265 + $0xf0] sm:$0xff] %v966
        %999 = vst [vmem:[%s265 + $0xf8] sm:$0xff] %v967
      $region40: #{resnet_generator_forward.46} parent=31 // pred_fallthru
        _
      %s1000 = smul.u32 32, %s19
      %p1001 = scmp.lt.s32.totalorder %s1000, 63
      %s1002 = scalar_select %p1001, %s1000, 63
      %p1003 = scmp.lt.s32.totalorder %s20, 0
      %s1004 = scalar_select %p1003, %s20, 0
      %s1005 = sadd.s32 %s1004, %s1002
      %s1006 = smul.addr %s1005, 8
      %s1007 = scalar_lea.vmem %s3, %s1006
      // Predicated region
      $region41: #{resnet_generator_forward.46} parent=31 // pred_check
        %p1008 = pneg %p135
      $region42: #{resnet_generator_forward.46} parent=31 // pred_check_branch
        %1010 = sbr.rel (%p1008) target = $region44
      $region43: #{resnet_generator_forward.46} parent=31 // pred_region
        %s1011 = smul.u32 32, %s19
      $region44: #{resnet_generator_forward.46} parent=31 // pred_fallthru
        _
    $region32: #{resnet_generator_forward.46} parent=5 // pred_fallthru
      _
    %p1012 = scmp.le.s32.totalorder 2, %s9
    // Predicated region
    $region45: #{resnet_generator_forward.46} parent=5 // pred_check
      %p1013 = pneg %p1012
    $region46: #{resnet_generator_forward.46} parent=5 // pred_check_branch
      %1015 = sbr.rel (%p1013) target = $region48
    $region47: #{resnet_generator_forward.46} parent=5 // pred_region
      %s1016 = ssub.s32 %s9, 2
      // Predicated region
      $region49: #{resnet_generator_forward.46} parent=47 // pred_check
        %p1017 = pneg %p141
      $region50: #{resnet_generator_forward.46} parent=47 // pred_check_branch
        %1019 = sbr.rel (%p1017) target = $region52
      $region51: #{resnet_generator_forward.46} parent=47 // pred_region
        %s1020 = smul.u32 32, %s22
        %p1021 = scmp.lt.s32.totalorder %s1020, 63
        %s1022 = scalar_select %p1021, %s1020, 63
        %p1023 = scmp.lt.s32.totalorder %s23, 0
        %s1024 = scalar_select %p1023, %s23, 0
        %s1025 = sadd.s32 %s1024, %s1022
        %s1026 = smul.addr %s1025, 8
        %s1027 = scalar_lea.vmem %s3, %s1026
      $region52: #{resnet_generator_forward.46} parent=47 // pred_fallthru
        _
    $region48: #{resnet_generator_forward.46} parent=5 // pred_fallthru
      _
  $region6: #{resnet_generator_forward.46} parent=0 // loop_footer
    %s13 = sadd.s32 1, %s9
  $region7: #{resnet_generator_forward.46} parent=0 // loop_footer_branch
    %8 = sbr.rel target = $region3
  $region8: #{resnet_generator_forward.46} parent=0 // loop_exit
    _

// kernel: resnet_generator_forward.48
$region0: #{resnet_generator_forward.48}
  #allocation0 [shape = 'u32[]', space=smem, size = 0x4, offset = 0x4, fixed_abs, tag = 'smem constant byte address 0x4 - core index']
  #allocation1 [shape = 'u32[72,128]{1,0:T(1,128)}', space=vmem, size = 0x9000, scoped, tag = 'internal scratch']
  %s0 = inlined_call_operand.vmem [shape: f32[512,128], index: 0, kind: input, shape index: {}]
  %s1 = inlined_call_operand.vmem [shape: f32[1,128], index: 1, kind: input, shape index: {}]
  %s2 = inlined_call_operand.vmem [shape: f32[1,128], index: 2, kind: input, shape index: {}]
  %s3 = inlined_call_operand.vmem [shape: bf16[512,128], index: 3, kind: output, shape index: {}]
  %s4 = sld [smem:[#allocation0]]
  $region22: #{resnet_generator_forward.48} parent=0
    _
  %s6 = ssub.s32 1, %s4
  %s7 = scalar_select 0, %s6, %s4
  // Predicated region
  $region2: #{resnet_generator_forward.48} parent=0 // pred_check
    _
  $region3: #{resnet_generator_forward.48} parent=0 // pred_check_branch
    %9 = sbr.rel (0) target = $region5
  $region4: #{resnet_generator_forward.48} parent=0 // pred_region
    _
  $region5: #{resnet_generator_forward.48} parent=0 // pred_fallthru
    _
  // Predicated region
  $region6: #{resnet_generator_forward.48} parent=0 // pred_check
    _
  $region7: #{resnet_generator_forward.48} parent=0 // pred_check_branch
    %11 = sbr.rel (0) target = $region9
  $region8: #{resnet_generator_forward.48} parent=0 // pred_region
    _
  $region9: #{resnet_generator_forward.48} parent=0 // pred_fallthru
    _
  // Predicated region
  $region10: #{resnet_generator_forward.48} parent=0 // pred_check
    _
  $region11: #{resnet_generator_forward.48} parent=0 // pred_check_branch
    %13 = sbr.rel (0) target = $region13
  $region12: #{resnet_generator_forward.48} parent=0 // pred_region
    _
  $region13: #{resnet_generator_forward.48} parent=0 // pred_fallthru
    _
  %v14 = vld [vmem:[%s0] sm:$0xff]
  %v15 = vld [vmem:[%s0 + $0x8] sm:$0xff]
  %v16 = vld [vmem:[%s0 + $0x10] sm:$0xff]
  %v17 = vld [vmem:[%s0 + $0x18] sm:$0xff]
  %v18 = vld [vmem:[%s0 + $0x20] sm:$0xff]
  %v19 = vld [vmem:[%s0 + $0x28] sm:$0xff]
  %v20 = vld [vmem:[%s0 + $0x30] sm:$0xff]
  %v21 = vld [vmem:[%s0 + $0x38] sm:$0xff]
  %v22 = vld [vmem:[%s0 + $0x40] sm:$0xff]
  %v23 = vld [vmem:[%s0 + $0x48] sm:$0xff]
  %v24 = vld [vmem:[%s0 + $0x50] sm:$0xff]
  %v25 = vld [vmem:[%s0 + $0x58] sm:$0xff]
  %v26 = vld [vmem:[%s0 + $0x60] sm:$0xff]
  %v27 = vld [vmem:[%s0 + $0x68] sm:$0xff]
  %v28 = vld [vmem:[%s0 + $0x70] sm:$0xff]
  %v29 = vld [vmem:[%s0 + $0x78] sm:$0xff]
  %v30 = vld [vmem:[%s0 + $0x80] sm:$0xff]
  %v31 = vld [vmem:[%s0 + $0x88] sm:$0xff]
  %v32 = vld [vmem:[%s0 + $0x90] sm:$0xff]
  %v33 = vld [vmem:[%s0 + $0x98] sm:$0xff]
  %v34 = vld [vmem:[%s0 + $0xa0] sm:$0xff]
  %v35 = vld [vmem:[%s0 + $0xa8] sm:$0xff]
  %v36 = vld [vmem:[%s0 + $0xb0] sm:$0xff]
  %v37 = vld [vmem:[%s0 + $0xb8] sm:$0xff]
  %v38 = vld [vmem:[%s0 + $0xc0] sm:$0xff]
  %v39 = vld [vmem:[%s0 + $0xc8] sm:$0xff]
  %v40 = vld [vmem:[%s0 + $0xd0] sm:$0xff]
  %v41 = vld [vmem:[%s0 + $0xd8] sm:$0xff]
  %v42 = vld [vmem:[%s0 + $0xe0] sm:$0xff]
  %v43 = vld [vmem:[%s0 + $0xe8] sm:$0xff]
  %v44 = vld [vmem:[%s0 + $0xf0] sm:$0xff]
  %v45 = vld [vmem:[%s0 + $0xf8] sm:$0xff]
  %v46 = vld [vmem:[%s0 + $0x100] sm:$0xff]
  %v47 = vld [vmem:[%s0 + $0x108] sm:$0xff]
  %v48 = vld [vmem:[%s0 + $0x110] sm:$0xff]
  %v49 = vld [vmem:[%s0 + $0x118] sm:$0xff]
  %v50 = vld [vmem:[%s0 + $0x120] sm:$0xff]
  %v51 = vld [vmem:[%s0 + $0x128] sm:$0xff]
  %v52 = vld [vmem:[%s0 + $0x130] sm:$0xff]
  %v53 = vld [vmem:[%s0 + $0x138] sm:$0xff]
  %v54 = vld [vmem:[%s0 + $0x140] sm:$0xff]
  %v55 = vld [vmem:[%s0 + $0x148] sm:$0xff]
  %v56 = vld [vmem:[%s0 + $0x150] sm:$0xff]
  %v57 = vld [vmem:[%s0 + $0x158] sm:$0xff]
  %v58 = vld [vmem:[%s0 + $0x160] sm:$0xff]
  %v59 = vld [vmem:[%s0 + $0x168] sm:$0xff]
  %v60 = vld [vmem:[%s0 + $0x170] sm:$0xff]
  %v61 = vld [vmem:[%s0 + $0x178] sm:$0xff]
  %v62 = vld [vmem:[%s0 + $0x180] sm:$0xff]
  %v63 = vld [vmem:[%s0 + $0x188] sm:$0xff]
  %v64 = vld [vmem:[%s0 + $0x190] sm:$0xff]
  %v65 = vld [vmem:[%s0 + $0x198] sm:$0xff]
  %v66 = vld [vmem:[%s0 + $0x1a0] sm:$0xff]
  %v67 = vld [vmem:[%s0 + $0x1a8] sm:$0xff]
  %v68 = vld [vmem:[%s0 + $0x1b0] sm:$0xff]
  %v69 = vld [vmem:[%s0 + $0x1b8] sm:$0xff]
  %v70 = vld [vmem:[%s0 + $0x1c0] sm:$0xff]
  %v71 = vld [vmem:[%s0 + $0x1c8] sm:$0xff]
  %v72 = vld [vmem:[%s0 + $0x1d0] sm:$0xff]
  %v73 = vld [vmem:[%s0 + $0x1d8] sm:$0xff]
  %v74 = vld [vmem:[%s0 + $0x1e0] sm:$0xff]
  %v75 = vld [vmem:[%s0 + $0x1e8] sm:$0xff]
  %v76 = vld [vmem:[%s0 + $0x1f0] sm:$0xff]
  %v77 = vld [vmem:[%s0 + $0x1f8] sm:$0xff]
  %v78 = vld [vmem:[%s1] sm:$0x1]
  %v80 = vperm.slane %v78, 0
  %v82 = vmul.f32 %v14, %v80
  %v83 = vmul.f32 %v15, %v80
  %v84 = vmul.f32 %v16, %v80
  %v85 = vmul.f32 %v17, %v80
  %v86 = vmul.f32 %v18, %v80
  %v87 = vmul.f32 %v19, %v80
  %v88 = vmul.f32 %v20, %v80
  %v89 = vmul.f32 %v21, %v80
  %v90 = vmul.f32 %v22, %v80
  %v91 = vmul.f32 %v23, %v80
  %v92 = vmul.f32 %v24, %v80
  %v93 = vmul.f32 %v25, %v80
  %v94 = vmul.f32 %v26, %v80
  %v95 = vmul.f32 %v27, %v80
  %v96 = vmul.f32 %v28, %v80
  %v97 = vmul.f32 %v29, %v80
  %v98 = vmul.f32 %v30, %v80
  %v99 = vmul.f32 %v31, %v80
  %v100 = vmul.f32 %v32, %v80
  %v101 = vmul.f32 %v33, %v80
  %v102 = vmul.f32 %v34, %v80
  %v103 = vmul.f32 %v35, %v80
  %v104 = vmul.f32 %v36, %v80
  %v105 = vmul.f32 %v37, %v80
  %v106 = vmul.f32 %v38, %v80
  %v107 = vmul.f32 %v39, %v80
  %v108 = vmul.f32 %v40, %v80
  %v109 = vmul.f32 %v41, %v80
  %v110 = vmul.f32 %v42, %v80
  %v111 = vmul.f32 %v43, %v80
  %v112 = vmul.f32 %v44, %v80
  %v113 = vmul.f32 %v45, %v80
  %v114 = vmul.f32 %v46, %v80
  %v115 = vmul.f32 %v47, %v80
  %v116 = vmul.f32 %v48, %v80
  %v117 = vmul.f32 %v49, %v80
  %v118 = vmul.f32 %v50, %v80
  %v119 = vmul.f32 %v51, %v80
  %v120 = vmul.f32 %v52, %v80
  %v121 = vmul.f32 %v53, %v80
  %v122 = vmul.f32 %v54, %v80
  %v123 = vmul.f32 %v55, %v80
  %v124 = vmul.f32 %v56, %v80
  %v125 = vmul.f32 %v57, %v80
  %v126 = vmul.f32 %v58, %v80
  %v127 = vmul.f32 %v59, %v80
  %v128 = vmul.f32 %v60, %v80
  %v129 = vmul.f32 %v61, %v80
  %v130 = vmul.f32 %v62, %v80
  %v131 = vmul.f32 %v63, %v80
  %v132 = vmul.f32 %v64, %v80
  %v133 = vmul.f32 %v65, %v80
  %v134 = vmul.f32 %v66, %v80
  %v135 = vmul.f32 %v67, %v80
  %v136 = vmul.f32 %v68, %v80
  %v137 = vmul.f32 %v69, %v80
  %v138 = vmul.f32 %v70, %v80
  %v139 = vmul.f32 %v71, %v80
  %v140 = vmul.f32 %v72, %v80
  %v141 = vmul.f32 %v73, %v80
  %v142 = vmul.f32 %v74, %v80
  %v143 = vmul.f32 %v75, %v80
  %v144 = vmul.f32 %v76, %v80
  %v145 = vmul.f32 %v77, %v80
  %v146 = vld [vmem:[%s2] sm:$0x1]
  %v148 = vperm.slane %v146, 0
  %v150 = vadd.f32 %v82, %v148
  %v151 = vadd.f32 %v83, %v148
  %v152 = vadd.f32 %v84, %v148
  %v153 = vadd.f32 %v85, %v148
  %v154 = vadd.f32 %v86, %v148
  %v155 = vadd.f32 %v87, %v148
  %v156 = vadd.f32 %v88, %v148
  %v157 = vadd.f32 %v89, %v148
  %v158 = vadd.f32 %v90, %v148
  %v159 = vadd.f32 %v91, %v148
  %v160 = vadd.f32 %v92, %v148
  %v161 = vadd.f32 %v93, %v148
  %v162 = vadd.f32 %v94, %v148
  %v163 = vadd.f32 %v95, %v148
  %v164 = vadd.f32 %v96, %v148
  %v165 = vadd.f32 %v97, %v148
  %v166 = vadd.f32 %v98, %v148
  %v167 = vadd.f32 %v99, %v148
  %v168 = vadd.f32 %v100, %v148
  %v169 = vadd.f32 %v101, %v148
  %v170 = vadd.f32 %v102, %v148
  %v171 = vadd.f32 %v103, %v148
  %v172 = vadd.f32 %v104, %v148
  %v173 = vadd.f32 %v105, %v148
  %v174 = vadd.f32 %v106, %v148
  %v175 = vadd.f32 %v107, %v148
  %v176 = vadd.f32 %v108, %v148
  %v177 = vadd.f32 %v109, %v148
  %v178 = vadd.f32 %v110, %v148
  %v179 = vadd.f32 %v111, %v148
  %v180 = vadd.f32 %v112, %v148
  %v181 = vadd.f32 %v113, %v148
  %v182 = vadd.f32 %v114, %v148
  %v183 = vadd.f32 %v115, %v148
  %v184 = vadd.f32 %v116, %v148
  %v185 = vadd.f32 %v117, %v148
  %v186 = vadd.f32 %v118, %v148
  %v187 = vadd.f32 %v119, %v148
  %v188 = vadd.f32 %v120, %v148
  %v189 = vadd.f32 %v121, %v148
  %v190 = vadd.f32 %v122, %v148
  %v191 = vadd.f32 %v123, %v148
  %v192 = vadd.f32 %v124, %v148
  %v193 = vadd.f32 %v125, %v148
  %v194 = vadd.f32 %v126, %v148
  %v195 = vadd.f32 %v127, %v148
  %v196 = vadd.f32 %v128, %v148
  %v197 = vadd.f32 %v129, %v148
  %v198 = vadd.f32 %v130, %v148
  %v199 = vadd.f32 %v131, %v148
  %v200 = vadd.f32 %v132, %v148
  %v201 = vadd.f32 %v133, %v148
  %v202 = vadd.f32 %v134, %v148
  %v203 = vadd.f32 %v135, %v148
  %v204 = vadd.f32 %v136, %v148
  %v205 = vadd.f32 %v137, %v148
  %v206 = vadd.f32 %v138, %v148
  %v207 = vadd.f32 %v139, %v148
  %v208 = vadd.f32 %v140, %v148
  %v209 = vadd.f32 %v141, %v148
  %v210 = vadd.f32 %v142, %v148
  %v211 = vadd.f32 %v143, %v148
  %v212 = vadd.f32 %v144, %v148
  %v213 = vadd.f32 %v145, %v148
  %v214 = vmax.f32 %v150, 0.0
  %v215 = vmax.f32 %v151, 0.0
  %v216 = vmax.f32 %v152, 0.0
  %v217 = vmax.f32 %v153, 0.0
  %v218 = vmax.f32 %v154, 0.0
  %v219 = vmax.f32 %v155, 0.0
  %v220 = vmax.f32 %v156, 0.0
  %v221 = vmax.f32 %v157, 0.0
  %v222 = vmax.f32 %v158, 0.0
  %v223 = vmax.f32 %v159, 0.0
  %v224 = vmax.f32 %v160, 0.0
  %v225 = vmax.f32 %v161, 0.0
  %v226 = vmax.f32 %v162, 0.0
  %v227 = vmax.f32 %v163, 0.0
  %v228 = vmax.f32 %v164, 0.0
  %v229 = vmax.f32 %v165, 0.0
  %v230 = vmax.f32 %v166, 0.0
  %v231 = vmax.f32 %v167, 0.0
  %v232 = vmax.f32 %v168, 0.0
  %v233 = vmax.f32 %v169, 0.0
  %v234 = vmax.f32 %v170, 0.0
  %v235 = vmax.f32 %v171, 0.0
  %v236 = vmax.f32 %v172, 0.0
  %v237 = vmax.f32 %v173, 0.0
  %v238 = vmax.f32 %v174, 0.0
  %v239 = vmax.f32 %v175, 0.0
  %v240 = vmax.f32 %v176, 0.0
  %v241 = vmax.f32 %v177, 0.0
  %v242 = vmax.f32 %v178, 0.0
  %v243 = vmax.f32 %v179, 0.0
  %v244 = vmax.f32 %v180, 0.0
  %v245 = vmax.f32 %v181, 0.0
  %v246 = vmax.f32 %v182, 0.0
  %v247 = vmax.f32 %v183, 0.0
  %v248 = vmax.f32 %v184, 0.0
  %v249 = vmax.f32 %v185, 0.0
  %v250 = vmax.f32 %v186, 0.0
  %v251 = vmax.f32 %v187, 0.0
  %v252 = vmax.f32 %v188, 0.0
  %v253 = vmax.f32 %v189, 0.0
  %v254 = vmax.f32 %v190, 0.0
  %v255 = vmax.f32 %v191, 0.0
  %v256 = vmax.f32 %v192, 0.0
  %v257 = vmax.f32 %v193, 0.0
  %v258 = vmax.f32 %v194, 0.0
  %v259 = vmax.f32 %v195, 0.0
  %v260 = vmax.f32 %v196, 0.0
  %v261 = vmax.f32 %v197, 0.0
  %v262 = vmax.f32 %v198, 0.0
  %v263 = vmax.f32 %v199, 0.0
  %v264 = vmax.f32 %v200, 0.0
  %v265 = vmax.f32 %v201, 0.0
  %v266 = vmax.f32 %v202, 0.0
  %v267 = vmax.f32 %v203, 0.0
  %v268 = vmax.f32 %v204, 0.0
  %v269 = vmax.f32 %v205, 0.0
  %v270 = vmax.f32 %v206, 0.0
  %v271 = vmax.f32 %v207, 0.0
  %v272 = vmax.f32 %v208, 0.0
  %v273 = vmax.f32 %v209, 0.0
  %v274 = vmax.f32 %v210, 0.0
  %v275 = vmax.f32 %v211, 0.0
  %v276 = vmax.f32 %v212, 0.0
  %v277 = vmax.f32 %v213, 0.0
  %v278 = vpack.c.bf16 %v214, %v214
  %v279 = vpack.c.bf16 %v215, %v215
  %v280 = vpack.c.bf16 %v216, %v216
  %v281 = vpack.c.bf16 %v217, %v217
  %v282 = vpack.c.bf16 %v218, %v218
  %v283 = vpack.c.bf16 %v219, %v219
  %v284 = vpack.c.bf16 %v220, %v220
  %v285 = vpack.c.bf16 %v221, %v221
  %v286 = vpack.c.bf16 %v222, %v222
  %v287 = vpack.c.bf16 %v223, %v223
  %v288 = vpack.c.bf16 %v224, %v224
  %v289 = vpack.c.bf16 %v225, %v225
  %v290 = vpack.c.bf16 %v226, %v226
  %v291 = vpack.c.bf16 %v227, %v227
  %v292 = vpack.c.bf16 %v228, %v228
  %v293 = vpack.c.bf16 %v229, %v229
  %v294 = vpack.c.bf16 %v230, %v230
  %v295 = vpack.c.bf16 %v231, %v231
  %v296 = vpack.c.bf16 %v232, %v232
  %v297 = vpack.c.bf16 %v233, %v233
  %v298 = vpack.c.bf16 %v234, %v234
  %v299 = vpack.c.bf16 %v235, %v235
  %v300 = vpack.c.bf16 %v236, %v236
  %v301 = vpack.c.bf16 %v237, %v237
  %v302 = vpack.c.bf16 %v238, %v238
  %v303 = vpack.c.bf16 %v239, %v239
  %v304 = vpack.c.bf16 %v240, %v240
  %v305 = vpack.c.bf16 %v241, %v241
  %v306 = vpack.c.bf16 %v242, %v242
  %v307 = vpack.c.bf16 %v243, %v243
  %v308 = vpack.c.bf16 %v244, %v244
  %v309 = vpack.c.bf16 %v245, %v245
  %v310 = vpack.c.bf16 %v246, %v246
  %v311 = vpack.c.bf16 %v247, %v247
  %v312 = vpack.c.bf16 %v248, %v248
  %v313 = vpack.c.bf16 %v249, %v249
  %v314 = vpack.c.bf16 %v250, %v250
  %v315 = vpack.c.bf16 %v251, %v251
  %v316 = vpack.c.bf16 %v252, %v252
  %v317 = vpack.c.bf16 %v253, %v253
  %v318 = vpack.c.bf16 %v254, %v254
  %v319 = vpack.c.bf16 %v255, %v255
  %v320 = vpack.c.bf16 %v256, %v256
  %v321 = vpack.c.bf16 %v257, %v257
  %v322 = vpack.c.bf16 %v258, %v258
  %v323 = vpack.c.bf16 %v259, %v259
  %v324 = vpack.c.bf16 %v260, %v260
  %v325 = vpack.c.bf16 %v261, %v261
  %v326 = vpack.c.bf16 %v262, %v262
  %v327 = vpack.c.bf16 %v263, %v263
  %v328 = vpack.c.bf16 %v264, %v264
  %v329 = vpack.c.bf16 %v265, %v265
  %v330 = vpack.c.bf16 %v266, %v266
  %v331 = vpack.c.bf16 %v267, %v267
  %v332 = vpack.c.bf16 %v268, %v268
  %v333 = vpack.c.bf16 %v269, %v269
  %v334 = vpack.c.bf16 %v270, %v270
  %v335 = vpack.c.bf16 %v271, %v271
  %v336 = vpack.c.bf16 %v272, %v272
  %v337 = vpack.c.bf16 %v273, %v273
  %v338 = vpack.c.bf16 %v274, %v274
  %v339 = vpack.c.bf16 %v275, %v275
  %v340 = vpack.c.bf16 %v276, %v276
  %v341 = vpack.c.bf16 %v277, %v277
  %342 = vst [vmem:[%s3] sm:$0xf] %v278
  %343 = vst [vmem:[%s3 + $0x4] sm:$0xf] %v279
  %344 = vst [vmem:[%s3 + $0x8] sm:$0xf] %v280
  %345 = vst [vmem:[%s3 + $0xc] sm:$0xf] %v281
  %346 = vst [vmem:[%s3 + $0x10] sm:$0xf] %v282
  %347 = vst [vmem:[%s3 + $0x14] sm:$0xf] %v283
  %348 = vst [vmem:[%s3 + $0x18] sm:$0xf] %v284
  %349 = vst [vmem:[%s3 + $0x1c] sm:$0xf] %v285
  %350 = vst [vmem:[%s3 + $0x20] sm:$0xf] %v286
  %351 = vst [vmem:[%s3 + $0x24] sm:$0xf] %v287
  %352 = vst [vmem:[%s3 + $0x28] sm:$0xf] %v288
  %353 = vst [vmem:[%s3 + $0x2c] sm:$0xf] %v289
  %354 = vst [vmem:[%s3 + $0x30] sm:$0xf] %v290
  %355 = vst [vmem:[%s3 + $0x34] sm:$0xf] %v291
  %356 = vst [vmem:[%s3 + $0x38] sm:$0xf] %v292
  %357 = vst [vmem:[%s3 + $0x3c] sm:$0xf] %v293
  %358 = vst [vmem:[%s3 + $0x40] sm:$0xf] %v294
  %359 = vst [vmem:[%s3 + $0x44] sm:$0xf] %v295
  %360 = vst [vmem:[%s3 + $0x48] sm:$0xf] %v296
  %361 = vst [vmem:[%s3 + $0x4c] sm:$0xf] %v297
  %362 = vst [vmem:[%s3 + $0x50] sm:$0xf] %v298
  %363 = vst [vmem:[%s3 + $0x54] sm:$0xf] %v299
  %364 = vst [vmem:[%s3 + $0x58] sm:$0xf] %v300
  %365 = vst [vmem:[%s3 + $0x5c] sm:$0xf] %v301
  %366 = vst [vmem:[%s3 + $0x60] sm:$0xf] %v302
  %367 = vst [vmem:[%s3 + $0x64] sm:$0xf] %v303
  %368 = vst [vmem:[%s3 + $0x68] sm:$0xf] %v304
  %369 = vst [vmem:[%s3 + $0x6c] sm:$0xf] %v305
  %370 = vst [vmem:[%s3 + $0x70] sm:$0xf] %v306
  %371 = vst [vmem:[%s3 + $0x74] sm:$0xf] %v307
  %372 = vst [vmem:[%s3 + $0x78] sm:$0xf] %v308
  %373 = vst [vmem:[%s3 + $0x7c] sm:$0xf] %v309
  %374 = vst [vmem:[%s3 + $0x80] sm:$0xf] %v310
  %375 = vst [vmem:[%s3 + $0x84] sm:$0xf] %v311
  %376 = vst [vmem:[%s3 + $0x88] sm:$0xf] %v312
  %377 = vst [vmem:[%s3 + $0x8c] sm:$0xf] %v313
  %378 = vst [vmem:[%s3 + $0x90] sm:$0xf] %v314
  %379 = vst [vmem:[%s3 + $0x94] sm:$0xf] %v315
  %380 = vst [vmem:[%s3 + $0x98] sm:$0xf] %v316
  %381 = vst [vmem:[%s3 + $0x9c] sm:$0xf] %v317
  %382 = vst [vmem:[%s3 + $0xa0] sm:$0xf] %v318
  %383 = vst [vmem:[%s3 + $0xa4] sm:$0xf] %v319
  %384 = vst [vmem:[%s3 + $0xa8] sm:$0xf] %v320
  %385 = vst [vmem:[%s3 + $0xac] sm:$0xf] %v321
  %386 = vst [vmem:[%s3 + $0xb0] sm:$0xf] %v322
  %387 = vst [vmem:[%s3 + $0xb4] sm:$0xf] %v323
  %388 = vst [vmem:[%s3 + $0xb8] sm:$0xf] %v324
  %389 = vst [vmem:[%s3 + $0xbc] sm:$0xf] %v325
  %390 = vst [vmem:[%s3 + $0xc0] sm:$0xf] %v326
  %391 = vst [vmem:[%s3 + $0xc4] sm:$0xf] %v327
  %392 = vst [vmem:[%s3 + $0xc8] sm:$0xf] %v328
  %393 = vst [vmem:[%s3 + $0xcc] sm:$0xf] %v329
  %394 = vst [vmem:[%s3 + $0xd0] sm:$0xf] %v330
  %395 = vst [vmem:[%s3 + $0xd4] sm:$0xf] %v331
  %396 = vst [vmem:[%s3 + $0xd8] sm:$0xf] %v332
  %397 = vst [vmem:[%s3 + $0xdc] sm:$0xf] %v333
  %398 = vst [vmem:[%s3 + $0xe0] sm:$0xf] %v334
  %399 = vst [vmem:[%s3 + $0xe4] sm:$0xf] %v335
  %400 = vst [vmem:[%s3 + $0xe8] sm:$0xf] %v336
  %401 = vst [vmem:[%s3 + $0xec] sm:$0xf] %v337
  %402 = vst [vmem:[%s3 + $0xf0] sm:$0xf] %v338
  %403 = vst [vmem:[%s3 + $0xf4] sm:$0xf] %v339
  %404 = vst [vmem:[%s3 + $0xf8] sm:$0xf] %v340
  %405 = vst [vmem:[%s3 + $0xfc] sm:$0xf] %v341
  // Predicated region
  $region14: #{resnet_generator_forward.48} parent=0 // pred_check
    _
  $region15: #{resnet_generator_forward.48} parent=0 // pred_check_branch
    %407 = sbr.rel (0) target = $region17
  $region16: #{resnet_generator_forward.48} parent=0 // pred_region
    _
  $region17: #{resnet_generator_forward.48} parent=0 // pred_fallthru
    _
  // Predicated region
  $region18: #{resnet_generator_forward.48} parent=0 // pred_check
    _
  $region19: #{resnet_generator_forward.48} parent=0 // pred_check_branch
    %409 = sbr.rel (0) target = $region21
  $region20: #{resnet_generator_forward.48} parent=0 // pred_region
    _
  $region21: #{resnet_generator_forward.48} parent=0 // pred_fallthru
    _

// kernel: resnet_generator_forward.50
$region0: #{resnet_generator_forward.50}
  #allocation0 [shape = 'u32[]', space=smem, size = 0x4, offset = 0x4, fixed_abs, tag = 'smem constant byte address 0x4 - core index']
  #allocation1 [shape = 'u32[72,128]{1,0:T(1,128)}', space=vmem, size = 0x9000, scoped, tag = 'internal scratch']
  %s0 = inlined_call_operand.vmem [shape: f32[128,128], index: 0, kind: input, shape index: {}]
  %s1 = inlined_call_operand.vmem [shape: f32[2,128], index: 1, kind: output, shape index: {}]
  %s2 = sld [smem:[#allocation0]]
  $region18: #{resnet_generator_forward.50} parent=0
    _
  %s4 = ssub.s32 1, %s2
  %s5 = scalar_select 0, %s4, %s2
  // Predicated region
  $region2: #{resnet_generator_forward.50} parent=0 // pred_check
    _
  $region3: #{resnet_generator_forward.50} parent=0 // pred_check_branch
    %7 = sbr.rel (0) target = $region5
  $region4: #{resnet_generator_forward.50} parent=0 // pred_region
    _
  $region5: #{resnet_generator_forward.50} parent=0 // pred_fallthru
    _
  %p8 = scmp.eq.s32.totalorder 0, 0
  // Predicated region
  $region6: #{resnet_generator_forward.50} parent=0 // pred_check
    %p9 = pneg %p8
  $region7: #{resnet_generator_forward.50} parent=0 // pred_check_branch
    %11 = sbr.rel (%p9) target = $region9
  $region8: #{resnet_generator_forward.50} parent=0 // pred_region
    %12 = vst [vmem:[%s1] sm:$0x3] 0.0
  $region9: #{resnet_generator_forward.50} parent=0 // pred_fallthru
    _
  %v13 = vld [vmem:[%s0] sm:$0xff]
  %v14 = vld [vmem:[%s0 + $0x8] sm:$0xff]
  %v15 = vld [vmem:[%s0 + $0x10] sm:$0xff]
  %v16 = vld [vmem:[%s0 + $0x18] sm:$0xff]
  %v17 = vld [vmem:[%s0 + $0x20] sm:$0xff]
  %v18 = vld [vmem:[%s0 + $0x28] sm:$0xff]
  %v19 = vld [vmem:[%s0 + $0x30] sm:$0xff]
  %v20 = vld [vmem:[%s0 + $0x38] sm:$0xff]
  %v21 = vld [vmem:[%s0 + $0x40] sm:$0xff]
  %v22 = vld [vmem:[%s0 + $0x48] sm:$0xff]
  %v23 = vld [vmem:[%s0 + $0x50] sm:$0xff]
  %v24 = vld [vmem:[%s0 + $0x58] sm:$0xff]
  %v25 = vld [vmem:[%s0 + $0x60] sm:$0xff]
  %v26 = vld [vmem:[%s0 + $0x68] sm:$0xff]
  %v27 = vld [vmem:[%s0 + $0x70] sm:$0xff]
  %v28 = vld [vmem:[%s0 + $0x78] sm:$0xff]
  %v29 = vadd.f32 %v13, %v14
  %v30 = vadd.f32 %v29, %v15
  %v31 = vadd.f32 %v30, %v16
  %v32 = vadd.f32 %v31, %v17
  %v33 = vadd.f32 %v32, %v18
  %v34 = vadd.f32 %v33, %v19
  %v35 = vadd.f32 %v34, %v20
  %v36 = vadd.f32 %v35, %v21
  %v37 = vadd.f32 %v36, %v22
  %v38 = vadd.f32 %v37, %v23
  %v39 = vadd.f32 %v38, %v24
  %v40 = vadd.f32 %v39, %v25
  %v41 = vadd.f32 %v40, %v26
  %v42 = vadd.f32 %v41, %v27
  %v43 = vadd.f32 %v42, %v28
  %v44 = vrot.slane %v43, 4
  %v45 = vadd.f32 %v43, %v44
  %v46 = vrot.slane %v45, 2
  %v47 = vadd.f32 %v45, %v46
  %v48 = vrot.slane %v47, 1
  %v49 = vadd.f32 %v47, %v48
  %v50 = vmul.f32 %v13, %v13
  %v51 = vmul.f32 %v14, %v14
  %v52 = vmul.f32 %v15, %v15
  %v53 = vmul.f32 %v16, %v16
  %v54 = vmul.f32 %v17, %v17
  %v55 = vmul.f32 %v18, %v18
  %v56 = vmul.f32 %v19, %v19
  %v57 = vmul.f32 %v20, %v20
  %v58 = vmul.f32 %v21, %v21
  %v59 = vmul.f32 %v22, %v22
  %v60 = vmul.f32 %v23, %v23
  %v61 = vmul.f32 %v24, %v24
  %v62 = vmul.f32 %v25, %v25
  %v63 = vmul.f32 %v26, %v26
  %v64 = vmul.f32 %v27, %v27
  %v65 = vmul.f32 %v28, %v28
  %v66 = vadd.f32 %v50, %v51
  %v67 = vadd.f32 %v66, %v52
  %v68 = vadd.f32 %v67, %v53
  %v69 = vadd.f32 %v68, %v54
  %v70 = vadd.f32 %v69, %v55
  %v71 = vadd.f32 %v70, %v56
  %v72 = vadd.f32 %v71, %v57
  %v73 = vadd.f32 %v72, %v58
  %v74 = vadd.f32 %v73, %v59
  %v75 = vadd.f32 %v74, %v60
  %v76 = vadd.f32 %v75, %v61
  %v77 = vadd.f32 %v76, %v62
  %v78 = vadd.f32 %v77, %v63
  %v79 = vadd.f32 %v78, %v64
  %v80 = vadd.f32 %v79, %v65
  %v81 = vrot.slane %v80, 4
  %v82 = vadd.f32 %v80, %v81
  %v83 = vrot.slane %v82, 2
  %v84 = vadd.f32 %v82, %v83
  %v85 = vrot.slane %v84, 1
  %v86 = vadd.f32 %v84, %v85
  %v87 = vld [vmem:[%s1] sm:$0x3]
  %vm88 = vcmask 1040384
  %v89 = vsel %vm88, %v49, %v86
  %v90 = vadd.f32 %v87, %v89
  %91 = vst [vmem:[%s1] sm:$0x3] %v90
  // Predicated region
  $region10: #{resnet_generator_forward.50} parent=0 // pred_check
    _
  $region11: #{resnet_generator_forward.50} parent=0 // pred_check_branch
    %93 = sbr.rel (0) target = $region13
  $region12: #{resnet_generator_forward.50} parent=0 // pred_region
    _
  $region13: #{resnet_generator_forward.50} parent=0 // pred_fallthru
    _
  // Predicated region
  $region14: #{resnet_generator_forward.50} parent=0 // pred_check
    _
  $region15: #{resnet_generator_forward.50} parent=0 // pred_check_branch
    %95 = sbr.rel (0) target = $region17
  $region16: #{resnet_generator_forward.50} parent=0 // pred_region
    _
  $region17: #{resnet_generator_forward.50} parent=0 // pred_fallthru
    _

// kernel: resnet_generator_forward.49
$region0: #{resnet_generator_forward.49}
  #allocation0 [shape = 'u32[]', space=smem, size = 0x4, offset = 0x4, fixed_abs, tag = 'smem constant byte address 0x4 - core index']
  #allocation1 [shape = 'u32[72,128]{1,0:T(1,128)}', space=vmem, size = 0x9000, scoped, tag = 'internal scratch']
  #allocation2 [shape = 'f32[128,128]{1,0:T(8,128)}', space=vmem, size = 0x10000, scoped, tag = 'scratch operand']
  %s0 = inlined_call_operand.vmem [shape: bf16[128,128], index: 0, kind: input, shape index: {}]
  %s1 = inlined_call_operand.vmem [shape: bf16[128,128], index: 1, kind: input, shape index: {}]
  %s2 = inlined_call_operand.vmem [shape: f32[1,128], index: 2, kind: input, shape index: {}]
  %s3 = inlined_call_operand.vmem [shape: f32[128,128], index: 3, kind: output, shape index: {}]
  %s4 = sld [smem:[#allocation0]]
  $region30: #{resnet_generator_forward.49} parent=0
    _
  %s6 = ssub.s32 1, %s4
  %s7 = scalar_select 0, %s6, %s4
  // Predicated region
  $region2: #{resnet_generator_forward.49} parent=0 // pred_check
    _
  $region3: #{resnet_generator_forward.49} parent=0 // pred_check_branch
    %9 = sbr.rel (0) target = $region5
  $region4: #{resnet_generator_forward.49} parent=0 // pred_region
    _
  $region5: #{resnet_generator_forward.49} parent=0 // pred_fallthru
    _
  // Predicated region
  $region6: #{resnet_generator_forward.49} parent=0 // pred_check
    _
  $region7: #{resnet_generator_forward.49} parent=0 // pred_check_branch
    %11 = sbr.rel (0) target = $region9
  $region8: #{resnet_generator_forward.49} parent=0 // pred_region
    _
  $region9: #{resnet_generator_forward.49} parent=0 // pred_fallthru
    _
  // Predicated region
  $region10: #{resnet_generator_forward.49} parent=0 // pred_check
    _
  $region11: #{resnet_generator_forward.49} parent=0 // pred_check_branch
    %13 = sbr.rel (0) target = $region13
  $region12: #{resnet_generator_forward.49} parent=0 // pred_region
    _
  $region13: #{resnet_generator_forward.49} parent=0 // pred_fallthru
    _
  %p14 = scmp.eq.s32.totalorder 0, 0
  // Predicated region
  $region14: #{resnet_generator_forward.49} parent=0 // pred_check
    %p15 = pneg %p14
  $region15: #{resnet_generator_forward.49} parent=0 // pred_check_branch
    %17 = sbr.rel (%p15) target = $region17
  $region16: #{resnet_generator_forward.49} parent=0 // pred_region
    %18 = vst [vmem:[#allocation2] sm:$0xff] 0.0
    %19 = vst [vmem:[#allocation2 + $0x8] sm:$0xff] 0.0
    %20 = vst [vmem:[#allocation2 + $0x10] sm:$0xff] 0.0
    %21 = vst [vmem:[#allocation2 + $0x18] sm:$0xff] 0.0
    %22 = vst [vmem:[#allocation2 + $0x20] sm:$0xff] 0.0
    %23 = vst [vmem:[#allocation2 + $0x28] sm:$0xff] 0.0
    %24 = vst [vmem:[#allocation2 + $0x30] sm:$0xff] 0.0
    %25 = vst [vmem:[#allocation2 + $0x38] sm:$0xff] 0.0
    %26 = vst [vmem:[#allocation2 + $0x40] sm:$0xff] 0.0
    %27 = vst [vmem:[#allocation2 + $0x48] sm:$0xff] 0.0
    %28 = vst [vmem:[#allocation2 + $0x50] sm:$0xff] 0.0
    %29 = vst [vmem:[#allocation2 + $0x58] sm:$0xff] 0.0
    %30 = vst [vmem:[#allocation2 + $0x60] sm:$0xff] 0.0
    %31 = vst [vmem:[#allocation2 + $0x68] sm:$0xff] 0.0
    %32 = vst [vmem:[#allocation2 + $0x70] sm:$0xff] 0.0
    %33 = vst [vmem:[#allocation2 + $0x78] sm:$0xff] 0.0
  $region17: #{resnet_generator_forward.49} parent=0 // pred_fallthru
    _
  %v34 = vld [vmem:[#allocation2] sm:$0xff]
  %v35 = vld [vmem:[#allocation2 + $0x8] sm:$0xff]
  %v36 = vld [vmem:[#allocation2 + $0x10] sm:$0xff]
  %v37 = vld [vmem:[#allocation2 + $0x18] sm:$0xff]
  %v38 = vld [vmem:[#allocation2 + $0x20] sm:$0xff]
  %v39 = vld [vmem:[#allocation2 + $0x28] sm:$0xff]
  %v40 = vld [vmem:[#allocation2 + $0x30] sm:$0xff]
  %v41 = vld [vmem:[#allocation2 + $0x38] sm:$0xff]
  %v42 = vld [vmem:[#allocation2 + $0x40] sm:$0xff]
  %v43 = vld [vmem:[#allocation2 + $0x48] sm:$0xff]
  %v44 = vld [vmem:[#allocation2 + $0x50] sm:$0xff]
  %v45 = vld [vmem:[#allocation2 + $0x58] sm:$0xff]
  %v46 = vld [vmem:[#allocation2 + $0x60] sm:$0xff]
  %v47 = vld [vmem:[#allocation2 + $0x68] sm:$0xff]
  %v48 = vld [vmem:[#allocation2 + $0x70] sm:$0xff]
  %v49 = vld [vmem:[#allocation2 + $0x78] sm:$0xff]
  %v50 = vld [vmem:[%s0] sm:$0xf]
  %v51 = vld [vmem:[%s0 + $0x4] sm:$0xf]
  %v52 = vld [vmem:[%s0 + $0x8] sm:$0xf]
  %v53 = vld [vmem:[%s0 + $0xc] sm:$0xf]
  %v54 = vld [vmem:[%s0 + $0x10] sm:$0xf]
  %v55 = vld [vmem:[%s0 + $0x14] sm:$0xf]
  %v56 = vld [vmem:[%s0 + $0x18] sm:$0xf]
  %v57 = vld [vmem:[%s0 + $0x1c] sm:$0xf]
  %v58 = vld [vmem:[%s0 + $0x20] sm:$0xf]
  %v59 = vld [vmem:[%s0 + $0x24] sm:$0xf]
  %v60 = vld [vmem:[%s0 + $0x28] sm:$0xf]
  %v61 = vld [vmem:[%s0 + $0x2c] sm:$0xf]
  %v62 = vld [vmem:[%s0 + $0x30] sm:$0xf]
  %v63 = vld [vmem:[%s0 + $0x34] sm:$0xf]
  %v64 = vld [vmem:[%s0 + $0x38] sm:$0xf]
  %v65 = vld [vmem:[%s0 + $0x3c] sm:$0xf]
  %v66 = vld [vmem:[%s1] sm:$0xf]
  %v67 = vld [vmem:[%s1 + $0x4] sm:$0xf]
  %v68 = vld [vmem:[%s1 + $0x8] sm:$0xf]
  %v69 = vld [vmem:[%s1 + $0xc] sm:$0xf]
  %v70 = vld [vmem:[%s1 + $0x10] sm:$0xf]
  %v71 = vld [vmem:[%s1 + $0x14] sm:$0xf]
  %v72 = vld [vmem:[%s1 + $0x18] sm:$0xf]
  %v73 = vld [vmem:[%s1 + $0x1c] sm:$0xf]
  %v74 = vld [vmem:[%s1 + $0x20] sm:$0xf]
  %v75 = vld [vmem:[%s1 + $0x24] sm:$0xf]
  %v76 = vld [vmem:[%s1 + $0x28] sm:$0xf]
  %v77 = vld [vmem:[%s1 + $0x2c] sm:$0xf]
  %v78 = vld [vmem:[%s1 + $0x30] sm:$0xf]
  %v79 = vld [vmem:[%s1 + $0x34] sm:$0xf]
  %v80 = vld [vmem:[%s1 + $0x38] sm:$0xf]
  %v81 = vld [vmem:[%s1 + $0x3c] sm:$0xf]
  %v98 = vunpack.c.l.b16 %v50
  %v99 = vunpack.c.l.b16 %v51
  %v100 = vunpack.c.l.b16 %v52
  %v101 = vunpack.c.l.b16 %v53
  %v102 = vunpack.c.l.b16 %v54
  %v103 = vunpack.c.l.b16 %v55
  %v104 = vunpack.c.l.b16 %v56
  %v105 = vunpack.c.l.b16 %v57
  %v106 = vunpack.c.l.b16 %v58
  %v107 = vunpack.c.l.b16 %v59
  %v108 = vunpack.c.l.b16 %v60
  %v109 = vunpack.c.l.b16 %v61
  %v110 = vunpack.c.l.b16 %v62
  %v111 = vunpack.c.l.b16 %v63
  %v112 = vunpack.c.l.b16 %v64
  %v113 = vunpack.c.l.b16 %v65
  %v114 = vpack.c.b16 %v99, %v98
  %v115 = vpack.c.b16 %v101, %v100
  %v116 = vpack.c.b16 %v103, %v102
  %v117 = vpack.c.b16 %v105, %v104
  %v118 = vpack.c.b16 %v107, %v106
  %v119 = vpack.c.b16 %v109, %v108
  %v120 = vpack.c.b16 %v111, %v110
  %v121 = vpack.c.b16 %v113, %v112
  %v146 = vunpack.c.l.b16 %v66
  %v147 = vunpack.c.l.b16 %v67
  %v148 = vunpack.c.l.b16 %v68
  %v149 = vunpack.c.l.b16 %v69
  %v150 = vunpack.c.l.b16 %v70
  %v151 = vunpack.c.l.b16 %v71
  %v152 = vunpack.c.l.b16 %v72
  %v153 = vunpack.c.l.b16 %v73
  %v154 = vunpack.c.l.b16 %v74
  %v155 = vunpack.c.l.b16 %v75
  %v156 = vunpack.c.l.b16 %v76
  %v157 = vunpack.c.l.b16 %v77
  %v158 = vunpack.c.l.b16 %v78
  %v159 = vunpack.c.l.b16 %v79
  %v160 = vunpack.c.l.b16 %v80
  %v161 = vunpack.c.l.b16 %v81
  %v162 = vpack.c.b16 %v147, %v146
  %v163 = vpack.c.b16 %v149, %v148
  %v164 = vpack.c.b16 %v151, %v150
  %v165 = vpack.c.b16 %v153, %v152
  %v166 = vpack.c.b16 %v155, %v154
  %v167 = vpack.c.b16 %v157, %v156
  %v168 = vpack.c.b16 %v159, %v158
  %v169 = vpack.c.b16 %v161, %v160
  %178 = vmatpush.bf16.msra.mxu0 %v169
  %179 = vmatpush.bf16.msra.mxu0 %v168
  %180 = vmatpush.bf16.msra.mxu0 %v167
  %181 = vmatpush.bf16.msra.mxu0 %v166
  %182 = vmatpush.bf16.msra.mxu0 %v165
  %183 = vmatpush.bf16.msra.mxu0 %v164
  %184 = vmatpush.bf16.msra.mxu0 %v163
  %185 = vmatpush.bf16.msra.mxu0 %v162
  %186 = vmatmul.bf16.gmra.mxu0 %v114
  %v187 = vpop.f32.mrf.mxu0
  %v188 = vadd.f32 0.0, %v187
  %v189 = vpop.f32.mrf.mxu0
  %v190 = vadd.f32 0.0, %v189
  %191 = vmatmul.bf16.gmra.mxu0 %v115
  %v192 = vpop.f32.mrf.mxu0
  %v193 = vadd.f32 0.0, %v192
  %v194 = vpop.f32.mrf.mxu0
  %v195 = vadd.f32 0.0, %v194
  %196 = vmatmul.bf16.gmra.mxu0 %v116
  %v197 = vpop.f32.mrf.mxu0
  %v198 = vadd.f32 0.0, %v197
  %v199 = vpop.f32.mrf.mxu0
  %v200 = vadd.f32 0.0, %v199
  %201 = vmatmul.bf16.gmra.mxu0 %v117
  %v202 = vpop.f32.mrf.mxu0
  %v203 = vadd.f32 0.0, %v202
  %v204 = vpop.f32.mrf.mxu0
  %v205 = vadd.f32 0.0, %v204
  %206 = vmatmul.bf16.gmra.mxu0 %v118
  %v207 = vpop.f32.mrf.mxu0
  %v208 = vadd.f32 0.0, %v207
  %v209 = vpop.f32.mrf.mxu0
  %v210 = vadd.f32 0.0, %v209
  %211 = vmatmul.bf16.gmra.mxu0 %v119
  %v212 = vpop.f32.mrf.mxu0
  %v213 = vadd.f32 0.0, %v212
  %v214 = vpop.f32.mrf.mxu0
  %v215 = vadd.f32 0.0, %v214
  %216 = vmatmul.bf16.gmra.mxu0 %v120
  %v217 = vpop.f32.mrf.mxu0
  %v218 = vadd.f32 0.0, %v217
  %v219 = vpop.f32.mrf.mxu0
  %v220 = vadd.f32 0.0, %v219
  %221 = vmatmul.bf16.gmra.mxu0 %v121
  %v222 = vpop.f32.mrf.mxu0
  %v223 = vadd.f32 0.0, %v222
  %v224 = vpop.f32.mrf.mxu0
  %v225 = vadd.f32 0.0, %v224
  %226 = vdwg.mxu0
  %v227 = vadd.f32 %v34, %v188
  %v228 = vadd.f32 %v35, %v190
  %v229 = vadd.f32 %v36, %v193
  %v230 = vadd.f32 %v37, %v195
  %v231 = vadd.f32 %v38, %v198
  %v232 = vadd.f32 %v39, %v200
  %v233 = vadd.f32 %v40, %v203
  %v234 = vadd.f32 %v41, %v205
  %v235 = vadd.f32 %v42, %v208
  %v236 = vadd.f32 %v43, %v210
  %v237 = vadd.f32 %v44, %v213
  %v238 = vadd.f32 %v45, %v215
  %v239 = vadd.f32 %v46, %v218
  %v240 = vadd.f32 %v47, %v220
  %v241 = vadd.f32 %v48, %v223
  %v242 = vadd.f32 %v49, %v225
  %243 = vst [vmem:[#allocation2] sm:$0xff] %v227
  %244 = vst [vmem:[#allocation2 + $0x8] sm:$0xff] %v228
  %245 = vst [vmem:[#allocation2 + $0x10] sm:$0xff] %v229
  %246 = vst [vmem:[#allocation2 + $0x18] sm:$0xff] %v230
  %247 = vst [vmem:[#allocation2 + $0x20] sm:$0xff] %v231
  %248 = vst [vmem:[#allocation2 + $0x28] sm:$0xff] %v232
  %249 = vst [vmem:[#allocation2 + $0x30] sm:$0xff] %v233
  %250 = vst [vmem:[#allocation2 + $0x38] sm:$0xff] %v234
  %251 = vst [vmem:[#allocation2 + $0x40] sm:$0xff] %v235
  %252 = vst [vmem:[#allocation2 + $0x48] sm:$0xff] %v236
  %253 = vst [vmem:[#allocation2 + $0x50] sm:$0xff] %v237
  %254 = vst [vmem:[#allocation2 + $0x58] sm:$0xff] %v238
  %255 = vst [vmem:[#allocation2 + $0x60] sm:$0xff] %v239
  %256 = vst [vmem:[#allocation2 + $0x68] sm:$0xff] %v240
  %257 = vst [vmem:[#allocation2 + $0x70] sm:$0xff] %v241
  %258 = vst [vmem:[#allocation2 + $0x78] sm:$0xff] %v242
  // Predicated region
  $region18: #{resnet_generator_forward.49} parent=0 // pred_check
    %p259 = pneg %p14
  $region19: #{resnet_generator_forward.49} parent=0 // pred_check_branch
    %261 = sbr.rel (%p259) target = $region21
  $region20: #{resnet_generator_forward.49} parent=0 // pred_region
    %v262 = vld [vmem:[#allocation2] sm:$0xff]
    %v263 = vld [vmem:[#allocation2 + $0x8] sm:$0xff]
    %v264 = vld [vmem:[#allocation2 + $0x10] sm:$0xff]
    %v265 = vld [vmem:[#allocation2 + $0x18] sm:$0xff]
    %v266 = vld [vmem:[#allocation2 + $0x20] sm:$0xff]
    %v267 = vld [vmem:[#allocation2 + $0x28] sm:$0xff]
    %v268 = vld [vmem:[#allocation2 + $0x30] sm:$0xff]
    %v269 = vld [vmem:[#allocation2 + $0x38] sm:$0xff]
    %v270 = vld [vmem:[#allocation2 + $0x40] sm:$0xff]
    %v271 = vld [vmem:[#allocation2 + $0x48] sm:$0xff]
    %v272 = vld [vmem:[#allocation2 + $0x50] sm:$0xff]
    %v273 = vld [vmem:[#allocation2 + $0x58] sm:$0xff]
    %v274 = vld [vmem:[#allocation2 + $0x60] sm:$0xff]
    %v275 = vld [vmem:[#allocation2 + $0x68] sm:$0xff]
    %v276 = vld [vmem:[#allocation2 + $0x70] sm:$0xff]
    %v277 = vld [vmem:[#allocation2 + $0x78] sm:$0xff]
    %v278 = vld [vmem:[%s2] sm:$0x1]
    %v280 = vperm.slane %v278, 0
    %v282 = vadd.f32 %v262, %v280
    %v283 = vadd.f32 %v263, %v280
    %v284 = vadd.f32 %v264, %v280
    %v285 = vadd.f32 %v265, %v280
    %v286 = vadd.f32 %v266, %v280
    %v287 = vadd.f32 %v267, %v280
    %v288 = vadd.f32 %v268, %v280
    %v289 = vadd.f32 %v269, %v280
    %v290 = vadd.f32 %v270, %v280
    %v291 = vadd.f32 %v271, %v280
    %v292 = vadd.f32 %v272, %v280
    %v293 = vadd.f32 %v273, %v280
    %v294 = vadd.f32 %v274, %v280
    %v295 = vadd.f32 %v275, %v280
    %v296 = vadd.f32 %v276, %v280
    %v297 = vadd.f32 %v277, %v280
    %298 = vst [vmem:[%s3] sm:$0xff] %v282
    %299 = vst [vmem:[%s3 + $0x8] sm:$0xff] %v283
    %300 = vst [vmem:[%s3 + $0x10] sm:$0xff] %v284
    %301 = vst [vmem:[%s3 + $0x18] sm:$0xff] %v285
    %302 = vst [vmem:[%s3 + $0x20] sm:$0xff] %v286
    %303 = vst [vmem:[%s3 + $0x28] sm:$0xff] %v287
    %304 = vst [vmem:[%s3 + $0x30] sm:$0xff] %v288
    %305 = vst [vmem:[%s3 + $0x38] sm:$0xff] %v289
    %306 = vst [vmem:[%s3 + $0x40] sm:$0xff] %v290
    %307 = vst [vmem:[%s3 + $0x48] sm:$0xff] %v291
    %308 = vst [vmem:[%s3 + $0x50] sm:$0xff] %v292
    %309 = vst [vmem:[%s3 + $0x58] sm:$0xff] %v293
    %310 = vst [vmem:[%s3 + $0x60] sm:$0xff] %v294
    %311 = vst [vmem:[%s3 + $0x68] sm:$0xff] %v295
    %312 = vst [vmem:[%s3 + $0x70] sm:$0xff] %v296
    %313 = vst [vmem:[%s3 + $0x78] sm:$0xff] %v297
  $region21: #{resnet_generator_forward.49} parent=0 // pred_fallthru
    _
  // Predicated region
  $region22: #{resnet_generator_forward.49} parent=0 // pred_check
    _
  $region23: #{resnet_generator_forward.49} parent=0 // pred_check_branch
    %315 = sbr.rel (0) target = $region25
  $region24: #{resnet_generator_forward.49} parent=0 // pred_region
    _
  $region25: #{resnet_generator_forward.49} parent=0 // pred_fallthru
    _
  // Predicated region
  $region26: #{resnet_generator_forward.49} parent=0 // pred_check
    _
  $region27: #{resnet_generator_forward.49} parent=0 // pred_check_branch
    %317 = sbr.rel (0) target = $region29
  $region28: #{resnet_generator_forward.49} parent=0 // pred_region
    _
  $region29: #{resnet_generator_forward.49} parent=0 // pred_fallthru
    _

// kernel: resnet_generator_forward.51
$region0: #{resnet_generator_forward.51}
  #allocation0 [shape = 'u32[]', space=smem, size = 0x4, offset = 0x4, fixed_abs, tag = 'smem constant byte address 0x4 - core index']
  #allocation1 [shape = 'u32[72,128]{1,0:T(1,128)}', space=vmem, size = 0x9000, scoped, tag = 'internal scratch']
  %s0 = inlined_call_operand.vmem [shape: f32[128,128], index: 0, kind: input, shape index: {}]
  %s1 = inlined_call_operand.vmem [shape: f32[1,128], index: 1, kind: input, shape index: {}]
  %s2 = inlined_call_operand.vmem [shape: f32[1,128], index: 2, kind: input, shape index: {}]
  %s3 = inlined_call_operand.vmem [shape: bf16[128,128], index: 3, kind: output, shape index: {}]
  %s4 = sld [smem:[#allocation0]]
  $region22: #{resnet_generator_forward.51} parent=0
    _
  %s6 = ssub.s32 1, %s4
  %s7 = scalar_select 0, %s6, %s4
  // Predicated region
  $region2: #{resnet_generator_forward.51} parent=0 // pred_check
    _
  $region3: #{resnet_generator_forward.51} parent=0 // pred_check_branch
    %9 = sbr.rel (0) target = $region5
  $region4: #{resnet_generator_forward.51} parent=0 // pred_region
    _
  $region5: #{resnet_generator_forward.51} parent=0 // pred_fallthru
    _
  // Predicated region
  $region6: #{resnet_generator_forward.51} parent=0 // pred_check
    _
  $region7: #{resnet_generator_forward.51} parent=0 // pred_check_branch
    %11 = sbr.rel (0) target = $region9
  $region8: #{resnet_generator_forward.51} parent=0 // pred_region
    _
  $region9: #{resnet_generator_forward.51} parent=0 // pred_fallthru
    _
  // Predicated region
  $region10: #{resnet_generator_forward.51} parent=0 // pred_check
    _
  $region11: #{resnet_generator_forward.51} parent=0 // pred_check_branch
    %13 = sbr.rel (0) target = $region13
  $region12: #{resnet_generator_forward.51} parent=0 // pred_region
    _
  $region13: #{resnet_generator_forward.51} parent=0 // pred_fallthru
    _
  %v14 = vld [vmem:[%s0] sm:$0xff]
  %v15 = vld [vmem:[%s0 + $0x8] sm:$0xff]
  %v16 = vld [vmem:[%s0 + $0x10] sm:$0xff]
  %v17 = vld [vmem:[%s0 + $0x18] sm:$0xff]
  %v18 = vld [vmem:[%s0 + $0x20] sm:$0xff]
  %v19 = vld [vmem:[%s0 + $0x28] sm:$0xff]
  %v20 = vld [vmem:[%s0 + $0x30] sm:$0xff]
  %v21 = vld [vmem:[%s0 + $0x38] sm:$0xff]
  %v22 = vld [vmem:[%s0 + $0x40] sm:$0xff]
  %v23 = vld [vmem:[%s0 + $0x48] sm:$0xff]
  %v24 = vld [vmem:[%s0 + $0x50] sm:$0xff]
  %v25 = vld [vmem:[%s0 + $0x58] sm:$0xff]
  %v26 = vld [vmem:[%s0 + $0x60] sm:$0xff]
  %v27 = vld [vmem:[%s0 + $0x68] sm:$0xff]
  %v28 = vld [vmem:[%s0 + $0x70] sm:$0xff]
  %v29 = vld [vmem:[%s0 + $0x78] sm:$0xff]
  %v30 = vld [vmem:[%s1] sm:$0x1]
  %v32 = vperm.slane %v30, 0
  %v34 = vmul.f32 %v14, %v32
  %v35 = vmul.f32 %v15, %v32
  %v36 = vmul.f32 %v16, %v32
  %v37 = vmul.f32 %v17, %v32
  %v38 = vmul.f32 %v18, %v32
  %v39 = vmul.f32 %v19, %v32
  %v40 = vmul.f32 %v20, %v32
  %v41 = vmul.f32 %v21, %v32
  %v42 = vmul.f32 %v22, %v32
  %v43 = vmul.f32 %v23, %v32
  %v44 = vmul.f32 %v24, %v32
  %v45 = vmul.f32 %v25, %v32
  %v46 = vmul.f32 %v26, %v32
  %v47 = vmul.f32 %v27, %v32
  %v48 = vmul.f32 %v28, %v32
  %v49 = vmul.f32 %v29, %v32
  %v50 = vld [vmem:[%s2] sm:$0x1]
  %v52 = vperm.slane %v50, 0
  %v54 = vadd.f32 %v34, %v52
  %v55 = vadd.f32 %v35, %v52
  %v56 = vadd.f32 %v36, %v52
  %v57 = vadd.f32 %v37, %v52
  %v58 = vadd.f32 %v38, %v52
  %v59 = vadd.f32 %v39, %v52
  %v60 = vadd.f32 %v40, %v52
  %v61 = vadd.f32 %v41, %v52
  %v62 = vadd.f32 %v42, %v52
  %v63 = vadd.f32 %v43, %v52
  %v64 = vadd.f32 %v44, %v52
  %v65 = vadd.f32 %v45, %v52
  %v66 = vadd.f32 %v46, %v52
  %v67 = vadd.f32 %v47, %v52
  %v68 = vadd.f32 %v48, %v52
  %v69 = vadd.f32 %v49, %v52
  %v70 = vmax.f32 %v54, 0.0
  %v71 = vmax.f32 %v55, 0.0
  %v72 = vmax.f32 %v56, 0.0
  %v73 = vmax.f32 %v57, 0.0
  %v74 = vmax.f32 %v58, 0.0
  %v75 = vmax.f32 %v59, 0.0
  %v76 = vmax.f32 %v60, 0.0
  %v77 = vmax.f32 %v61, 0.0
  %v78 = vmax.f32 %v62, 0.0
  %v79 = vmax.f32 %v63, 0.0
  %v80 = vmax.f32 %v64, 0.0
  %v81 = vmax.f32 %v65, 0.0
  %v82 = vmax.f32 %v66, 0.0
  %v83 = vmax.f32 %v67, 0.0
  %v84 = vmax.f32 %v68, 0.0
  %v85 = vmax.f32 %v69, 0.0
  %v86 = vpack.c.bf16 %v70, %v70
  %v87 = vpack.c.bf16 %v71, %v71
  %v88 = vpack.c.bf16 %v72, %v72
  %v89 = vpack.c.bf16 %v73, %v73
  %v90 = vpack.c.bf16 %v74, %v74
  %v91 = vpack.c.bf16 %v75, %v75
  %v92 = vpack.c.bf16 %v76, %v76
  %v93 = vpack.c.bf16 %v77, %v77
  %v94 = vpack.c.bf16 %v78, %v78
  %v95 = vpack.c.bf16 %v79, %v79
  %v96 = vpack.c.bf16 %v80, %v80
  %v97 = vpack.c.bf16 %v81, %v81
  %v98 = vpack.c.bf16 %v82, %v82
  %v99 = vpack.c.bf16 %v83, %v83
  %v100 = vpack.c.bf16 %v84, %v84
  %v101 = vpack.c.bf16 %v85, %v85
  %102 = vst [vmem:[%s3] sm:$0xf] %v86
  %103 = vst [vmem:[%s3 + $0x4] sm:$0xf] %v87
  %104 = vst [vmem:[%s3 + $0x8] sm:$0xf] %v88
  %105 = vst [vmem:[%s3 + $0xc] sm:$0xf] %v89
  %106 = vst [vmem:[%s3 + $0x10] sm:$0xf] %v90
  %107 = vst [vmem:[%s3 + $0x14] sm:$0xf] %v91
  %108 = vst [vmem:[%s3 + $0x18] sm:$0xf] %v92
  %109 = vst [vmem:[%s3 + $0x1c] sm:$0xf] %v93
  %110 = vst [vmem:[%s3 + $0x20] sm:$0xf] %v94
  %111 = vst [vmem:[%s3 + $0x24] sm:$0xf] %v95
  %112 = vst [vmem:[%s3 + $0x28] sm:$0xf] %v96
  %113 = vst [vmem:[%s3 + $0x2c] sm:$0xf] %v97
  %114 = vst [vmem:[%s3 + $0x30] sm:$0xf] %v98
  %115 = vst [vmem:[%s3 + $0x34] sm:$0xf] %v99
  %116 = vst [vmem:[%s3 + $0x38] sm:$0xf] %v100
  %117 = vst [vmem:[%s3 + $0x3c] sm:$0xf] %v101
  // Predicated region
  $region14: #{resnet_generator_forward.51} parent=0 // pred_check
    _
  $region15: #{resnet_generator_forward.51} parent=0 // pred_check_branch
    %119 = sbr.rel (0) target = $region17
  $region16: #{resnet_generator_forward.51} parent=0 // pred_region
    _
  $region17: #{resnet_generator_forward.51} parent=0 // pred_fallthru
    _
  // Predicated region
  $region18: #{resnet_generator_forward.51} parent=0 // pred_check
    _
  $region19: #{resnet_generator_forward.51} parent=0 // pred_check_branch
    %121 = sbr.rel (0) target = $region21
  $region20: #{resnet_generator_forward.51} parent=0 // pred_region
    _
  $region21: #{resnet_generator_forward.51} parent=0 // pred_fallthru
    _

// kernel: resnet_generator_forward.53
$region0: #{resnet_generator_forward.53}
  #allocation0 [shape = 'u32[]', space=smem, size = 0x4, offset = 0x4, fixed_abs, tag = 'smem constant byte address 0x4 - core index']
  #allocation1 [shape = 'u32[72,128]{1,0:T(1,128)}', space=vmem, size = 0x9000, scoped, tag = 'internal scratch']
  %s0 = inlined_call_operand.vmem [shape: f32[32,128], index: 0, kind: input, shape index: {}]
  %s1 = inlined_call_operand.vmem [shape: f32[2,128], index: 1, kind: output, shape index: {}]
  %s2 = sld [smem:[#allocation0]]
  $region18: #{resnet_generator_forward.53} parent=0
    _
  %s4 = ssub.s32 1, %s2
  %s5 = scalar_select 0, %s4, %s2
  // Predicated region
  $region2: #{resnet_generator_forward.53} parent=0 // pred_check
    _
  $region3: #{resnet_generator_forward.53} parent=0 // pred_check_branch
    %7 = sbr.rel (0) target = $region5
  $region4: #{resnet_generator_forward.53} parent=0 // pred_region
    _
  $region5: #{resnet_generator_forward.53} parent=0 // pred_fallthru
    _
  %p8 = scmp.eq.s32.totalorder 0, 0
  // Predicated region
  $region6: #{resnet_generator_forward.53} parent=0 // pred_check
    %p9 = pneg %p8
  $region7: #{resnet_generator_forward.53} parent=0 // pred_check_branch
    %11 = sbr.rel (%p9) target = $region9
  $region8: #{resnet_generator_forward.53} parent=0 // pred_region
    %12 = vst [vmem:[%s1] sm:$0x3] 0.0
  $region9: #{resnet_generator_forward.53} parent=0 // pred_fallthru
    _
  %v13 = vld [vmem:[%s0] sm:$0xff]
  %v14 = vld [vmem:[%s0 + $0x8] sm:$0xff]
  %v15 = vld [vmem:[%s0 + $0x10] sm:$0xff]
  %v16 = vld [vmem:[%s0 + $0x18] sm:$0xff]
  %v17 = vadd.f32 %v13, %v14
  %v18 = vadd.f32 %v17, %v15
  %v19 = vadd.f32 %v18, %v16
  %v20 = vrot.slane %v19, 4
  %v21 = vadd.f32 %v19, %v20
  %v22 = vrot.slane %v21, 2
  %v23 = vadd.f32 %v21, %v22
  %v24 = vrot.slane %v23, 1
  %v25 = vadd.f32 %v23, %v24
  %v26 = vmul.f32 %v13, %v13
  %v27 = vmul.f32 %v14, %v14
  %v28 = vmul.f32 %v15, %v15
  %v29 = vmul.f32 %v16, %v16
  %v30 = vadd.f32 %v26, %v27
  %v31 = vadd.f32 %v30, %v28
  %v32 = vadd.f32 %v31, %v29
  %v33 = vrot.slane %v32, 4
  %v34 = vadd.f32 %v32, %v33
  %v35 = vrot.slane %v34, 2
  %v36 = vadd.f32 %v34, %v35
  %v37 = vrot.slane %v36, 1
  %v38 = vadd.f32 %v36, %v37
  %v39 = vld [vmem:[%s1] sm:$0x3]
  %vm40 = vcmask 1040384
  %v41 = vsel %vm40, %v25, %v38
  %v42 = vadd.f32 %v39, %v41
  %43 = vst [vmem:[%s1] sm:$0x3] %v42
  // Predicated region
  $region10: #{resnet_generator_forward.53} parent=0 // pred_check
    _
  $region11: #{resnet_generator_forward.53} parent=0 // pred_check_branch
    %45 = sbr.rel (0) target = $region13
  $region12: #{resnet_generator_forward.53} parent=0 // pred_region
    _
  $region13: #{resnet_generator_forward.53} parent=0 // pred_fallthru
    _
  // Predicated region
  $region14: #{resnet_generator_forward.53} parent=0 // pred_check
    _
  $region15: #{resnet_generator_forward.53} parent=0 // pred_check_branch
    %47 = sbr.rel (0) target = $region17
  $region16: #{resnet_generator_forward.53} parent=0 // pred_region
    _
  $region17: #{resnet_generator_forward.53} parent=0 // pred_fallthru
    _

// kernel: resnet_generator_forward.52
$region0: #{resnet_generator_forward.52}
  #allocation0 [shape = 'u32[]', space=smem, size = 0x4, offset = 0x4, fixed_abs, tag = 'smem constant byte address 0x4 - core index']
  #allocation1 [shape = 'u32[72,128]{1,0:T(1,128)}', space=vmem, size = 0x9000, scoped, tag = 'internal scratch']
  #allocation2 [shape = 'f32[32,128]{1,0:T(8,128)}', space=vmem, size = 0x4000, scoped, tag = 'scratch operand']
  %s0 = inlined_call_operand.vmem [shape: bf16[32,256], index: 0, kind: input, shape index: {}]
  %s1 = inlined_call_operand.vmem [shape: bf16[256,128], index: 1, kind: input, shape index: {}]
  %s2 = inlined_call_operand.vmem [shape: f32[1,128], index: 2, kind: input, shape index: {}]
  %s3 = inlined_call_operand.vmem [shape: f32[32,128], index: 3, kind: output, shape index: {}]
  %s4 = sld [smem:[#allocation0]]
  $region30: #{resnet_generator_forward.52} parent=0
    _
  %s6 = ssub.s32 1, %s4
  %s7 = scalar_select 0, %s6, %s4
  // Predicated region
  $region2: #{resnet_generator_forward.52} parent=0 // pred_check
    _
  $region3: #{resnet_generator_forward.52} parent=0 // pred_check_branch
    %9 = sbr.rel (0) target = $region5
  $region4: #{resnet_generator_forward.52} parent=0 // pred_region
    _
  $region5: #{resnet_generator_forward.52} parent=0 // pred_fallthru
    _
  // Predicated region
  $region6: #{resnet_generator_forward.52} parent=0 // pred_check
    _
  $region7: #{resnet_generator_forward.52} parent=0 // pred_check_branch
    %11 = sbr.rel (0) target = $region9
  $region8: #{resnet_generator_forward.52} parent=0 // pred_region
    _
  $region9: #{resnet_generator_forward.52} parent=0 // pred_fallthru
    _
  // Predicated region
  $region10: #{resnet_generator_forward.52} parent=0 // pred_check
    _
  $region11: #{resnet_generator_forward.52} parent=0 // pred_check_branch
    %13 = sbr.rel (0) target = $region13
  $region12: #{resnet_generator_forward.52} parent=0 // pred_region
    _
  $region13: #{resnet_generator_forward.52} parent=0 // pred_fallthru
    _
  %p14 = scmp.eq.s32.totalorder 0, 0
  // Predicated region
  $region14: #{resnet_generator_forward.52} parent=0 // pred_check
    %p15 = pneg %p14
  $region15: #{resnet_generator_forward.52} parent=0 // pred_check_branch
    %17 = sbr.rel (%p15) target = $region17
  $region16: #{resnet_generator_forward.52} parent=0 // pred_region
    %18 = vst [vmem:[#allocation2] sm:$0xff] 0.0
    %19 = vst [vmem:[#allocation2 + $0x8] sm:$0xff] 0.0
    %20 = vst [vmem:[#allocation2 + $0x10] sm:$0xff] 0.0
    %21 = vst [vmem:[#allocation2 + $0x18] sm:$0xff] 0.0
  $region17: #{resnet_generator_forward.52} parent=0 // pred_fallthru
    _
  %v22 = vld [vmem:[#allocation2] sm:$0xff]
  %v23 = vld [vmem:[#allocation2 + $0x8] sm:$0xff]
  %v24 = vld [vmem:[#allocation2 + $0x10] sm:$0xff]
  %v25 = vld [vmem:[#allocation2 + $0x18] sm:$0xff]
  %v26 = vld [vmem:[%s0] sm:$0xff]
  %v27 = vld [vmem:[%s0 + $0x8] sm:$0xff]
  %v28 = vld [vmem:[%s0 + $0x10] sm:$0xff]
  %v29 = vld [vmem:[%s0 + $0x18] sm:$0xff]
  %v30 = vld [vmem:[%s1] sm:$0xf]
  %v31 = vld [vmem:[%s1 + $0x4] sm:$0xf]
  %v32 = vld [vmem:[%s1 + $0x8] sm:$0xf]
  %v33 = vld [vmem:[%s1 + $0xc] sm:$0xf]
  %v34 = vld [vmem:[%s1 + $0x10] sm:$0xf]
  %v35 = vld [vmem:[%s1 + $0x14] sm:$0xf]
  %v36 = vld [vmem:[%s1 + $0x18] sm:$0xf]
  %v37 = vld [vmem:[%s1 + $0x1c] sm:$0xf]
  %v38 = vld [vmem:[%s1 + $0x20] sm:$0xf]
  %v39 = vld [vmem:[%s1 + $0x24] sm:$0xf]
  %v40 = vld [vmem:[%s1 + $0x28] sm:$0xf]
  %v41 = vld [vmem:[%s1 + $0x2c] sm:$0xf]
  %v42 = vld [vmem:[%s1 + $0x30] sm:$0xf]
  %v43 = vld [vmem:[%s1 + $0x34] sm:$0xf]
  %v44 = vld [vmem:[%s1 + $0x38] sm:$0xf]
  %v45 = vld [vmem:[%s1 + $0x3c] sm:$0xf]
  %v46 = vld [vmem:[%s1 + $0x40] sm:$0xf]
  %v47 = vld [vmem:[%s1 + $0x44] sm:$0xf]
  %v48 = vld [vmem:[%s1 + $0x48] sm:$0xf]
  %v49 = vld [vmem:[%s1 + $0x4c] sm:$0xf]
  %v50 = vld [vmem:[%s1 + $0x50] sm:$0xf]
  %v51 = vld [vmem:[%s1 + $0x54] sm:$0xf]
  %v52 = vld [vmem:[%s1 + $0x58] sm:$0xf]
  %v53 = vld [vmem:[%s1 + $0x5c] sm:$0xf]
  %v54 = vld [vmem:[%s1 + $0x60] sm:$0xf]
  %v55 = vld [vmem:[%s1 + $0x64] sm:$0xf]
  %v56 = vld [vmem:[%s1 + $0x68] sm:$0xf]
  %v57 = vld [vmem:[%s1 + $0x6c] sm:$0xf]
  %v58 = vld [vmem:[%s1 + $0x70] sm:$0xf]
  %v59 = vld [vmem:[%s1 + $0x74] sm:$0xf]
  %v60 = vld [vmem:[%s1 + $0x78] sm:$0xf]
  %v61 = vld [vmem:[%s1 + $0x7c] sm:$0xf]
  %v66 = vunpack.c.l.b16 %v26
  %v67 = vunpack.c.h.b16 %v26
  %v68 = vunpack.c.l.b16 %v27
  %v69 = vunpack.c.h.b16 %v27
  %v70 = vunpack.c.l.b16 %v28
  %v71 = vunpack.c.h.b16 %v28
  %v72 = vunpack.c.l.b16 %v29
  %v73 = vunpack.c.h.b16 %v29
  %v74 = vpack.c.b16 %v68, %v66
  %v75 = vpack.c.b16 %v69, %v67
  %v76 = vpack.c.b16 %v72, %v70
  %v77 = vpack.c.b16 %v73, %v71
  %v114 = vunpack.c.l.b16 %v30
  %v115 = vunpack.c.l.b16 %v31
  %v116 = vunpack.c.l.b16 %v32
  %v117 = vunpack.c.l.b16 %v33
  %v118 = vunpack.c.l.b16 %v34
  %v119 = vunpack.c.l.b16 %v35
  %v120 = vunpack.c.l.b16 %v36
  %v121 = vunpack.c.l.b16 %v37
  %v122 = vunpack.c.l.b16 %v38
  %v123 = vunpack.c.l.b16 %v39
  %v124 = vunpack.c.l.b16 %v40
  %v125 = vunpack.c.l.b16 %v41
  %v126 = vunpack.c.l.b16 %v42
  %v127 = vunpack.c.l.b16 %v43
  %v128 = vunpack.c.l.b16 %v44
  %v129 = vunpack.c.l.b16 %v45
  %v130 = vunpack.c.l.b16 %v46
  %v131 = vunpack.c.l.b16 %v47
  %v132 = vunpack.c.l.b16 %v48
  %v133 = vunpack.c.l.b16 %v49
  %v134 = vunpack.c.l.b16 %v50
  %v135 = vunpack.c.l.b16 %v51
  %v136 = vunpack.c.l.b16 %v52
  %v137 = vunpack.c.l.b16 %v53
  %v138 = vunpack.c.l.b16 %v54
  %v139 = vunpack.c.l.b16 %v55
  %v140 = vunpack.c.l.b16 %v56
  %v141 = vunpack.c.l.b16 %v57
  %v142 = vunpack.c.l.b16 %v58
  %v143 = vunpack.c.l.b16 %v59
  %v144 = vunpack.c.l.b16 %v60
  %v145 = vunpack.c.l.b16 %v61
  %v146 = vpack.c.b16 %v115, %v114
  %v147 = vpack.c.b16 %v117, %v116
  %v148 = vpack.c.b16 %v119, %v118
  %v149 = vpack.c.b16 %v121, %v120
  %v150 = vpack.c.b16 %v123, %v122
  %v151 = vpack.c.b16 %v125, %v124
  %v152 = vpack.c.b16 %v127, %v126
  %v153 = vpack.c.b16 %v129, %v128
  %v154 = vpack.c.b16 %v131, %v130
  %v155 = vpack.c.b16 %v133, %v132
  %v156 = vpack.c.b16 %v135, %v134
  %v157 = vpack.c.b16 %v137, %v136
  %v158 = vpack.c.b16 %v139, %v138
  %v159 = vpack.c.b16 %v141, %v140
  %v160 = vpack.c.b16 %v143, %v142
  %v161 = vpack.c.b16 %v145, %v144
  %178 = vmatpush.bf16.msra.mxu0 %v153
  %179 = vmatpush.bf16.msra.mxu0 %v152
  %180 = vmatpush.bf16.msra.mxu0 %v151
  %181 = vmatpush.bf16.msra.mxu0 %v150
  %182 = vmatpush.bf16.msra.mxu0 %v149
  %183 = vmatpush.bf16.msra.mxu0 %v148
  %184 = vmatpush.bf16.msra.mxu0 %v147
  %185 = vmatpush.bf16.msra.mxu0 %v146
  %186 = vmatmul.bf16.gmra.mxu0 %v74
  %v187 = vpop.f32.mrf.mxu0
  %v188 = vadd.f32 0.0, %v187
  %v189 = vpop.f32.mrf.mxu0
  %v190 = vadd.f32 0.0, %v189
  %191 = vmatmul.bf16.gmra.mxu0 %v76
  %v192 = vpop.f32.mrf.mxu0
  %v193 = vadd.f32 0.0, %v192
  %v194 = vpop.f32.mrf.mxu0
  %v195 = vadd.f32 0.0, %v194
  %196 = vdwg.mxu0
  %197 = vmatpush.bf16.msra.mxu0 %v161
  %198 = vmatpush.bf16.msra.mxu0 %v160
  %199 = vmatpush.bf16.msra.mxu0 %v159
  %200 = vmatpush.bf16.msra.mxu0 %v158
  %201 = vmatpush.bf16.msra.mxu0 %v157
  %202 = vmatpush.bf16.msra.mxu0 %v156
  %203 = vmatpush.bf16.msra.mxu0 %v155
  %204 = vmatpush.bf16.msra.mxu0 %v154
  %205 = vmatmul.bf16.gmra.mxu0 %v75
  %v206 = vpop.f32.mrf.mxu0
  %v207 = vadd.f32 %v188, %v206
  %v208 = vpop.f32.mrf.mxu0
  %v209 = vadd.f32 %v190, %v208
  %210 = vmatmul.bf16.gmra.mxu0 %v77
  %v211 = vpop.f32.mrf.mxu0
  %v212 = vadd.f32 %v193, %v211
  %v213 = vpop.f32.mrf.mxu0
  %v214 = vadd.f32 %v195, %v213
  %215 = vdwg.mxu0
  %v216 = vadd.f32 %v22, %v207
  %v217 = vadd.f32 %v23, %v209
  %v218 = vadd.f32 %v24, %v212
  %v219 = vadd.f32 %v25, %v214
  %220 = vst [vmem:[#allocation2] sm:$0xff] %v216
  %221 = vst [vmem:[#allocation2 + $0x8] sm:$0xff] %v217
  %222 = vst [vmem:[#allocation2 + $0x10] sm:$0xff] %v218
  %223 = vst [vmem:[#allocation2 + $0x18] sm:$0xff] %v219
  // Predicated region
  $region18: #{resnet_generator_forward.52} parent=0 // pred_check
    %p224 = pneg %p14
  $region19: #{resnet_generator_forward.52} parent=0 // pred_check_branch
    %226 = sbr.rel (%p224) target = $region21
  $region20: #{resnet_generator_forward.52} parent=0 // pred_region
    %v227 = vld [vmem:[#allocation2] sm:$0xff]
    %v228 = vld [vmem:[#allocation2 + $0x8] sm:$0xff]
    %v229 = vld [vmem:[#allocation2 + $0x10] sm:$0xff]
    %v230 = vld [vmem:[#allocation2 + $0x18] sm:$0xff]
    %v231 = vld [vmem:[%s2] sm:$0x1]
    %v233 = vperm.slane %v231, 0
    %v235 = vadd.f32 %v227, %v233
    %v236 = vadd.f32 %v228, %v233
    %v237 = vadd.f32 %v229, %v233
    %v238 = vadd.f32 %v230, %v233
    %239 = vst [vmem:[%s3] sm:$0xff] %v235
    %240 = vst [vmem:[%s3 + $0x8] sm:$0xff] %v236
    %241 = vst [vmem:[%s3 + $0x10] sm:$0xff] %v237
    %242 = vst [vmem:[%s3 + $0x18] sm:$0xff] %v238
  $region21: #{resnet_generator_forward.52} parent=0 // pred_fallthru
    _
  // Predicated region
  $region22: #{resnet_generator_forward.52} parent=0 // pred_check
    _
  $region23: #{resnet_generator_forward.52} parent=0 // pred_check_branch
    %244 = sbr.rel (0) target = $region25
  $region24: #{resnet_generator_forward.52} parent=0 // pred_region
    _
  $region25: #{resnet_generator_forward.52} parent=0 // pred_fallthru
    _
  // Predicated region
  $region26: #{resnet_generator_forward.52} parent=0 // pred_check
    _
  $region27: #{resnet_generator_forward.52} parent=0 // pred_check_branch
    %246 = sbr.rel (0) target = $region29
  $region28: #{resnet_generator_forward.52} parent=0 // pred_region
    _
  $region29: #{resnet_generator_forward.52} parent=0 // pred_fallthru
    _

// kernel: resnet_generator_forward.54
$region0: #{resnet_generator_forward.54}
  #allocation0 [shape = 'u32[]', space=smem, size = 0x4, offset = 0x4, fixed_abs, tag = 'smem constant byte address 0x4 - core index']
  #allocation1 [shape = 'u32[72,128]{1,0:T(1,128)}', space=vmem, size = 0x9000, scoped, tag = 'internal scratch']
  %s0 = inlined_call_operand.vmem [shape: f32[32,128], index: 0, kind: input, shape index: {}]
  %s1 = inlined_call_operand.vmem [shape: f32[1,128], index: 1, kind: input, shape index: {}]
  %s2 = inlined_call_operand.vmem [shape: f32[1,128], index: 2, kind: input, shape index: {}]
  %s3 = inlined_call_operand.vmem [shape: bf16[32,128], index: 3, kind: output, shape index: {}]
  %s4 = sld [smem:[#allocation0]]
  $region22: #{resnet_generator_forward.54} parent=0
    _
  %s6 = ssub.s32 1, %s4
  %s7 = scalar_select 0, %s6, %s4
  // Predicated region
  $region2: #{resnet_generator_forward.54} parent=0 // pred_check
    _
  $region3: #{resnet_generator_forward.54} parent=0 // pred_check_branch
    %9 = sbr.rel (0) target = $region5
  $region4: #{resnet_generator_forward.54} parent=0 // pred_region
    _
  $region5: #{resnet_generator_forward.54} parent=0 // pred_fallthru
    _
  // Predicated region
  $region6: #{resnet_generator_forward.54} parent=0 // pred_check
    _
  $region7: #{resnet_generator_forward.54} parent=0 // pred_check_branch
    %11 = sbr.rel (0) target = $region9
  $region8: #{resnet_generator_forward.54} parent=0 // pred_region
    _
  $region9: #{resnet_generator_forward.54} parent=0 // pred_fallthru
    _
  // Predicated region
  $region10: #{resnet_generator_forward.54} parent=0 // pred_check
    _
  $region11: #{resnet_generator_forward.54} parent=0 // pred_check_branch
    %13 = sbr.rel (0) target = $region13
  $region12: #{resnet_generator_forward.54} parent=0 // pred_region
    _
  $region13: #{resnet_generator_forward.54} parent=0 // pred_fallthru
    _
  %v14 = vld [vmem:[%s0] sm:$0xff]
  %v15 = vld [vmem:[%s0 + $0x8] sm:$0xff]
  %v16 = vld [vmem:[%s0 + $0x10] sm:$0xff]
  %v17 = vld [vmem:[%s0 + $0x18] sm:$0xff]
  %v18 = vld [vmem:[%s1] sm:$0x1]
  %v20 = vperm.slane %v18, 0
  %v22 = vmul.f32 %v14, %v20
  %v23 = vmul.f32 %v15, %v20
  %v24 = vmul.f32 %v16, %v20
  %v25 = vmul.f32 %v17, %v20
  %v26 = vld [vmem:[%s2] sm:$0x1]
  %v28 = vperm.slane %v26, 0
  %v30 = vadd.f32 %v22, %v28
  %v31 = vadd.f32 %v23, %v28
  %v32 = vadd.f32 %v24, %v28
  %v33 = vadd.f32 %v25, %v28
  %v34 = vmax.f32 %v30, 0.0
  %v35 = vmax.f32 %v31, 0.0
  %v36 = vmax.f32 %v32, 0.0
  %v37 = vmax.f32 %v33, 0.0
  %v38 = vpack.c.bf16 %v34, %v34
  %v39 = vpack.c.bf16 %v35, %v35
  %v40 = vpack.c.bf16 %v36, %v36
  %v41 = vpack.c.bf16 %v37, %v37
  %42 = vst [vmem:[%s3] sm:$0xf] %v38
  %43 = vst [vmem:[%s3 + $0x4] sm:$0xf] %v39
  %44 = vst [vmem:[%s3 + $0x8] sm:$0xf] %v40
  %45 = vst [vmem:[%s3 + $0xc] sm:$0xf] %v41
  // Predicated region
  $region14: #{resnet_generator_forward.54} parent=0 // pred_check
    _
  $region15: #{resnet_generator_forward.54} parent=0 // pred_check_branch
    %47 = sbr.rel (0) target = $region17
  $region16: #{resnet_generator_forward.54} parent=0 // pred_region
    _
  $region17: #{resnet_generator_forward.54} parent=0 // pred_fallthru
    _
  // Predicated region
  $region18: #{resnet_generator_forward.54} parent=0 // pred_check
    _
  $region19: #{resnet_generator_forward.54} parent=0 // pred_check_branch
    %49 = sbr.rel (0) target = $region21
  $region20: #{resnet_generator_forward.54} parent=0 // pred_region
    _
  $region21: #{resnet_generator_forward.54} parent=0 // pred_fallthru
    _

// kernel: resnet_generator_forward.60
$region0: #{resnet_generator_forward.60}
  #allocation0 [shape = 'u32[]', space=smem, size = 0x4, offset = 0x4, fixed_abs, tag = 'smem constant byte address 0x4 - core index']
  #allocation1 [shape = 'u32[72,128]{1,0:T(1,128)}', space=vmem, size = 0x9000, scoped, tag = 'internal scratch']
  %s0 = inlined_call_operand.vmem [shape: f32[32,128], index: 0, kind: input, shape index: {}]
  %s1 = inlined_call_operand.vmem [shape: f32[1,128], index: 1, kind: input, shape index: {}]
  %s2 = inlined_call_operand.vmem [shape: f32[1,128], index: 2, kind: input, shape index: {}]
  %s3 = inlined_call_operand.vmem [shape: bf16[32,128], index: 3, kind: input, shape index: {}]
  %s4 = inlined_call_operand.vmem [shape: bf16[32,128], index: 4, kind: output, shape index: {}]
  %s5 = sld [smem:[#allocation0]]
  $region26: #{resnet_generator_forward.60} parent=0
    _
  %s7 = ssub.s32 1, %s5
  %s8 = scalar_select 0, %s7, %s5
  // Predicated region
  $region2: #{resnet_generator_forward.60} parent=0 // pred_check
    _
  $region3: #{resnet_generator_forward.60} parent=0 // pred_check_branch
    %10 = sbr.rel (0) target = $region5
  $region4: #{resnet_generator_forward.60} parent=0 // pred_region
    _
  $region5: #{resnet_generator_forward.60} parent=0 // pred_fallthru
    _
  // Predicated region
  $region6: #{resnet_generator_forward.60} parent=0 // pred_check
    _
  $region7: #{resnet_generator_forward.60} parent=0 // pred_check_branch
    %12 = sbr.rel (0) target = $region9
  $region8: #{resnet_generator_forward.60} parent=0 // pred_region
    _
  $region9: #{resnet_generator_forward.60} parent=0 // pred_fallthru
    _
  // Predicated region
  $region10: #{resnet_generator_forward.60} parent=0 // pred_check
    _
  $region11: #{resnet_generator_forward.60} parent=0 // pred_check_branch
    %14 = sbr.rel (0) target = $region13
  $region12: #{resnet_generator_forward.60} parent=0 // pred_region
    _
  $region13: #{resnet_generator_forward.60} parent=0 // pred_fallthru
    _
  // Predicated region
  $region14: #{resnet_generator_forward.60} parent=0 // pred_check
    _
  $region15: #{resnet_generator_forward.60} parent=0 // pred_check_branch
    %16 = sbr.rel (0) target = $region17
  $region16: #{resnet_generator_forward.60} parent=0 // pred_region
    _
  $region17: #{resnet_generator_forward.60} parent=0 // pred_fallthru
    _
  %v17 = vld [vmem:[%s0] sm:$0xff]
  %v18 = vld [vmem:[%s0 + $0x8] sm:$0xff]
  %v19 = vld [vmem:[%s0 + $0x10] sm:$0xff]
  %v20 = vld [vmem:[%s0 + $0x18] sm:$0xff]
  %v21 = vld [vmem:[%s1] sm:$0x1]
  %v23 = vperm.slane %v21, 0
  %v25 = vmul.f32 %v17, %v23
  %v26 = vmul.f32 %v18, %v23
  %v27 = vmul.f32 %v19, %v23
  %v28 = vmul.f32 %v20, %v23
  %v29 = vld [vmem:[%s2] sm:$0x1]
  %v31 = vperm.slane %v29, 0
  %v33 = vadd.f32 %v25, %v31
  %v34 = vadd.f32 %v26, %v31
  %v35 = vadd.f32 %v27, %v31
  %v36 = vadd.f32 %v28, %v31
  %v37 = vld [vmem:[%s3] sm:$0xf]
  %v38 = vld [vmem:[%s3 + $0x4] sm:$0xf]
  %v39 = vld [vmem:[%s3 + $0x8] sm:$0xf]
  %v40 = vld [vmem:[%s3 + $0xc] sm:$0xf]
  %v41 = vunpack.c.l.bf16 %v37
  %v42 = vunpack.c.l.bf16 %v38
  %v43 = vunpack.c.l.bf16 %v39
  %v44 = vunpack.c.l.bf16 %v40
  %v45 = vadd.f32 %v33, %v41
  %v46 = vadd.f32 %v34, %v42
  %v47 = vadd.f32 %v35, %v43
  %v48 = vadd.f32 %v36, %v44
  %v49 = vpack.c.bf16 %v45, %v45
  %v50 = vpack.c.bf16 %v46, %v46
  %v51 = vpack.c.bf16 %v47, %v47
  %v52 = vpack.c.bf16 %v48, %v48
  %53 = vst [vmem:[%s4] sm:$0xf] %v49
  %54 = vst [vmem:[%s4 + $0x4] sm:$0xf] %v50
  %55 = vst [vmem:[%s4 + $0x8] sm:$0xf] %v51
  %56 = vst [vmem:[%s4 + $0xc] sm:$0xf] %v52
  // Predicated region
  $region18: #{resnet_generator_forward.60} parent=0 // pred_check
    _
  $region19: #{resnet_generator_forward.60} parent=0 // pred_check_branch
    %58 = sbr.rel (0) target = $region21
  $region20: #{resnet_generator_forward.60} parent=0 // pred_region
    _
  $region21: #{resnet_generator_forward.60} parent=0 // pred_fallthru
    _
  // Predicated region
  $region22: #{resnet_generator_forward.60} parent=0 // pred_check
    _
  $region23: #{resnet_generator_forward.60} parent=0 // pred_check_branch
    %60 = sbr.rel (0) target = $region25
  $region24: #{resnet_generator_forward.60} parent=0 // pred_region
    _
  $region25: #{resnet_generator_forward.60} parent=0 // pred_fallthru
    _

// kernel: resnet_generator_forward.55
$region0: #{resnet_generator_forward.55}
  #allocation0 [shape = 'u32[]', space=smem, size = 0x4, offset = 0x4, fixed_abs, tag = 'smem constant byte address 0x4 - core index']
  #allocation1 [shape = 'u32[72,128]{1,0:T(1,128)}', space=vmem, size = 0x9000, scoped, tag = 'internal scratch']
  #allocation2 [shape = 'f32[32,128]{1,0:T(8,128)}', space=vmem, size = 0x4000, scoped, tag = 'scratch operand']
  %s0 = inlined_call_operand.vmem [shape: bf16[32,384], index: 0, kind: input, shape index: {}]
  %s1 = inlined_call_operand.vmem [shape: bf16[384,128], index: 1, kind: input, shape index: {}]
  %s2 = inlined_call_operand.vmem [shape: f32[1,128], index: 2, kind: input, shape index: {}]
  %s3 = inlined_call_operand.vmem [shape: f32[32,128], index: 3, kind: output, shape index: {}]
  %s4 = sld [smem:[#allocation0]]
  $region30: #{resnet_generator_forward.55} parent=0
    _
  %s6 = ssub.s32 1, %s4
  %s7 = scalar_select 0, %s6, %s4
  // Predicated region
  $region2: #{resnet_generator_forward.55} parent=0 // pred_check
    _
  $region3: #{resnet_generator_forward.55} parent=0 // pred_check_branch
    %9 = sbr.rel (0) target = $region5
  $region4: #{resnet_generator_forward.55} parent=0 // pred_region
    _
  $region5: #{resnet_generator_forward.55} parent=0 // pred_fallthru
    _
  // Predicated region
  $region6: #{resnet_generator_forward.55} parent=0 // pred_check
    _
  $region7: #{resnet_generator_forward.55} parent=0 // pred_check_branch
    %11 = sbr.rel (0) target = $region9
  $region8: #{resnet_generator_forward.55} parent=0 // pred_region
    _
  $region9: #{resnet_generator_forward.55} parent=0 // pred_fallthru
    _
  // Predicated region
  $region10: #{resnet_generator_forward.55} parent=0 // pred_check
    _
  $region11: #{resnet_generator_forward.55} parent=0 // pred_check_branch
    %13 = sbr.rel (0) target = $region13
  $region12: #{resnet_generator_forward.55} parent=0 // pred_region
    _
  $region13: #{resnet_generator_forward.55} parent=0 // pred_fallthru
    _
  %p14 = scmp.eq.s32.totalorder 0, 0
  // Predicated region
  $region14: #{resnet_generator_forward.55} parent=0 // pred_check
    %p15 = pneg %p14
  $region15: #{resnet_generator_forward.55} parent=0 // pred_check_branch
    %17 = sbr.rel (%p15) target = $region17
  $region16: #{resnet_generator_forward.55} parent=0 // pred_region
    %18 = vst [vmem:[#allocation2] sm:$0xff] 0.0
    %19 = vst [vmem:[#allocation2 + $0x8] sm:$0xff] 0.0
    %20 = vst [vmem:[#allocation2 + $0x10] sm:$0xff] 0.0
    %21 = vst [vmem:[#allocation2 + $0x18] sm:$0xff] 0.0
  $region17: #{resnet_generator_forward.55} parent=0 // pred_fallthru
    _
  %v22 = vld [vmem:[#allocation2] sm:$0xff]
  %v23 = vld [vmem:[#allocation2 + $0x8] sm:$0xff]
  %v24 = vld [vmem:[#allocation2 + $0x10] sm:$0xff]
  %v25 = vld [vmem:[#allocation2 + $0x18] sm:$0xff]
  %v26 = vld [vmem:[%s0] sm:$0xff]
  %v27 = vld [vmem:[%s0 + $0x8] sm:$0xf]
  %v28 = vld [vmem:[%s0 + $0xc] sm:$0xff]
  %v29 = vld [vmem:[%s0 + $0x14] sm:$0xf]
  %v30 = vld [vmem:[%s0 + $0x18] sm:$0xff]
  %v31 = vld [vmem:[%s0 + $0x20] sm:$0xf]
  %v32 = vld [vmem:[%s0 + $0x24] sm:$0xff]
  %v33 = vld [vmem:[%s0 + $0x2c] sm:$0xf]
  %v34 = vld [vmem:[%s1] sm:$0xf]
  %v35 = vld [vmem:[%s1 + $0x4] sm:$0xf]
  %v36 = vld [vmem:[%s1 + $0x8] sm:$0xf]
  %v37 = vld [vmem:[%s1 + $0xc] sm:$0xf]
  %v38 = vld [vmem:[%s1 + $0x10] sm:$0xf]
  %v39 = vld [vmem:[%s1 + $0x14] sm:$0xf]
  %v40 = vld [vmem:[%s1 + $0x18] sm:$0xf]
  %v41 = vld [vmem:[%s1 + $0x1c] sm:$0xf]
  %v42 = vld [vmem:[%s1 + $0x20] sm:$0xf]
  %v43 = vld [vmem:[%s1 + $0x24] sm:$0xf]
  %v44 = vld [vmem:[%s1 + $0x28] sm:$0xf]
  %v45 = vld [vmem:[%s1 + $0x2c] sm:$0xf]
  %v46 = vld [vmem:[%s1 + $0x30] sm:$0xf]
  %v47 = vld [vmem:[%s1 + $0x34] sm:$0xf]
  %v48 = vld [vmem:[%s1 + $0x38] sm:$0xf]
  %v49 = vld [vmem:[%s1 + $0x3c] sm:$0xf]
  %v50 = vld [vmem:[%s1 + $0x40] sm:$0xf]
  %v51 = vld [vmem:[%s1 + $0x44] sm:$0xf]
  %v52 = vld [vmem:[%s1 + $0x48] sm:$0xf]
  %v53 = vld [vmem:[%s1 + $0x4c] sm:$0xf]
  %v54 = vld [vmem:[%s1 + $0x50] sm:$0xf]
  %v55 = vld [vmem:[%s1 + $0x54] sm:$0xf]
  %v56 = vld [vmem:[%s1 + $0x58] sm:$0xf]
  %v57 = vld [vmem:[%s1 + $0x5c] sm:$0xf]
  %v58 = vld [vmem:[%s1 + $0x60] sm:$0xf]
  %v59 = vld [vmem:[%s1 + $0x64] sm:$0xf]
  %v60 = vld [vmem:[%s1 + $0x68] sm:$0xf]
  %v61 = vld [vmem:[%s1 + $0x6c] sm:$0xf]
  %v62 = vld [vmem:[%s1 + $0x70] sm:$0xf]
  %v63 = vld [vmem:[%s1 + $0x74] sm:$0xf]
  %v64 = vld [vmem:[%s1 + $0x78] sm:$0xf]
  %v65 = vld [vmem:[%s1 + $0x7c] sm:$0xf]
  %v66 = vld [vmem:[%s1 + $0x80] sm:$0xf]
  %v67 = vld [vmem:[%s1 + $0x84] sm:$0xf]
  %v68 = vld [vmem:[%s1 + $0x88] sm:$0xf]
  %v69 = vld [vmem:[%s1 + $0x8c] sm:$0xf]
  %v70 = vld [vmem:[%s1 + $0x90] sm:$0xf]
  %v71 = vld [vmem:[%s1 + $0x94] sm:$0xf]
  %v72 = vld [vmem:[%s1 + $0x98] sm:$0xf]
  %v73 = vld [vmem:[%s1 + $0x9c] sm:$0xf]
  %v74 = vld [vmem:[%s1 + $0xa0] sm:$0xf]
  %v75 = vld [vmem:[%s1 + $0xa4] sm:$0xf]
  %v76 = vld [vmem:[%s1 + $0xa8] sm:$0xf]
  %v77 = vld [vmem:[%s1 + $0xac] sm:$0xf]
  %v78 = vld [vmem:[%s1 + $0xb0] sm:$0xf]
  %v79 = vld [vmem:[%s1 + $0xb4] sm:$0xf]
  %v80 = vld [vmem:[%s1 + $0xb8] sm:$0xf]
  %v81 = vld [vmem:[%s1 + $0xbc] sm:$0xf]
  %v90 = vunpack.c.l.b16 %v26
  %v91 = vunpack.c.h.b16 %v26
  %v92 = vunpack.c.l.b16 %v27
  %v93 = vunpack.c.l.b16 %v28
  %v94 = vunpack.c.h.b16 %v28
  %v95 = vunpack.c.l.b16 %v29
  %v96 = vunpack.c.l.b16 %v30
  %v97 = vunpack.c.h.b16 %v30
  %v98 = vunpack.c.l.b16 %v31
  %v99 = vunpack.c.l.b16 %v32
  %v100 = vunpack.c.h.b16 %v32
  %v101 = vunpack.c.l.b16 %v33
  %v102 = vpack.c.b16 %v93, %v90
  %v103 = vpack.c.b16 %v94, %v91
  %v104 = vpack.c.b16 %v95, %v92
  %v105 = vpack.c.b16 %v99, %v96
  %v106 = vpack.c.b16 %v100, %v97
  %v107 = vpack.c.b16 %v101, %v98
  %v162 = vunpack.c.l.b16 %v34
  %v163 = vunpack.c.l.b16 %v35
  %v164 = vunpack.c.l.b16 %v36
  %v165 = vunpack.c.l.b16 %v37
  %v166 = vunpack.c.l.b16 %v38
  %v167 = vunpack.c.l.b16 %v39
  %v168 = vunpack.c.l.b16 %v40
  %v169 = vunpack.c.l.b16 %v41
  %v170 = vunpack.c.l.b16 %v42
  %v171 = vunpack.c.l.b16 %v43
  %v172 = vunpack.c.l.b16 %v44
  %v173 = vunpack.c.l.b16 %v45
  %v174 = vunpack.c.l.b16 %v46
  %v175 = vunpack.c.l.b16 %v47
  %v176 = vunpack.c.l.b16 %v48
  %v177 = vunpack.c.l.b16 %v49
  %v178 = vunpack.c.l.b16 %v50
  %v179 = vunpack.c.l.b16 %v51
  %v180 = vunpack.c.l.b16 %v52
  %v181 = vunpack.c.l.b16 %v53
  %v182 = vunpack.c.l.b16 %v54
  %v183 = vunpack.c.l.b16 %v55
  %v184 = vunpack.c.l.b16 %v56
  %v185 = vunpack.c.l.b16 %v57
  %v186 = vunpack.c.l.b16 %v58
  %v187 = vunpack.c.l.b16 %v59
  %v188 = vunpack.c.l.b16 %v60
  %v189 = vunpack.c.l.b16 %v61
  %v190 = vunpack.c.l.b16 %v62
  %v191 = vunpack.c.l.b16 %v63
  %v192 = vunpack.c.l.b16 %v64
  %v193 = vunpack.c.l.b16 %v65
  %v194 = vunpack.c.l.b16 %v66
  %v195 = vunpack.c.l.b16 %v67
  %v196 = vunpack.c.l.b16 %v68
  %v197 = vunpack.c.l.b16 %v69
  %v198 = vunpack.c.l.b16 %v70
  %v199 = vunpack.c.l.b16 %v71
  %v200 = vunpack.c.l.b16 %v72
  %v201 = vunpack.c.l.b16 %v73
  %v202 = vunpack.c.l.b16 %v74
  %v203 = vunpack.c.l.b16 %v75
  %v204 = vunpack.c.l.b16 %v76
  %v205 = vunpack.c.l.b16 %v77
  %v206 = vunpack.c.l.b16 %v78
  %v207 = vunpack.c.l.b16 %v79
  %v208 = vunpack.c.l.b16 %v80
  %v209 = vunpack.c.l.b16 %v81
  %v210 = vpack.c.b16 %v163, %v162
  %v211 = vpack.c.b16 %v165, %v164
  %v212 = vpack.c.b16 %v167, %v166
  %v213 = vpack.c.b16 %v169, %v168
  %v214 = vpack.c.b16 %v171, %v170
  %v215 = vpack.c.b16 %v173, %v172
  %v216 = vpack.c.b16 %v175, %v174
  %v217 = vpack.c.b16 %v177, %v176
  %v218 = vpack.c.b16 %v179, %v178
  %v219 = vpack.c.b16 %v181, %v180
  %v220 = vpack.c.b16 %v183, %v182
  %v221 = vpack.c.b16 %v185, %v184
  %v222 = vpack.c.b16 %v187, %v186
  %v223 = vpack.c.b16 %v189, %v188
  %v224 = vpack.c.b16 %v191, %v190
  %v225 = vpack.c.b16 %v193, %v192
  %v226 = vpack.c.b16 %v195, %v194
  %v227 = vpack.c.b16 %v197, %v196
  %v228 = vpack.c.b16 %v199, %v198
  %v229 = vpack.c.b16 %v201, %v200
  %v230 = vpack.c.b16 %v203, %v202
  %v231 = vpack.c.b16 %v205, %v204
  %v232 = vpack.c.b16 %v207, %v206
  %v233 = vpack.c.b16 %v209, %v208
  %258 = vmatpush.bf16.msra.mxu0 %v217
  %259 = vmatpush.bf16.msra.mxu0 %v216
  %260 = vmatpush.bf16.msra.mxu0 %v215
  %261 = vmatpush.bf16.msra.mxu0 %v214
  %262 = vmatpush.bf16.msra.mxu0 %v213
  %263 = vmatpush.bf16.msra.mxu0 %v212
  %264 = vmatpush.bf16.msra.mxu0 %v211
  %265 = vmatpush.bf16.msra.mxu0 %v210
  %266 = vmatmul.bf16.gmra.mxu0 %v102
  %v267 = vpop.f32.mrf.mxu0
  %v268 = vadd.f32 0.0, %v267
  %v269 = vpop.f32.mrf.mxu0
  %v270 = vadd.f32 0.0, %v269
  %271 = vmatmul.bf16.gmra.mxu0 %v105
  %v272 = vpop.f32.mrf.mxu0
  %v273 = vadd.f32 0.0, %v272
  %v274 = vpop.f32.mrf.mxu0
  %v275 = vadd.f32 0.0, %v274
  %276 = vdwg.mxu0
  %277 = vmatpush.bf16.msra.mxu0 %v225
  %278 = vmatpush.bf16.msra.mxu0 %v224
  %279 = vmatpush.bf16.msra.mxu0 %v223
  %280 = vmatpush.bf16.msra.mxu0 %v222
  %281 = vmatpush.bf16.msra.mxu0 %v221
  %282 = vmatpush.bf16.msra.mxu0 %v220
  %283 = vmatpush.bf16.msra.mxu0 %v219
  %284 = vmatpush.bf16.msra.mxu0 %v218
  %285 = vmatmul.bf16.gmra.mxu0 %v103
  %v286 = vpop.f32.mrf.mxu0
  %v287 = vadd.f32 %v268, %v286
  %v288 = vpop.f32.mrf.mxu0
  %v289 = vadd.f32 %v270, %v288
  %290 = vmatmul.bf16.gmra.mxu0 %v106
  %v291 = vpop.f32.mrf.mxu0
  %v292 = vadd.f32 %v273, %v291
  %v293 = vpop.f32.mrf.mxu0
  %v294 = vadd.f32 %v275, %v293
  %295 = vdwg.mxu0
  %296 = vmatpush.bf16.msra.mxu0 %v233
  %297 = vmatpush.bf16.msra.mxu0 %v232
  %298 = vmatpush.bf16.msra.mxu0 %v231
  %299 = vmatpush.bf16.msra.mxu0 %v230
  %300 = vmatpush.bf16.msra.mxu0 %v229
  %301 = vmatpush.bf16.msra.mxu0 %v228
  %302 = vmatpush.bf16.msra.mxu0 %v227
  %303 = vmatpush.bf16.msra.mxu0 %v226
  %304 = vmatmul.bf16.gmra.mxu0 %v104
  %v305 = vpop.f32.mrf.mxu0
  %v306 = vadd.f32 %v287, %v305
  %v307 = vpop.f32.mrf.mxu0
  %v308 = vadd.f32 %v289, %v307
  %309 = vmatmul.bf16.gmra.mxu0 %v107
  %v310 = vpop.f32.mrf.mxu0
  %v311 = vadd.f32 %v292, %v310
  %v312 = vpop.f32.mrf.mxu0
  %v313 = vadd.f32 %v294, %v312
  %314 = vdwg.mxu0
  %v315 = vadd.f32 %v22, %v306
  %v316 = vadd.f32 %v23, %v308
  %v317 = vadd.f32 %v24, %v311
  %v318 = vadd.f32 %v25, %v313
  %319 = vst [vmem:[#allocation2] sm:$0xff] %v315
  %320 = vst [vmem:[#allocation2 + $0x8] sm:$0xff] %v316
  %321 = vst [vmem:[#allocation2 + $0x10] sm:$0xff] %v317
  %322 = vst [vmem:[#allocation2 + $0x18] sm:$0xff] %v318
  // Predicated region
  $region18: #{resnet_generator_forward.55} parent=0 // pred_check
    %p323 = pneg %p14
  $region19: #{resnet_generator_forward.55} parent=0 // pred_check_branch
    %325 = sbr.rel (%p323) target = $region21
  $region20: #{resnet_generator_forward.55} parent=0 // pred_region
    %v326 = vld [vmem:[#allocation2] sm:$0xff]
    %v327 = vld [vmem:[#allocation2 + $0x8] sm:$0xff]
    %v328 = vld [vmem:[#allocation2 + $0x10] sm:$0xff]
    %v329 = vld [vmem:[#allocation2 + $0x18] sm:$0xff]
    %v330 = vld [vmem:[%s2] sm:$0x1]
    %v332 = vperm.slane %v330, 0
    %v334 = vadd.f32 %v326, %v332
    %v335 = vadd.f32 %v327, %v332
    %v336 = vadd.f32 %v328, %v332
    %v337 = vadd.f32 %v329, %v332
    %338 = vst [vmem:[%s3] sm:$0xff] %v334
    %339 = vst [vmem:[%s3 + $0x8] sm:$0xff] %v335
    %340 = vst [vmem:[%s3 + $0x10] sm:$0xff] %v336
    %341 = vst [vmem:[%s3 + $0x18] sm:$0xff] %v337
  $region21: #{resnet_generator_forward.55} parent=0 // pred_fallthru
    _
  // Predicated region
  $region22: #{resnet_generator_forward.55} parent=0 // pred_check
    _
  $region23: #{resnet_generator_forward.55} parent=0 // pred_check_branch
    %343 = sbr.rel (0) target = $region25
  $region24: #{resnet_generator_forward.55} parent=0 // pred_region
    _
  $region25: #{resnet_generator_forward.55} parent=0 // pred_fallthru
    _
  // Predicated region
  $region26: #{resnet_generator_forward.55} parent=0 // pred_check
    _
  $region27: #{resnet_generator_forward.55} parent=0 // pred_check_branch
    %345 = sbr.rel (0) target = $region29
  $region28: #{resnet_generator_forward.55} parent=0 // pred_region
    _
  $region29: #{resnet_generator_forward.55} parent=0 // pred_fallthru
    _

// kernel: resnet_generator_forward.69
$region0: #{resnet_generator_forward.69}
  #allocation0 [shape = 'u32[]', space=smem, size = 0x4, offset = 0x4, fixed_abs, tag = 'smem constant byte address 0x4 - core index']
  #allocation1 [shape = 'u32[72,128]{1,0:T(1,128)}', space=vmem, size = 0x9000, scoped, tag = 'internal scratch']
  #allocation2 [shape = 'f32[32,128]{1,0:T(8,128)}', space=vmem, size = 0x4000, scoped, tag = 'scratch operand']
  %s0 = inlined_call_operand.vmem [shape: bf16[32,128], index: 0, kind: input, shape index: {}]
  %s1 = inlined_call_operand.vmem [shape: bf16[128,128], index: 1, kind: input, shape index: {}]
  %s2 = inlined_call_operand.vmem [shape: f32[1,128], index: 2, kind: input, shape index: {}]
  %s3 = inlined_call_operand.vmem [shape: f32[32,128], index: 3, kind: output, shape index: {}]
  %s4 = sld [smem:[#allocation0]]
  $region30: #{resnet_generator_forward.69} parent=0
    _
  %s6 = ssub.s32 1, %s4
  %s7 = scalar_select 0, %s6, %s4
  // Predicated region
  $region2: #{resnet_generator_forward.69} parent=0 // pred_check
    _
  $region3: #{resnet_generator_forward.69} parent=0 // pred_check_branch
    %9 = sbr.rel (0) target = $region5
  $region4: #{resnet_generator_forward.69} parent=0 // pred_region
    _
  $region5: #{resnet_generator_forward.69} parent=0 // pred_fallthru
    _
  // Predicated region
  $region6: #{resnet_generator_forward.69} parent=0 // pred_check
    _
  $region7: #{resnet_generator_forward.69} parent=0 // pred_check_branch
    %11 = sbr.rel (0) target = $region9
  $region8: #{resnet_generator_forward.69} parent=0 // pred_region
    _
  $region9: #{resnet_generator_forward.69} parent=0 // pred_fallthru
    _
  // Predicated region
  $region10: #{resnet_generator_forward.69} parent=0 // pred_check
    _
  $region11: #{resnet_generator_forward.69} parent=0 // pred_check_branch
    %13 = sbr.rel (0) target = $region13
  $region12: #{resnet_generator_forward.69} parent=0 // pred_region
    _
  $region13: #{resnet_generator_forward.69} parent=0 // pred_fallthru
    _
  %p14 = scmp.eq.s32.totalorder 0, 0
  // Predicated region
  $region14: #{resnet_generator_forward.69} parent=0 // pred_check
    %p15 = pneg %p14
  $region15: #{resnet_generator_forward.69} parent=0 // pred_check_branch
    %17 = sbr.rel (%p15) target = $region17
  $region16: #{resnet_generator_forward.69} parent=0 // pred_region
    %18 = vst [vmem:[#allocation2] sm:$0xff] 0.0
    %19 = vst [vmem:[#allocation2 + $0x8] sm:$0xff] 0.0
    %20 = vst [vmem:[#allocation2 + $0x10] sm:$0xff] 0.0
    %21 = vst [vmem:[#allocation2 + $0x18] sm:$0xff] 0.0
  $region17: #{resnet_generator_forward.69} parent=0 // pred_fallthru
    _
  %v22 = vld [vmem:[#allocation2] sm:$0xff]
  %v23 = vld [vmem:[#allocation2 + $0x8] sm:$0xff]
  %v24 = vld [vmem:[#allocation2 + $0x10] sm:$0xff]
  %v25 = vld [vmem:[#allocation2 + $0x18] sm:$0xff]
  %v26 = vld [vmem:[%s0] sm:$0xf]
  %v27 = vld [vmem:[%s0 + $0x4] sm:$0xf]
  %v28 = vld [vmem:[%s0 + $0x8] sm:$0xf]
  %v29 = vld [vmem:[%s0 + $0xc] sm:$0xf]
  %v30 = vld [vmem:[%s1] sm:$0xf]
  %v31 = vld [vmem:[%s1 + $0x4] sm:$0xf]
  %v32 = vld [vmem:[%s1 + $0x8] sm:$0xf]
  %v33 = vld [vmem:[%s1 + $0xc] sm:$0xf]
  %v34 = vld [vmem:[%s1 + $0x10] sm:$0xf]
  %v35 = vld [vmem:[%s1 + $0x14] sm:$0xf]
  %v36 = vld [vmem:[%s1 + $0x18] sm:$0xf]
  %v37 = vld [vmem:[%s1 + $0x1c] sm:$0xf]
  %v38 = vld [vmem:[%s1 + $0x20] sm:$0xf]
  %v39 = vld [vmem:[%s1 + $0x24] sm:$0xf]
  %v40 = vld [vmem:[%s1 + $0x28] sm:$0xf]
  %v41 = vld [vmem:[%s1 + $0x2c] sm:$0xf]
  %v42 = vld [vmem:[%s1 + $0x30] sm:$0xf]
  %v43 = vld [vmem:[%s1 + $0x34] sm:$0xf]
  %v44 = vld [vmem:[%s1 + $0x38] sm:$0xf]
  %v45 = vld [vmem:[%s1 + $0x3c] sm:$0xf]
  %v50 = vunpack.c.l.b16 %v26
  %v51 = vunpack.c.l.b16 %v27
  %v52 = vunpack.c.l.b16 %v28
  %v53 = vunpack.c.l.b16 %v29
  %v54 = vpack.c.b16 %v51, %v50
  %v55 = vpack.c.b16 %v53, %v52
  %v74 = vunpack.c.l.b16 %v30
  %v75 = vunpack.c.l.b16 %v31
  %v76 = vunpack.c.l.b16 %v32
  %v77 = vunpack.c.l.b16 %v33
  %v78 = vunpack.c.l.b16 %v34
  %v79 = vunpack.c.l.b16 %v35
  %v80 = vunpack.c.l.b16 %v36
  %v81 = vunpack.c.l.b16 %v37
  %v82 = vunpack.c.l.b16 %v38
  %v83 = vunpack.c.l.b16 %v39
  %v84 = vunpack.c.l.b16 %v40
  %v85 = vunpack.c.l.b16 %v41
  %v86 = vunpack.c.l.b16 %v42
  %v87 = vunpack.c.l.b16 %v43
  %v88 = vunpack.c.l.b16 %v44
  %v89 = vunpack.c.l.b16 %v45
  %v90 = vpack.c.b16 %v75, %v74
  %v91 = vpack.c.b16 %v77, %v76
  %v92 = vpack.c.b16 %v79, %v78
  %v93 = vpack.c.b16 %v81, %v80
  %v94 = vpack.c.b16 %v83, %v82
  %v95 = vpack.c.b16 %v85, %v84
  %v96 = vpack.c.b16 %v87, %v86
  %v97 = vpack.c.b16 %v89, %v88
  %106 = vmatpush.bf16.msra.mxu0 %v97
  %107 = vmatpush.bf16.msra.mxu0 %v96
  %108 = vmatpush.bf16.msra.mxu0 %v95
  %109 = vmatpush.bf16.msra.mxu0 %v94
  %110 = vmatpush.bf16.msra.mxu0 %v93
  %111 = vmatpush.bf16.msra.mxu0 %v92
  %112 = vmatpush.bf16.msra.mxu0 %v91
  %113 = vmatpush.bf16.msra.mxu0 %v90
  %114 = vmatmul.bf16.gmra.mxu0 %v54
  %v115 = vpop.f32.mrf.mxu0
  %v116 = vadd.f32 0.0, %v115
  %v117 = vpop.f32.mrf.mxu0
  %v118 = vadd.f32 0.0, %v117
  %119 = vmatmul.bf16.gmra.mxu0 %v55
  %v120 = vpop.f32.mrf.mxu0
  %v121 = vadd.f32 0.0, %v120
  %v122 = vpop.f32.mrf.mxu0
  %v123 = vadd.f32 0.0, %v122
  %124 = vdwg.mxu0
  %v125 = vadd.f32 %v22, %v116
  %v126 = vadd.f32 %v23, %v118
  %v127 = vadd.f32 %v24, %v121
  %v128 = vadd.f32 %v25, %v123
  %129 = vst [vmem:[#allocation2] sm:$0xff] %v125
  %130 = vst [vmem:[#allocation2 + $0x8] sm:$0xff] %v126
  %131 = vst [vmem:[#allocation2 + $0x10] sm:$0xff] %v127
  %132 = vst [vmem:[#allocation2 + $0x18] sm:$0xff] %v128
  // Predicated region
  $region18: #{resnet_generator_forward.69} parent=0 // pred_check
    %p133 = pneg %p14
  $region19: #{resnet_generator_forward.69} parent=0 // pred_check_branch
    %135 = sbr.rel (%p133) target = $region21
  $region20: #{resnet_generator_forward.69} parent=0 // pred_region
    %v136 = vld [vmem:[#allocation2] sm:$0xff]
    %v137 = vld [vmem:[#allocation2 + $0x8] sm:$0xff]
    %v138 = vld [vmem:[#allocation2 + $0x10] sm:$0xff]
    %v139 = vld [vmem:[#allocation2 + $0x18] sm:$0xff]
    %v140 = vld [vmem:[%s2] sm:$0x1]
    %v142 = vperm.slane %v140, 0
    %v144 = vadd.f32 %v136, %v142
    %v145 = vadd.f32 %v137, %v142
    %v146 = vadd.f32 %v138, %v142
    %v147 = vadd.f32 %v139, %v142
    %148 = vst [vmem:[%s3] sm:$0xff] %v144
    %149 = vst [vmem:[%s3 + $0x8] sm:$0xff] %v145
    %150 = vst [vmem:[%s3 + $0x10] sm:$0xff] %v146
    %151 = vst [vmem:[%s3 + $0x18] sm:$0xff] %v147
  $region21: #{resnet_generator_forward.69} parent=0 // pred_fallthru
    _
  // Predicated region
  $region22: #{resnet_generator_forward.69} parent=0 // pred_check
    _
  $region23: #{resnet_generator_forward.69} parent=0 // pred_check_branch
    %153 = sbr.rel (0) target = $region25
  $region24: #{resnet_generator_forward.69} parent=0 // pred_region
    _
  $region25: #{resnet_generator_forward.69} parent=0 // pred_fallthru
    _
  // Predicated region
  $region26: #{resnet_generator_forward.69} parent=0 // pred_check
    _
  $region27: #{resnet_generator_forward.69} parent=0 // pred_check_branch
    %155 = sbr.rel (0) target = $region29
  $region28: #{resnet_generator_forward.69} parent=0 // pred_region
    _
  $region29: #{resnet_generator_forward.69} parent=0 // pred_fallthru
    _

// kernel: resnet_generator_forward.91
$region0: #{resnet_generator_forward.91}
  #allocation0 [shape = 'u32[]', space=smem, size = 0x4, offset = 0x4, fixed_abs, tag = 'smem constant byte address 0x4 - core index']
  #allocation1 [shape = 'u32[72,128]{1,0:T(1,128)}', space=vmem, size = 0x9000, scoped, tag = 'internal scratch']
  #allocation2 [shape = 'f32[256,128]{1,0:T(8,128)}', space=vmem, size = 0x20000, scoped, tag = 'scratch operand']
  %s0 = inlined_call_operand.vmem [shape: bf16[512,512], index: 0, kind: input, shape index: {}]
  %s1 = inlined_call_operand.vmem [shape: bf16[512,128], index: 1, kind: input, shape index: {}]
  %s2 = inlined_call_operand.vmem [shape: f32[1,128], index: 2, kind: input, shape index: {}]
  %s3 = inlined_call_operand.vmem [shape: f32[512,128], index: 3, kind: output, shape index: {}]
  %s4 = sld [smem:[#allocation0]]
  $region53: #{resnet_generator_forward.91} parent=0
    _
  %s6 = ssub.s32 1, %s4
  %s7 = scalar_select 0, %s6, %s4
  loop: start=0, step=1, limit=4
  $region2: #{resnet_generator_forward.91} parent=0 // loop_pre_header
    _
  $region3: #{resnet_generator_forward.91} parent=0 // loop_header
    %s9 = sphi 0, %s13
    %p10 = scmp.ge.s32.totalorder %s9, 4
    %s16 = sphi 0, %s35
    %s17 = sphi 0, %s31
    %s18 = sphi 0, %s27
    %s19 = sphi 0, %s16
    %s20 = sphi 0, %s17
    %s21 = sphi 0, %s18
    %s22 = sphi 0, %s19
    %s23 = sphi 0, %s20
    %s24 = sphi 0, %s21
    %s40 = sphi 0, %s42
    %s43 = sphi 0, %s40
    %s44 = sphi 0, %s43
    %s60 = sphi 0, %s44
    %s68 = sphi 0, %s70
    %s71 = sphi 0, %s68
    %s72 = sphi 0, %s71
    %s88 = sphi 0, %s72
    %s94 = sphi 0, %s96
    %s97 = sphi 0, %s94
    %s98 = sphi 0, %s97
    %s114 = sphi 0, %s98
    %s122 = sphi 0, %s124
    %s125 = sphi 0, %s122
    %s126 = sphi 0, %s125
    %s142 = sphi 0, %s126
  $region4: #{resnet_generator_forward.91} parent=0 // loop_header_branch
    %12 = sbr.rel (%p10) target = $region8
  $region5: #{resnet_generator_forward.91} parent=0 // loop_body
    %s14 = ssub.s32 %s9, 1
    %s15 = ssub.s32 %s9, 2
    %s25 = sadd.s32 1, %s18
    %p26 = scmp.ge.s32.totalorder %s25, 1
    %s27 = scalar_select %p26, 0, %s25
    %s28 = sadd.s32 1, %s17
    %s29 = scalar_select %p26, %s28, %s17
    %p30 = scmp.ge.s32.totalorder %s29, 1
    %s31 = scalar_select %p30, 0, %s29
    %s32 = sadd.s32 1, %s16
    %s33 = scalar_select %p30, %s32, %s16
    %p34 = scmp.ge.s32.totalorder %s33, 2
    %s35 = scalar_select %p34, 0, %s33
    %s36 = ssub.s32 %s16, %s35
    %s37 = ssub.s32 %s18, %s27
    %s38 = sor.u32 %s36, %s37
    %p39 = scmp.eq.s32.totalorder %s38, 0
    %s41 = sadd.s32 %s40, 1
    %s42 = scalar_select %p39, %s40, %s41
    %p45 = pneg %p39
    %p46 = scmp.eq.s32.totalorder %s9, 1
    %p47 = por %p45, %p46
    %p48 = scmp.ne.s32.totalorder %s40, %s43
    %p49 = scmp.eq.s32.totalorder %s9, 0
    %p50 = por %p48, %p49
    %p51 = scmp.ne.s32.totalorder %s40, %s43
    %p52 = scmp.eq.s32.totalorder %s14, 1
    %p53 = por %p51, %p52
    %p54 = scmp.ne.s32.totalorder %s43, %s44
    %p55 = scmp.eq.s32.totalorder %s14, 0
    %p56 = por %p54, %p55
    %p57 = scmp.ne.s32.totalorder %s43, %s44
    %p58 = scmp.eq.s32.totalorder %s15, 1
    %p59 = por %p57, %p58
    %p61 = scmp.ne.s32.totalorder %s44, %s60
    %p62 = scmp.eq.s32.totalorder %s15, 0
    %p63 = por %p61, %p62
    %s64 = ssub.s32 %s18, %s27
    %s65 = ssub.s32 %s17, %s31
    %s66 = sor.u32 %s64, %s65
    %p67 = scmp.eq.s32.totalorder %s66, 0
    %s69 = sadd.s32 %s68, 1
    %s70 = scalar_select %p67, %s68, %s69
    %p73 = pneg %p67
    %p74 = scmp.eq.s32.totalorder %s9, 1
    %p75 = por %p73, %p74
    %p76 = scmp.ne.s32.totalorder %s68, %s71
    %p77 = scmp.eq.s32.totalorder %s9, 0
    %p78 = por %p76, %p77
    %p79 = scmp.ne.s32.totalorder %s68, %s71
    %p80 = scmp.eq.s32.totalorder %s14, 1
    %p81 = por %p79, %p80
    %p82 = scmp.ne.s32.totalorder %s71, %s72
    %p83 = scmp.eq.s32.totalorder %s14, 0
    %p84 = por %p82, %p83
    %p85 = scmp.ne.s32.totalorder %s71, %s72
    %p86 = scmp.eq.s32.totalorder %s15, 1
    %p87 = por %p85, %p86
    %p89 = scmp.ne.s32.totalorder %s72, %s88
    %p90 = scmp.eq.s32.totalorder %s15, 0
    %p91 = por %p89, %p90
    %s92 = ssub.s32 %s17, %s31
    %p93 = scmp.eq.s32.totalorder %s92, 0
    %s95 = sadd.s32 %s94, 1
    %s96 = scalar_select %p93, %s94, %s95
    %p99 = pneg %p93
    %p100 = scmp.eq.s32.totalorder %s9, 1
    %p101 = por %p99, %p100
    %p102 = scmp.ne.s32.totalorder %s94, %s97
    %p103 = scmp.eq.s32.totalorder %s9, 0
    %p104 = por %p102, %p103
    %p105 = scmp.ne.s32.totalorder %s94, %s97
    %p106 = scmp.eq.s32.totalorder %s14, 1
    %p107 = por %p105, %p106
    %p108 = scmp.ne.s32.totalorder %s97, %s98
    %p109 = scmp.eq.s32.totalorder %s14, 0
    %p110 = por %p108, %p109
    %p111 = scmp.ne.s32.totalorder %s97, %s98
    %p112 = scmp.eq.s32.totalorder %s15, 1
    %p113 = por %p111, %p112
    %p115 = scmp.ne.s32.totalorder %s98, %s114
    %p116 = scmp.eq.s32.totalorder %s15, 0
    %p117 = por %p115, %p116
    %s118 = ssub.s32 %s16, %s35
    %s119 = ssub.s32 %s17, %s31
    %s120 = sor.u32 %s118, %s119
    %p121 = scmp.eq.s32.totalorder %s120, 0
    %s123 = sadd.s32 %s122, 1
    %s124 = scalar_select %p121, %s122, %s123
    %p127 = pneg %p121
    %p128 = scmp.eq.s32.totalorder %s9, 1
    %p129 = por %p127, %p128
    %p130 = scmp.ne.s32.totalorder %s122, %s125
    %p131 = scmp.eq.s32.totalorder %s9, 0
    %p132 = por %p130, %p131
    %p133 = scmp.ne.s32.totalorder %s122, %s125
    %p134 = scmp.eq.s32.totalorder %s14, 1
    %p135 = por %p133, %p134
    %p136 = scmp.ne.s32.totalorder %s125, %s126
    %p137 = scmp.eq.s32.totalorder %s14, 0
    %p138 = por %p136, %p137
    %p139 = scmp.ne.s32.totalorder %s125, %s126
    %p140 = scmp.eq.s32.totalorder %s15, 1
    %p141 = por %p139, %p140
    %p143 = scmp.ne.s32.totalorder %s126, %s142
    %p144 = scmp.eq.s32.totalorder %s15, 0
    %p145 = por %p143, %p144
    %p146 = scmp.le.s32.totalorder 1, %s9
    %p147 = scmp.lt.s32.totalorder %s9, 3
    %p148 = pnand %p146, %p147
    %p149 = pneg %p148
    // Predicated region
    $region9: #{resnet_generator_forward.91} parent=5 // pred_check
      _
    $region10: #{resnet_generator_forward.91} parent=5 // pred_check_branch
      %151 = sbr.rel (%p148) target = $region12
    $region11: #{resnet_generator_forward.91} parent=5 // pred_region
      %s152 = ssub.s32 %s9, 1
      // Predicated region
      $region13: #{resnet_generator_forward.91} parent=11 // pred_check
        %p153 = pneg %p84
      $region14: #{resnet_generator_forward.91} parent=11 // pred_check_branch
        %155 = sbr.rel (%p153) target = $region16
      $region15: #{resnet_generator_forward.91} parent=11 // pred_region
        %s156 = smul.u32 64, %s21
        %p157 = scmp.lt.s32.totalorder %s156, 63
        %s158 = scalar_select %p157, %s156, 63
        %p159 = scmp.lt.s32.totalorder %s20, 0
        %s160 = scalar_select %p159, %s20, 0
        %s161 = sadd.s32 %s160, %s158
        %s162 = smul.addr %s161, 4
        %s163 = scalar_lea.vmem %s1, %s162
        %s164 = smul.u32 64, %s21
      $region16: #{resnet_generator_forward.91} parent=11 // pred_fallthru
        _
      // Predicated region
      $region17: #{resnet_generator_forward.91} parent=11 // pred_check
        %p165 = pneg %p110
      $region18: #{resnet_generator_forward.91} parent=11 // pred_check_branch
        %167 = sbr.rel (%p165) target = $region20
      $region19: #{resnet_generator_forward.91} parent=11 // pred_region
        %p168 = scmp.lt.s32.totalorder %s20, 0
        %s169 = scalar_select %p168, %s20, 0
        %s170 = scalar_lea.vmem %s2, %s169
      $region20: #{resnet_generator_forward.91} parent=11 // pred_fallthru
        _
    $region12: #{resnet_generator_forward.91} parent=5 // pred_fallthru
      _
    %p171 = scmp.lt.s32.totalorder %s9, 2
    // Predicated region
    $region21: #{resnet_generator_forward.91} parent=5 // pred_check
      %p172 = pneg %p171
    $region22: #{resnet_generator_forward.91} parent=5 // pred_check_branch
      %174 = sbr.rel (%p172) target = $region24
    $region23: #{resnet_generator_forward.91} parent=5 // pred_region
      // Predicated region
      $region25: #{resnet_generator_forward.91} parent=23 // pred_check
        %p175 = pneg %p50
      $region26: #{resnet_generator_forward.91} parent=23 // pred_check_branch
        %177 = sbr.rel (%p175) target = $region28
      $region27: #{resnet_generator_forward.91} parent=23 // pred_region
        %s178 = smul.u32 32, %s16
        %s179 = smul.u32 4, %s18
        %p180 = scmp.lt.s32.totalorder %s178, 63
        %s181 = scalar_select %p180, %s178, 63
        %p182 = scmp.lt.s32.totalorder %s179, 3
        %s183 = scalar_select %p182, %s179, 3
        %s184 = smul.addr %s181, 4
        %s185 = sadd.s32 %s183, %s184
        %s186 = smul.addr %s185, 4
        %s187 = scalar_lea.vmem %s0, %s186
        %s188 = smul.u32 32, %s16
        %s189 = smul.u32 4, %s18
      $region28: #{resnet_generator_forward.91} parent=23 // pred_fallthru
        _
    $region24: #{resnet_generator_forward.91} parent=5 // pred_fallthru
      _
    %p190 = scmp.le.s32.totalorder 1, %s9
    %p191 = scmp.lt.s32.totalorder %s9, 3
    %p192 = pnand %p190, %p191
    %p193 = pneg %p192
    // Predicated region
    $region29: #{resnet_generator_forward.91} parent=5 // pred_check
      _
    $region30: #{resnet_generator_forward.91} parent=5 // pred_check_branch
      %195 = sbr.rel (%p192) target = $region32
    $region31: #{resnet_generator_forward.91} parent=5 // pred_region
      %s196 = ssub.s32 %s9, 1
      %s197 = smul.u32 32, %s19
      %s198 = smul.u32 4, %s21
      %p199 = scmp.lt.s32.totalorder %s197, 63
      %s200 = scalar_select %p199, %s197, 63
      %p201 = scmp.lt.s32.totalorder %s198, 3
      %s202 = scalar_select %p201, %s198, 3
      %s203 = smul.addr %s200, 4
      %s204 = sadd.s32 %s202, %s203
      %s205 = smul.addr %s204, 4
      %s206 = scalar_lea.vmem %s0, %s205
      %p207 = pneg %p56
      %p208 = pneg %p53
      %s209 = smul.u32 64, %s21
      %p210 = scmp.lt.s32.totalorder %s209, 63
      %s211 = scalar_select %p210, %s209, 63
      %p212 = scmp.lt.s32.totalorder %s20, 0
      %s213 = scalar_select %p212, %s20, 0
      %s214 = sadd.s32 %s213, %s211
      %s215 = smul.addr %s214, 4
      %s216 = scalar_lea.vmem %s1, %s215
      %p217 = pneg %p84
      %p218 = pneg %p81
      %p219 = scmp.lt.s32.totalorder %s20, 0
      %s220 = scalar_select %p219, %s20, 0
      %s221 = scalar_lea.vmem %s2, %s220
      %p222 = pneg %p110
      %p223 = pneg %p107
      %p224 = pneg %p138
      %p225 = pneg %p135
      %s226 = smul.u32 32, %s19
      %p227 = scmp.lt.s32.totalorder %s226, 63
      %s228 = scalar_select %p227, %s226, 63
      %p229 = scmp.lt.s32.totalorder %s20, 0
      %s230 = scalar_select %p229, %s20, 0
      %s231 = sadd.s32 %s230, %s228
      %s232 = smul.addr %s231, 8
      %s233 = scalar_lea.vmem %s3, %s232
      %s234 = smul.u32 32, %s19
      %s235 = smul.u32 4, %s21
      %p236 = scmp.lt.s32.totalorder %s234, 63
      %s237 = scalar_select %p236, %s234, 63
      %p238 = scmp.lt.s32.totalorder %s235, 3
      %s239 = scalar_select %p238, %s235, 3
      %s240 = smul.addr %s237, 4
      %s241 = sadd.s32 %s239, %s240
      %s242 = smul.addr %s241, 4
      %s243 = scalar_lea.vmem %s0, %s242
      %s244 = smul.u32 32, %s19
      %s245 = smul.u32 4, %s21
      %s246 = smul.u32 64, %s21
      %p247 = scmp.lt.s32.totalorder %s246, 63
      %s248 = scalar_select %p247, %s246, 63
      %p249 = scmp.lt.s32.totalorder %s20, 0
      %s250 = scalar_select %p249, %s20, 0
      %s251 = sadd.s32 %s250, %s248
      %s252 = smul.addr %s251, 4
      %s253 = scalar_lea.vmem %s1, %s252
      %s254 = smul.u32 64, %s21
      %p255 = scmp.lt.s32.totalorder %s20, 0
      %s256 = scalar_select %p255, %s20, 0
      %s257 = scalar_lea.vmem %s2, %s256
      %s258 = smul.u32 32, %s19
      %p259 = scmp.lt.s32.totalorder %s258, 63
      %s260 = scalar_select %p259, %s258, 63
      %p261 = scmp.lt.s32.totalorder %s20, 0
      %s262 = scalar_select %p261, %s20, 0
      %s263 = sadd.s32 %s262, %s260
      %s264 = smul.addr %s263, 8
      %s265 = scalar_lea.vmem %s3, %s264
      %s266 = smul.u32 32, %s19
      %p267 = scmp.eq.s32.totalorder %s21, 0
      // Predicated region
      $region33: #{resnet_generator_forward.91} parent=31 // pred_check
        %p268 = pneg %p267
      $region34: #{resnet_generator_forward.91} parent=31 // pred_check_branch
        %270 = sbr.rel (%p268) target = $region36
      $region35: #{resnet_generator_forward.91} parent=31 // pred_region
        %271 = vst [vmem:[#allocation2] sm:$0xff] 0.0
        %272 = vst [vmem:[#allocation2 + $0x8] sm:$0xff] 0.0
        %273 = vst [vmem:[#allocation2 + $0x10] sm:$0xff] 0.0
        %274 = vst [vmem:[#allocation2 + $0x18] sm:$0xff] 0.0
        %275 = vst [vmem:[#allocation2 + $0x20] sm:$0xff] 0.0
        %276 = vst [vmem:[#allocation2 + $0x28] sm:$0xff] 0.0
        %277 = vst [vmem:[#allocation2 + $0x30] sm:$0xff] 0.0
        %278 = vst [vmem:[#allocation2 + $0x38] sm:$0xff] 0.0
        %279 = vst [vmem:[#allocation2 + $0x40] sm:$0xff] 0.0
        %280 = vst [vmem:[#allocation2 + $0x48] sm:$0xff] 0.0
        %281 = vst [vmem:[#allocation2 + $0x50] sm:$0xff] 0.0
        %282 = vst [vmem:[#allocation2 + $0x58] sm:$0xff] 0.0
        %283 = vst [vmem:[#allocation2 + $0x60] sm:$0xff] 0.0
        %284 = vst [vmem:[#allocation2 + $0x68] sm:$0xff] 0.0
        %285 = vst [vmem:[#allocation2 + $0x70] sm:$0xff] 0.0
        %286 = vst [vmem:[#allocation2 + $0x78] sm:$0xff] 0.0
        %287 = vst [vmem:[#allocation2 + $0x80] sm:$0xff] 0.0
        %288 = vst [vmem:[#allocation2 + $0x88] sm:$0xff] 0.0
        %289 = vst [vmem:[#allocation2 + $0x90] sm:$0xff] 0.0
        %290 = vst [vmem:[#allocation2 + $0x98] sm:$0xff] 0.0
        %291 = vst [vmem:[#allocation2 + $0xa0] sm:$0xff] 0.0
        %292 = vst [vmem:[#allocation2 + $0xa8] sm:$0xff] 0.0
        %293 = vst [vmem:[#allocation2 + $0xb0] sm:$0xff] 0.0
        %294 = vst [vmem:[#allocation2 + $0xb8] sm:$0xff] 0.0
        %295 = vst [vmem:[#allocation2 + $0xc0] sm:$0xff] 0.0
        %296 = vst [vmem:[#allocation2 + $0xc8] sm:$0xff] 0.0
        %297 = vst [vmem:[#allocation2 + $0xd0] sm:$0xff] 0.0
        %298 = vst [vmem:[#allocation2 + $0xd8] sm:$0xff] 0.0
        %299 = vst [vmem:[#allocation2 + $0xe0] sm:$0xff] 0.0
        %300 = vst [vmem:[#allocation2 + $0xe8] sm:$0xff] 0.0
        %301 = vst [vmem:[#allocation2 + $0xf0] sm:$0xff] 0.0
        %302 = vst [vmem:[#allocation2 + $0xf8] sm:$0xff] 0.0
      $region36: #{resnet_generator_forward.91} parent=31 // pred_fallthru
        _
      %v303 = vld [vmem:[#allocation2] sm:$0xff]
      %v304 = vld [vmem:[#allocation2 + $0x8] sm:$0xff]
      %v305 = vld [vmem:[#allocation2 + $0x10] sm:$0xff]
      %v306 = vld [vmem:[#allocation2 + $0x18] sm:$0xff]
      %v307 = vld [vmem:[#allocation2 + $0x20] sm:$0xff]
      %v308 = vld [vmem:[#allocation2 + $0x28] sm:$0xff]
      %v309 = vld [vmem:[#allocation2 + $0x30] sm:$0xff]
      %v310 = vld [vmem:[#allocation2 + $0x38] sm:$0xff]
      %v311 = vld [vmem:[#allocation2 + $0x40] sm:$0xff]
      %v312 = vld [vmem:[#allocation2 + $0x48] sm:$0xff]
      %v313 = vld [vmem:[#allocation2 + $0x50] sm:$0xff]
      %v314 = vld [vmem:[#allocation2 + $0x58] sm:$0xff]
      %v315 = vld [vmem:[#allocation2 + $0x60] sm:$0xff]
      %v316 = vld [vmem:[#allocation2 + $0x68] sm:$0xff]
      %v317 = vld [vmem:[#allocation2 + $0x70] sm:$0xff]
      %v318 = vld [vmem:[#allocation2 + $0x78] sm:$0xff]
      %v319 = vld [vmem:[#allocation2 + $0x80] sm:$0xff]
      %v320 = vld [vmem:[#allocation2 + $0x88] sm:$0xff]
      %v321 = vld [vmem:[#allocation2 + $0x90] sm:$0xff]
      %v322 = vld [vmem:[#allocation2 + $0x98] sm:$0xff]
      %v323 = vld [vmem:[#allocation2 + $0xa0] sm:$0xff]
      %v324 = vld [vmem:[#allocation2 + $0xa8] sm:$0xff]
      %v325 = vld [vmem:[#allocation2 + $0xb0] sm:$0xff]
      %v326 = vld [vmem:[#allocation2 + $0xb8] sm:$0xff]
      %v327 = vld [vmem:[#allocation2 + $0xc0] sm:$0xff]
      %v328 = vld [vmem:[#allocation2 + $0xc8] sm:$0xff]
      %v329 = vld [vmem:[#allocation2 + $0xd0] sm:$0xff]
      %v330 = vld [vmem:[#allocation2 + $0xd8] sm:$0xff]
      %v331 = vld [vmem:[#allocation2 + $0xe0] sm:$0xff]
      %v332 = vld [vmem:[#allocation2 + $0xe8] sm:$0xff]
      %v333 = vld [vmem:[#allocation2 + $0xf0] sm:$0xff]
      %v334 = vld [vmem:[#allocation2 + $0xf8] sm:$0xff]
      %v335 = vld [vmem:[%s243] sm:$0xff]
      %v336 = vld [vmem:[%s243 + $0x8] sm:$0xff]
      %v337 = vld [vmem:[%s243 + $0x10] sm:$0xff]
      %v338 = vld [vmem:[%s243 + $0x18] sm:$0xff]
      %v339 = vld [vmem:[%s243 + $0x20] sm:$0xff]
      %v340 = vld [vmem:[%s243 + $0x28] sm:$0xff]
      %v341 = vld [vmem:[%s243 + $0x30] sm:$0xff]
      %v342 = vld [vmem:[%s243 + $0x38] sm:$0xff]
      %v343 = vld [vmem:[%s243 + $0x40] sm:$0xff]
      %v344 = vld [vmem:[%s243 + $0x48] sm:$0xff]
      %v345 = vld [vmem:[%s243 + $0x50] sm:$0xff]
      %v346 = vld [vmem:[%s243 + $0x58] sm:$0xff]
      %v347 = vld [vmem:[%s243 + $0x60] sm:$0xff]
      %v348 = vld [vmem:[%s243 + $0x68] sm:$0xff]
      %v349 = vld [vmem:[%s243 + $0x70] sm:$0xff]
      %v350 = vld [vmem:[%s243 + $0x78] sm:$0xff]
      %v351 = vld [vmem:[%s243 + $0x80] sm:$0xff]
      %v352 = vld [vmem:[%s243 + $0x88] sm:$0xff]
      %v353 = vld [vmem:[%s243 + $0x90] sm:$0xff]
      %v354 = vld [vmem:[%s243 + $0x98] sm:$0xff]
      %v355 = vld [vmem:[%s243 + $0xa0] sm:$0xff]
      %v356 = vld [vmem:[%s243 + $0xa8] sm:$0xff]
      %v357 = vld [vmem:[%s243 + $0xb0] sm:$0xff]
      %v358 = vld [vmem:[%s243 + $0xb8] sm:$0xff]
      %v359 = vld [vmem:[%s243 + $0xc0] sm:$0xff]
      %v360 = vld [vmem:[%s243 + $0xc8] sm:$0xff]
      %v361 = vld [vmem:[%s243 + $0xd0] sm:$0xff]
      %v362 = vld [vmem:[%s243 + $0xd8] sm:$0xff]
      %v363 = vld [vmem:[%s243 + $0xe0] sm:$0xff]
      %v364 = vld [vmem:[%s243 + $0xe8] sm:$0xff]
      %v365 = vld [vmem:[%s243 + $0xf0] sm:$0xff]
      %v366 = vld [vmem:[%s243 + $0xf8] sm:$0xff]
      %v367 = vld [vmem:[%s243 + $0x100] sm:$0xff]
      %v368 = vld [vmem:[%s243 + $0x108] sm:$0xff]
      %v369 = vld [vmem:[%s243 + $0x110] sm:$0xff]
      %v370 = vld [vmem:[%s243 + $0x118] sm:$0xff]
      %v371 = vld [vmem:[%s243 + $0x120] sm:$0xff]
      %v372 = vld [vmem:[%s243 + $0x128] sm:$0xff]
      %v373 = vld [vmem:[%s243 + $0x130] sm:$0xff]
      %v374 = vld [vmem:[%s243 + $0x138] sm:$0xff]
      %v375 = vld [vmem:[%s243 + $0x140] sm:$0xff]
      %v376 = vld [vmem:[%s243 + $0x148] sm:$0xff]
      %v377 = vld [vmem:[%s243 + $0x150] sm:$0xff]
      %v378 = vld [vmem:[%s243 + $0x158] sm:$0xff]
      %v379 = vld [vmem:[%s243 + $0x160] sm:$0xff]
      %v380 = vld [vmem:[%s243 + $0x168] sm:$0xff]
      %v381 = vld [vmem:[%s243 + $0x170] sm:$0xff]
      %v382 = vld [vmem:[%s243 + $0x178] sm:$0xff]
      %v383 = vld [vmem:[%s243 + $0x180] sm:$0xff]
      %v384 = vld [vmem:[%s243 + $0x188] sm:$0xff]
      %v385 = vld [vmem:[%s243 + $0x190] sm:$0xff]
      %v386 = vld [vmem:[%s243 + $0x198] sm:$0xff]
      %v387 = vld [vmem:[%s243 + $0x1a0] sm:$0xff]
      %v388 = vld [vmem:[%s243 + $0x1a8] sm:$0xff]
      %v389 = vld [vmem:[%s243 + $0x1b0] sm:$0xff]
      %v390 = vld [vmem:[%s243 + $0x1b8] sm:$0xff]
      %v391 = vld [vmem:[%s243 + $0x1c0] sm:$0xff]
      %v392 = vld [vmem:[%s243 + $0x1c8] sm:$0xff]
      %v393 = vld [vmem:[%s243 + $0x1d0] sm:$0xff]
      %v394 = vld [vmem:[%s243 + $0x1d8] sm:$0xff]
      %v395 = vld [vmem:[%s243 + $0x1e0] sm:$0xff]
      %v396 = vld [vmem:[%s243 + $0x1e8] sm:$0xff]
      %v397 = vld [vmem:[%s243 + $0x1f0] sm:$0xff]
      %v398 = vld [vmem:[%s243 + $0x1f8] sm:$0xff]
      %v399 = vld [vmem:[%s253] sm:$0xf]
      %v400 = vld [vmem:[%s253 + $0x4] sm:$0xf]
      %v401 = vld [vmem:[%s253 + $0x8] sm:$0xf]
      %v402 = vld [vmem:[%s253 + $0xc] sm:$0xf]
      %v403 = vld [vmem:[%s253 + $0x10] sm:$0xf]
      %v404 = vld [vmem:[%s253 + $0x14] sm:$0xf]
      %v405 = vld [vmem:[%s253 + $0x18] sm:$0xf]
      %v406 = vld [vmem:[%s253 + $0x1c] sm:$0xf]
      %v407 = vld [vmem:[%s253 + $0x20] sm:$0xf]
      %v408 = vld [vmem:[%s253 + $0x24] sm:$0xf]
      %v409 = vld [vmem:[%s253 + $0x28] sm:$0xf]
      %v410 = vld [vmem:[%s253 + $0x2c] sm:$0xf]
      %v411 = vld [vmem:[%s253 + $0x30] sm:$0xf]
      %v412 = vld [vmem:[%s253 + $0x34] sm:$0xf]
      %v413 = vld [vmem:[%s253 + $0x38] sm:$0xf]
      %v414 = vld [vmem:[%s253 + $0x3c] sm:$0xf]
      %v415 = vld [vmem:[%s253 + $0x40] sm:$0xf]
      %v416 = vld [vmem:[%s253 + $0x44] sm:$0xf]
      %v417 = vld [vmem:[%s253 + $0x48] sm:$0xf]
      %v418 = vld [vmem:[%s253 + $0x4c] sm:$0xf]
      %v419 = vld [vmem:[%s253 + $0x50] sm:$0xf]
      %v420 = vld [vmem:[%s253 + $0x54] sm:$0xf]
      %v421 = vld [vmem:[%s253 + $0x58] sm:$0xf]
      %v422 = vld [vmem:[%s253 + $0x5c] sm:$0xf]
      %v423 = vld [vmem:[%s253 + $0x60] sm:$0xf]
      %v424 = vld [vmem:[%s253 + $0x64] sm:$0xf]
      %v425 = vld [vmem:[%s253 + $0x68] sm:$0xf]
      %v426 = vld [vmem:[%s253 + $0x6c] sm:$0xf]
      %v427 = vld [vmem:[%s253 + $0x70] sm:$0xf]
      %v428 = vld [vmem:[%s253 + $0x74] sm:$0xf]
      %v429 = vld [vmem:[%s253 + $0x78] sm:$0xf]
      %v430 = vld [vmem:[%s253 + $0x7c] sm:$0xf]
      %v431 = vld [vmem:[%s253 + $0x80] sm:$0xf]
      %v432 = vld [vmem:[%s253 + $0x84] sm:$0xf]
      %v433 = vld [vmem:[%s253 + $0x88] sm:$0xf]
      %v434 = vld [vmem:[%s253 + $0x8c] sm:$0xf]
      %v435 = vld [vmem:[%s253 + $0x90] sm:$0xf]
      %v436 = vld [vmem:[%s253 + $0x94] sm:$0xf]
      %v437 = vld [vmem:[%s253 + $0x98] sm:$0xf]
      %v438 = vld [vmem:[%s253 + $0x9c] sm:$0xf]
      %v439 = vld [vmem:[%s253 + $0xa0] sm:$0xf]
      %v440 = vld [vmem:[%s253 + $0xa4] sm:$0xf]
      %v441 = vld [vmem:[%s253 + $0xa8] sm:$0xf]
      %v442 = vld [vmem:[%s253 + $0xac] sm:$0xf]
      %v443 = vld [vmem:[%s253 + $0xb0] sm:$0xf]
      %v444 = vld [vmem:[%s253 + $0xb4] sm:$0xf]
      %v445 = vld [vmem:[%s253 + $0xb8] sm:$0xf]
      %v446 = vld [vmem:[%s253 + $0xbc] sm:$0xf]
      %v447 = vld [vmem:[%s253 + $0xc0] sm:$0xf]
      %v448 = vld [vmem:[%s253 + $0xc4] sm:$0xf]
      %v449 = vld [vmem:[%s253 + $0xc8] sm:$0xf]
      %v450 = vld [vmem:[%s253 + $0xcc] sm:$0xf]
      %v451 = vld [vmem:[%s253 + $0xd0] sm:$0xf]
      %v452 = vld [vmem:[%s253 + $0xd4] sm:$0xf]
      %v453 = vld [vmem:[%s253 + $0xd8] sm:$0xf]
      %v454 = vld [vmem:[%s253 + $0xdc] sm:$0xf]
      %v455 = vld [vmem:[%s253 + $0xe0] sm:$0xf]
      %v456 = vld [vmem:[%s253 + $0xe4] sm:$0xf]
      %v457 = vld [vmem:[%s253 + $0xe8] sm:$0xf]
      %v458 = vld [vmem:[%s253 + $0xec] sm:$0xf]
      %v459 = vld [vmem:[%s253 + $0xf0] sm:$0xf]
      %v460 = vld [vmem:[%s253 + $0xf4] sm:$0xf]
      %v461 = vld [vmem:[%s253 + $0xf8] sm:$0xf]
      %v462 = vld [vmem:[%s253 + $0xfc] sm:$0xf]
      %v527 = vunpack.c.l.b16 %v335
      %v528 = vunpack.c.h.b16 %v335
      %v529 = vunpack.c.l.b16 %v336
      %v530 = vunpack.c.h.b16 %v336
      %v531 = vunpack.c.l.b16 %v337
      %v532 = vunpack.c.h.b16 %v337
      %v533 = vunpack.c.l.b16 %v338
      %v534 = vunpack.c.h.b16 %v338
      %v535 = vunpack.c.l.b16 %v339
      %v536 = vunpack.c.h.b16 %v339
      %v537 = vunpack.c.l.b16 %v340
      %v538 = vunpack.c.h.b16 %v340
      %v539 = vunpack.c.l.b16 %v341
      %v540 = vunpack.c.h.b16 %v341
      %v541 = vunpack.c.l.b16 %v342
      %v542 = vunpack.c.h.b16 %v342
      %v543 = vunpack.c.l.b16 %v343
      %v544 = vunpack.c.h.b16 %v343
      %v545 = vunpack.c.l.b16 %v344
      %v546 = vunpack.c.h.b16 %v344
      %v547 = vunpack.c.l.b16 %v345
      %v548 = vunpack.c.h.b16 %v345
      %v549 = vunpack.c.l.b16 %v346
      %v550 = vunpack.c.h.b16 %v346
      %v551 = vunpack.c.l.b16 %v347
      %v552 = vunpack.c.h.b16 %v347
      %v553 = vunpack.c.l.b16 %v348
      %v554 = vunpack.c.h.b16 %v348
      %v555 = vunpack.c.l.b16 %v349
      %v556 = vunpack.c.h.b16 %v349
      %v557 = vunpack.c.l.b16 %v350
      %v558 = vunpack.c.h.b16 %v350
      %v559 = vunpack.c.l.b16 %v351
      %v560 = vunpack.c.h.b16 %v351
      %v561 = vunpack.c.l.b16 %v352
      %v562 = vunpack.c.h.b16 %v352
      %v563 = vunpack.c.l.b16 %v353
      %v564 = vunpack.c.h.b16 %v353
      %v565 = vunpack.c.l.b16 %v354
      %v566 = vunpack.c.h.b16 %v354
      %v567 = vunpack.c.l.b16 %v355
      %v568 = vunpack.c.h.b16 %v355
      %v569 = vunpack.c.l.b16 %v356
      %v570 = vunpack.c.h.b16 %v356
      %v571 = vunpack.c.l.b16 %v357
      %v572 = vunpack.c.h.b16 %v357
      %v573 = vunpack.c.l.b16 %v358
      %v574 = vunpack.c.h.b16 %v358
      %v575 = vunpack.c.l.b16 %v359
      %v576 = vunpack.c.h.b16 %v359
      %v577 = vunpack.c.l.b16 %v360
      %v578 = vunpack.c.h.b16 %v360
      %v579 = vunpack.c.l.b16 %v361
      %v580 = vunpack.c.h.b16 %v361
      %v581 = vunpack.c.l.b16 %v362
      %v582 = vunpack.c.h.b16 %v362
      %v583 = vunpack.c.l.b16 %v363
      %v584 = vunpack.c.h.b16 %v363
      %v585 = vunpack.c.l.b16 %v364
      %v586 = vunpack.c.h.b16 %v364
      %v587 = vunpack.c.l.b16 %v365
      %v588 = vunpack.c.h.b16 %v365
      %v589 = vunpack.c.l.b16 %v366
      %v590 = vunpack.c.h.b16 %v366
      %v591 = vunpack.c.l.b16 %v367
      %v592 = vunpack.c.h.b16 %v367
      %v593 = vunpack.c.l.b16 %v368
      %v594 = vunpack.c.h.b16 %v368
      %v595 = vunpack.c.l.b16 %v369
      %v596 = vunpack.c.h.b16 %v369
      %v597 = vunpack.c.l.b16 %v370
      %v598 = vunpack.c.h.b16 %v370
      %v599 = vunpack.c.l.b16 %v371
      %v600 = vunpack.c.h.b16 %v371
      %v601 = vunpack.c.l.b16 %v372
      %v602 = vunpack.c.h.b16 %v372
      %v603 = vunpack.c.l.b16 %v373
      %v604 = vunpack.c.h.b16 %v373
      %v605 = vunpack.c.l.b16 %v374
      %v606 = vunpack.c.h.b16 %v374
      %v607 = vunpack.c.l.b16 %v375
      %v608 = vunpack.c.h.b16 %v375
      %v609 = vunpack.c.l.b16 %v376
      %v610 = vunpack.c.h.b16 %v376
      %v611 = vunpack.c.l.b16 %v377
      %v612 = vunpack.c.h.b16 %v377
      %v613 = vunpack.c.l.b16 %v378
      %v614 = vunpack.c.h.b16 %v378
      %v615 = vunpack.c.l.b16 %v379
      %v616 = vunpack.c.h.b16 %v379
      %v617 = vunpack.c.l.b16 %v380
      %v618 = vunpack.c.h.b16 %v380
      %v619 = vunpack.c.l.b16 %v381
      %v620 = vunpack.c.h.b16 %v381
      %v621 = vunpack.c.l.b16 %v382
      %v622 = vunpack.c.h.b16 %v382
      %v623 = vunpack.c.l.b16 %v383
      %v624 = vunpack.c.h.b16 %v383
      %v625 = vunpack.c.l.b16 %v384
      %v626 = vunpack.c.h.b16 %v384
      %v627 = vunpack.c.l.b16 %v385
      %v628 = vunpack.c.h.b16 %v385
      %v629 = vunpack.c.l.b16 %v386
      %v630 = vunpack.c.h.b16 %v386
      %v631 = vunpack.c.l.b16 %v387
      %v632 = vunpack.c.h.b16 %v387
      %v633 = vunpack.c.l.b16 %v388
      %v634 = vunpack.c.h.b16 %v388
      %v635 = vunpack.c.l.b16 %v389
      %v636 = vunpack.c.h.b16 %v389
      %v637 = vunpack.c.l.b16 %v390
      %v638 = vunpack.c.h.b16 %v390
      %v639 = vunpack.c.l.b16 %v391
      %v640 = vunpack.c.h.b16 %v391
      %v641 = vunpack.c.l.b16 %v392
      %v642 = vunpack.c.h.b16 %v392
      %v643 = vunpack.c.l.b16 %v393
      %v644 = vunpack.c.h.b16 %v393
      %v645 = vunpack.c.l.b16 %v394
      %v646 = vunpack.c.h.b16 %v394
      %v647 = vunpack.c.l.b16 %v395
      %v648 = vunpack.c.h.b16 %v395
      %v649 = vunpack.c.l.b16 %v396
      %v650 = vunpack.c.h.b16 %v396
      %v651 = vunpack.c.l.b16 %v397
      %v652 = vunpack.c.h.b16 %v397
      %v653 = vunpack.c.l.b16 %v398
      %v654 = vunpack.c.h.b16 %v398
      %v655 = vpack.c.b16 %v531, %v527
      %v656 = vpack.c.b16 %v532, %v528
      %v657 = vpack.c.b16 %v533, %v529
      %v658 = vpack.c.b16 %v534, %v530
      %v659 = vpack.c.b16 %v539, %v535
      %v660 = vpack.c.b16 %v540, %v536
      %v661 = vpack.c.b16 %v541, %v537
      %v662 = vpack.c.b16 %v542, %v538
      %v663 = vpack.c.b16 %v547, %v543
      %v664 = vpack.c.b16 %v548, %v544
      %v665 = vpack.c.b16 %v549, %v545
      %v666 = vpack.c.b16 %v550, %v546
      %v667 = vpack.c.b16 %v555, %v551
      %v668 = vpack.c.b16 %v556, %v552
      %v669 = vpack.c.b16 %v557, %v553
      %v670 = vpack.c.b16 %v558, %v554
      %v671 = vpack.c.b16 %v563, %v559
      %v672 = vpack.c.b16 %v564, %v560
      %v673 = vpack.c.b16 %v565, %v561
      %v674 = vpack.c.b16 %v566, %v562
      %v675 = vpack.c.b16 %v571, %v567
      %v676 = vpack.c.b16 %v572, %v568
      %v677 = vpack.c.b16 %v573, %v569
      %v678 = vpack.c.b16 %v574, %v570
      %v679 = vpack.c.b16 %v579, %v575
      %v680 = vpack.c.b16 %v580, %v576
      %v681 = vpack.c.b16 %v581, %v577
      %v682 = vpack.c.b16 %v582, %v578
      %v683 = vpack.c.b16 %v587, %v583
      %v684 = vpack.c.b16 %v588, %v584
      %v685 = vpack.c.b16 %v589, %v585
      %v686 = vpack.c.b16 %v590, %v586
      %v687 = vpack.c.b16 %v595, %v591
      %v688 = vpack.c.b16 %v596, %v592
      %v689 = vpack.c.b16 %v597, %v593
      %v690 = vpack.c.b16 %v598, %v594
      %v691 = vpack.c.b16 %v603, %v599
      %v692 = vpack.c.b16 %v604, %v600
      %v693 = vpack.c.b16 %v605, %v601
      %v694 = vpack.c.b16 %v606, %v602
      %v695 = vpack.c.b16 %v611, %v607
      %v696 = vpack.c.b16 %v612, %v608
      %v697 = vpack.c.b16 %v613, %v609
      %v698 = vpack.c.b16 %v614, %v610
      %v699 = vpack.c.b16 %v619, %v615
      %v700 = vpack.c.b16 %v620, %v616
      %v701 = vpack.c.b16 %v621, %v617
      %v702 = vpack.c.b16 %v622, %v618
      %v703 = vpack.c.b16 %v627, %v623
      %v704 = vpack.c.b16 %v628, %v624
      %v705 = vpack.c.b16 %v629, %v625
      %v706 = vpack.c.b16 %v630, %v626
      %v707 = vpack.c.b16 %v635, %v631
      %v708 = vpack.c.b16 %v636, %v632
      %v709 = vpack.c.b16 %v637, %v633
      %v710 = vpack.c.b16 %v638, %v634
      %v711 = vpack.c.b16 %v643, %v639
      %v712 = vpack.c.b16 %v644, %v640
      %v713 = vpack.c.b16 %v645, %v641
      %v714 = vpack.c.b16 %v646, %v642
      %v715 = vpack.c.b16 %v651, %v647
      %v716 = vpack.c.b16 %v652, %v648
      %v717 = vpack.c.b16 %v653, %v649
      %v718 = vpack.c.b16 %v654, %v650
      %v847 = vunpack.c.l.b16 %v399
      %v848 = vunpack.c.l.b16 %v400
      %v849 = vunpack.c.l.b16 %v401
      %v850 = vunpack.c.l.b16 %v402
      %v851 = vunpack.c.l.b16 %v403
      %v852 = vunpack.c.l.b16 %v404
      %v853 = vunpack.c.l.b16 %v405
      %v854 = vunpack.c.l.b16 %v406
      %v855 = vunpack.c.l.b16 %v407
      %v856 = vunpack.c.l.b16 %v408
      %v857 = vunpack.c.l.b16 %v409
      %v858 = vunpack.c.l.b16 %v410
      %v859 = vunpack.c.l.b16 %v411
      %v860 = vunpack.c.l.b16 %v412
      %v861 = vunpack.c.l.b16 %v413
      %v862 = vunpack.c.l.b16 %v414
      %v863 = vunpack.c.l.b16 %v415
      %v864 = vunpack.c.l.b16 %v416
      %v865 = vunpack.c.l.b16 %v417
      %v866 = vunpack.c.l.b16 %v418
      %v867 = vunpack.c.l.b16 %v419
      %v868 = vunpack.c.l.b16 %v420
      %v869 = vunpack.c.l.b16 %v421
      %v870 = vunpack.c.l.b16 %v422
      %v871 = vunpack.c.l.b16 %v423
      %v872 = vunpack.c.l.b16 %v424
      %v873 = vunpack.c.l.b16 %v425
      %v874 = vunpack.c.l.b16 %v426
      %v875 = vunpack.c.l.b16 %v427
      %v876 = vunpack.c.l.b16 %v428
      %v877 = vunpack.c.l.b16 %v429
      %v878 = vunpack.c.l.b16 %v430
      %v879 = vunpack.c.l.b16 %v431
      %v880 = vunpack.c.l.b16 %v432
      %v881 = vunpack.c.l.b16 %v433
      %v882 = vunpack.c.l.b16 %v434
      %v883 = vunpack.c.l.b16 %v435
      %v884 = vunpack.c.l.b16 %v436
      %v885 = vunpack.c.l.b16 %v437
      %v886 = vunpack.c.l.b16 %v438
      %v887 = vunpack.c.l.b16 %v439
      %v888 = vunpack.c.l.b16 %v440
      %v889 = vunpack.c.l.b16 %v441
      %v890 = vunpack.c.l.b16 %v442
      %v891 = vunpack.c.l.b16 %v443
      %v892 = vunpack.c.l.b16 %v444
      %v893 = vunpack.c.l.b16 %v445
      %v894 = vunpack.c.l.b16 %v446
      %v895 = vunpack.c.l.b16 %v447
      %v896 = vunpack.c.l.b16 %v448
      %v897 = vunpack.c.l.b16 %v449
      %v898 = vunpack.c.l.b16 %v450
      %v899 = vunpack.c.l.b16 %v451
      %v900 = vunpack.c.l.b16 %v452
      %v901 = vunpack.c.l.b16 %v453
      %v902 = vunpack.c.l.b16 %v454
      %v903 = vunpack.c.l.b16 %v455
      %v904 = vunpack.c.l.b16 %v456
      %v905 = vunpack.c.l.b16 %v457
      %v906 = vunpack.c.l.b16 %v458
      %v907 = vunpack.c.l.b16 %v459
      %v908 = vunpack.c.l.b16 %v460
      %v909 = vunpack.c.l.b16 %v461
      %v910 = vunpack.c.l.b16 %v462
      %v911 = vpack.c.b16 %v848, %v847
      %v912 = vpack.c.b16 %v850, %v849
      %v913 = vpack.c.b16 %v852, %v851
      %v914 = vpack.c.b16 %v854, %v853
      %v915 = vpack.c.b16 %v856, %v855
      %v916 = vpack.c.b16 %v858, %v857
      %v917 = vpack.c.b16 %v860, %v859
      %v918 = vpack.c.b16 %v862, %v861
      %v919 = vpack.c.b16 %v864, %v863
      %v920 = vpack.c.b16 %v866, %v865
      %v921 = vpack.c.b16 %v868, %v867
      %v922 = vpack.c.b16 %v870, %v869
      %v923 = vpack.c.b16 %v872, %v871
      %v924 = vpack.c.b16 %v874, %v873
      %v925 = vpack.c.b16 %v876, %v875
      %v926 = vpack.c.b16 %v878, %v877
      %v927 = vpack.c.b16 %v880, %v879
      %v928 = vpack.c.b16 %v882, %v881
      %v929 = vpack.c.b16 %v884, %v883
      %v930 = vpack.c.b16 %v886, %v885
      %v931 = vpack.c.b16 %v888, %v887
      %v932 = vpack.c.b16 %v890, %v889
      %v933 = vpack.c.b16 %v892, %v891
      %v934 = vpack.c.b16 %v894, %v893
      %v935 = vpack.c.b16 %v896, %v895
      %v936 = vpack.c.b16 %v898, %v897
      %v937 = vpack.c.b16 %v900, %v899
      %v938 = vpack.c.b16 %v902, %v901
      %v939 = vpack.c.b16 %v904, %v903
      %v940 = vpack.c.b16 %v906, %v905
      %v941 = vpack.c.b16 %v908, %v907
      %v942 = vpack.c.b16 %v910, %v909
      %975 = vmatpush.bf16.msra.mxu0 %v918
      %976 = vmatpush.bf16.msra.mxu0 %v917
      %977 = vmatpush.bf16.msra.mxu0 %v916
      %978 = vmatpush.bf16.msra.mxu0 %v915
      %979 = vmatpush.bf16.msra.mxu0 %v914
      %980 = vmatpush.bf16.msra.mxu0 %v913
      %981 = vmatpush.bf16.msra.mxu0 %v912
      %982 = vmatpush.bf16.msra.mxu0 %v911
      %983 = vmatmul.bf16.gmra.mxu0 %v655
      %v984 = vpop.f32.mrf.mxu0
      %v985 = vadd.f32 0.0, %v984
      %v986 = vpop.f32.mrf.mxu0
      %v987 = vadd.f32 0.0, %v986
      %988 = vmatmul.bf16.gmra.mxu0 %v659
      %v989 = vpop.f32.mrf.mxu0
      %v990 = vadd.f32 0.0, %v989
      %v991 = vpop.f32.mrf.mxu0
      %v992 = vadd.f32 0.0, %v991
      %993 = vmatmul.bf16.gmra.mxu0 %v663
      %v994 = vpop.f32.mrf.mxu0
      %v995 = vadd.f32 0.0, %v994
      %v996 = vpop.f32.mrf.mxu0
      %v997 = vadd.f32 0.0, %v996
      %998 = vmatmul.bf16.gmra.mxu0 %v667
      %v999 = vpop.f32.mrf.mxu0
      %v1000 = vadd.f32 0.0, %v999
      %v1001 = vpop.f32.mrf.mxu0
      %v1002 = vadd.f32 0.0, %v1001
      %1003 = vmatmul.bf16.gmra.mxu0 %v671
      %v1004 = vpop.f32.mrf.mxu0
      %v1005 = vadd.f32 0.0, %v1004
      %v1006 = vpop.f32.mrf.mxu0
      %v1007 = vadd.f32 0.0, %v1006
      %1008 = vmatmul.bf16.gmra.mxu0 %v675
      %v1009 = vpop.f32.mrf.mxu0
      %v1010 = vadd.f32 0.0, %v1009
      %v1011 = vpop.f32.mrf.mxu0
      %v1012 = vadd.f32 0.0, %v1011
      %1013 = vmatmul.bf16.gmra.mxu0 %v679
      %v1014 = vpop.f32.mrf.mxu0
      %v1015 = vadd.f32 0.0, %v1014
      %v1016 = vpop.f32.mrf.mxu0
      %v1017 = vadd.f32 0.0, %v1016
      %1018 = vmatmul.bf16.gmra.mxu0 %v683
      %v1019 = vpop.f32.mrf.mxu0
      %v1020 = vadd.f32 0.0, %v1019
      %v1021 = vpop.f32.mrf.mxu0
      %v1022 = vadd.f32 0.0, %v1021
      %1023 = vmatmul.bf16.gmra.mxu0 %v687
      %v1024 = vpop.f32.mrf.mxu0
      %v1025 = vadd.f32 0.0, %v1024
      %v1026 = vpop.f32.mrf.mxu0
      %v1027 = vadd.f32 0.0, %v1026
      %1028 = vmatmul.bf16.gmra.mxu0 %v691
      %v1029 = vpop.f32.mrf.mxu0
      %v1030 = vadd.f32 0.0, %v1029
      %v1031 = vpop.f32.mrf.mxu0
      %v1032 = vadd.f32 0.0, %v1031
      %1033 = vmatmul.bf16.gmra.mxu0 %v695
      %v1034 = vpop.f32.mrf.mxu0
      %v1035 = vadd.f32 0.0, %v1034
      %v1036 = vpop.f32.mrf.mxu0
      %v1037 = vadd.f32 0.0, %v1036
      %1038 = vmatmul.bf16.gmra.mxu0 %v699
      %v1039 = vpop.f32.mrf.mxu0
      %v1040 = vadd.f32 0.0, %v1039
      %v1041 = vpop.f32.mrf.mxu0
      %v1042 = vadd.f32 0.0, %v1041
      %1043 = vmatmul.bf16.gmra.mxu0 %v703
      %v1044 = vpop.f32.mrf.mxu0
      %v1045 = vadd.f32 0.0, %v1044
      %v1046 = vpop.f32.mrf.mxu0
      %v1047 = vadd.f32 0.0, %v1046
      %1048 = vmatmul.bf16.gmra.mxu0 %v707
      %v1049 = vpop.f32.mrf.mxu0
      %v1050 = vadd.f32 0.0, %v1049
      %v1051 = vpop.f32.mrf.mxu0
      %v1052 = vadd.f32 0.0, %v1051
      %1053 = vmatmul.bf16.gmra.mxu0 %v711
      %v1054 = vpop.f32.mrf.mxu0
      %v1055 = vadd.f32 0.0, %v1054
      %v1056 = vpop.f32.mrf.mxu0
      %v1057 = vadd.f32 0.0, %v1056
      %1058 = vmatmul.bf16.gmra.mxu0 %v715
      %v1059 = vpop.f32.mrf.mxu0
      %v1060 = vadd.f32 0.0, %v1059
      %v1061 = vpop.f32.mrf.mxu0
      %v1062 = vadd.f32 0.0, %v1061
      %1063 = vdwg.mxu0
      %1064 = vmatpush.bf16.msra.mxu0 %v926
      %1065 = vmatpush.bf16.msra.mxu0 %v925
      %1066 = vmatpush.bf16.msra.mxu0 %v924
      %1067 = vmatpush.bf16.msra.mxu0 %v923
      %1068 = vmatpush.bf16.msra.mxu0 %v922
      %1069 = vmatpush.bf16.msra.mxu0 %v921
      %1070 = vmatpush.bf16.msra.mxu0 %v920
      %1071 = vmatpush.bf16.msra.mxu0 %v919
      %1072 = vmatmul.bf16.gmra.mxu0 %v656
      %v1073 = vpop.f32.mrf.mxu0
      %v1074 = vadd.f32 %v985, %v1073
      %v1075 = vpop.f32.mrf.mxu0
      %v1076 = vadd.f32 %v987, %v1075
      %1077 = vmatmul.bf16.gmra.mxu0 %v660
      %v1078 = vpop.f32.mrf.mxu0
      %v1079 = vadd.f32 %v990, %v1078
      %v1080 = vpop.f32.mrf.mxu0
      %v1081 = vadd.f32 %v992, %v1080
      %1082 = vmatmul.bf16.gmra.mxu0 %v664
      %v1083 = vpop.f32.mrf.mxu0
      %v1084 = vadd.f32 %v995, %v1083
      %v1085 = vpop.f32.mrf.mxu0
      %v1086 = vadd.f32 %v997, %v1085
      %1087 = vmatmul.bf16.gmra.mxu0 %v668
      %v1088 = vpop.f32.mrf.mxu0
      %v1089 = vadd.f32 %v1000, %v1088
      %v1090 = vpop.f32.mrf.mxu0
      %v1091 = vadd.f32 %v1002, %v1090
      %1092 = vmatmul.bf16.gmra.mxu0 %v672
      %v1093 = vpop.f32.mrf.mxu0
      %v1094 = vadd.f32 %v1005, %v1093
      %v1095 = vpop.f32.mrf.mxu0
      %v1096 = vadd.f32 %v1007, %v1095
      %1097 = vmatmul.bf16.gmra.mxu0 %v676
      %v1098 = vpop.f32.mrf.mxu0
      %v1099 = vadd.f32 %v1010, %v1098
      %v1100 = vpop.f32.mrf.mxu0
      %v1101 = vadd.f32 %v1012, %v1100
      %1102 = vmatmul.bf16.gmra.mxu0 %v680
      %v1103 = vpop.f32.mrf.mxu0
      %v1104 = vadd.f32 %v1015, %v1103
      %v1105 = vpop.f32.mrf.mxu0
      %v1106 = vadd.f32 %v1017, %v1105
      %1107 = vmatmul.bf16.gmra.mxu0 %v684
      %v1108 = vpop.f32.mrf.mxu0
      %v1109 = vadd.f32 %v1020, %v1108
      %v1110 = vpop.f32.mrf.mxu0
      %v1111 = vadd.f32 %v1022, %v1110
      %1112 = vmatmul.bf16.gmra.mxu0 %v688
      %v1113 = vpop.f32.mrf.mxu0
      %v1114 = vadd.f32 %v1025, %v1113
      %v1115 = vpop.f32.mrf.mxu0
      %v1116 = vadd.f32 %v1027, %v1115
      %1117 = vmatmul.bf16.gmra.mxu0 %v692
      %v1118 = vpop.f32.mrf.mxu0
      %v1119 = vadd.f32 %v1030, %v1118
      %v1120 = vpop.f32.mrf.mxu0
      %v1121 = vadd.f32 %v1032, %v1120
      %1122 = vmatmul.bf16.gmra.mxu0 %v696
      %v1123 = vpop.f32.mrf.mxu0
      %v1124 = vadd.f32 %v1035, %v1123
      %v1125 = vpop.f32.mrf.mxu0
      %v1126 = vadd.f32 %v1037, %v1125
      %1127 = vmatmul.bf16.gmra.mxu0 %v700
      %v1128 = vpop.f32.mrf.mxu0
      %v1129 = vadd.f32 %v1040, %v1128
      %v1130 = vpop.f32.mrf.mxu0
      %v1131 = vadd.f32 %v1042, %v1130
      %1132 = vmatmul.bf16.gmra.mxu0 %v704
      %v1133 = vpop.f32.mrf.mxu0
      %v1134 = vadd.f32 %v1045, %v1133
      %v1135 = vpop.f32.mrf.mxu0
      %v1136 = vadd.f32 %v1047, %v1135
      %1137 = vmatmul.bf16.gmra.mxu0 %v708
      %v1138 = vpop.f32.mrf.mxu0
      %v1139 = vadd.f32 %v1050, %v1138
      %v1140 = vpop.f32.mrf.mxu0
      %v1141 = vadd.f32 %v1052, %v1140
      %1142 = vmatmul.bf16.gmra.mxu0 %v712
      %v1143 = vpop.f32.mrf.mxu0
      %v1144 = vadd.f32 %v1055, %v1143
      %v1145 = vpop.f32.mrf.mxu0
      %v1146 = vadd.f32 %v1057, %v1145
      %1147 = vmatmul.bf16.gmra.mxu0 %v716
      %v1148 = vpop.f32.mrf.mxu0
      %v1149 = vadd.f32 %v1060, %v1148
      %v1150 = vpop.f32.mrf.mxu0
      %v1151 = vadd.f32 %v1062, %v1150
      %1152 = vdwg.mxu0
      %1153 = vmatpush.bf16.msra.mxu0 %v934
      %1154 = vmatpush.bf16.msra.mxu0 %v933
      %1155 = vmatpush.bf16.msra.mxu0 %v932
      %1156 = vmatpush.bf16.msra.mxu0 %v931
      %1157 = vmatpush.bf16.msra.mxu0 %v930
      %1158 = vmatpush.bf16.msra.mxu0 %v929
      %1159 = vmatpush.bf16.msra.mxu0 %v928
      %1160 = vmatpush.bf16.msra.mxu0 %v927
      %1161 = vmatmul.bf16.gmra.mxu0 %v657
      %v1162 = vpop.f32.mrf.mxu0
      %v1163 = vadd.f32 %v1074, %v1162
      %v1164 = vpop.f32.mrf.mxu0
      %v1165 = vadd.f32 %v1076, %v1164
      %1166 = vmatmul.bf16.gmra.mxu0 %v661
      %v1167 = vpop.f32.mrf.mxu0
      %v1168 = vadd.f32 %v1079, %v1167
      %v1169 = vpop.f32.mrf.mxu0
      %v1170 = vadd.f32 %v1081, %v1169
      %1171 = vmatmul.bf16.gmra.mxu0 %v665
      %v1172 = vpop.f32.mrf.mxu0
      %v1173 = vadd.f32 %v1084, %v1172
      %v1174 = vpop.f32.mrf.mxu0
      %v1175 = vadd.f32 %v1086, %v1174
      %1176 = vmatmul.bf16.gmra.mxu0 %v669
      %v1177 = vpop.f32.mrf.mxu0
      %v1178 = vadd.f32 %v1089, %v1177
      %v1179 = vpop.f32.mrf.mxu0
      %v1180 = vadd.f32 %v1091, %v1179
      %1181 = vmatmul.bf16.gmra.mxu0 %v673
      %v1182 = vpop.f32.mrf.mxu0
      %v1183 = vadd.f32 %v1094, %v1182
      %v1184 = vpop.f32.mrf.mxu0
      %v1185 = vadd.f32 %v1096, %v1184
      %1186 = vmatmul.bf16.gmra.mxu0 %v677
      %v1187 = vpop.f32.mrf.mxu0
      %v1188 = vadd.f32 %v1099, %v1187
      %v1189 = vpop.f32.mrf.mxu0
      %v1190 = vadd.f32 %v1101, %v1189
      %1191 = vmatmul.bf16.gmra.mxu0 %v681
      %v1192 = vpop.f32.mrf.mxu0
      %v1193 = vadd.f32 %v1104, %v1192
      %v1194 = vpop.f32.mrf.mxu0
      %v1195 = vadd.f32 %v1106, %v1194
      %1196 = vmatmul.bf16.gmra.mxu0 %v685
      %v1197 = vpop.f32.mrf.mxu0
      %v1198 = vadd.f32 %v1109, %v1197
      %v1199 = vpop.f32.mrf.mxu0
      %v1200 = vadd.f32 %v1111, %v1199
      %1201 = vmatmul.bf16.gmra.mxu0 %v689
      %v1202 = vpop.f32.mrf.mxu0
      %v1203 = vadd.f32 %v1114, %v1202
      %v1204 = vpop.f32.mrf.mxu0
      %v1205 = vadd.f32 %v1116, %v1204
      %1206 = vmatmul.bf16.gmra.mxu0 %v693
      %v1207 = vpop.f32.mrf.mxu0
      %v1208 = vadd.f32 %v1119, %v1207
      %v1209 = vpop.f32.mrf.mxu0
      %v1210 = vadd.f32 %v1121, %v1209
      %1211 = vmatmul.bf16.gmra.mxu0 %v697
      %v1212 = vpop.f32.mrf.mxu0
      %v1213 = vadd.f32 %v1124, %v1212
      %v1214 = vpop.f32.mrf.mxu0
      %v1215 = vadd.f32 %v1126, %v1214
      %1216 = vmatmul.bf16.gmra.mxu0 %v701
      %v1217 = vpop.f32.mrf.mxu0
      %v1218 = vadd.f32 %v1129, %v1217
      %v1219 = vpop.f32.mrf.mxu0
      %v1220 = vadd.f32 %v1131, %v1219
      %1221 = vmatmul.bf16.gmra.mxu0 %v705
      %v1222 = vpop.f32.mrf.mxu0
      %v1223 = vadd.f32 %v1134, %v1222
      %v1224 = vpop.f32.mrf.mxu0
      %v1225 = vadd.f32 %v1136, %v1224
      %1226 = vmatmul.bf16.gmra.mxu0 %v709
      %v1227 = vpop.f32.mrf.mxu0
      %v1228 = vadd.f32 %v1139, %v1227
      %v1229 = vpop.f32.mrf.mxu0
      %v1230 = vadd.f32 %v1141, %v1229
      %1231 = vmatmul.bf16.gmra.mxu0 %v713
      %v1232 = vpop.f32.mrf.mxu0
      %v1233 = vadd.f32 %v1144, %v1232
      %v1234 = vpop.f32.mrf.mxu0
      %v1235 = vadd.f32 %v1146, %v1234
      %1236 = vmatmul.bf16.gmra.mxu0 %v717
      %v1237 = vpop.f32.mrf.mxu0
      %v1238 = vadd.f32 %v1149, %v1237
      %v1239 = vpop.f32.mrf.mxu0
      %v1240 = vadd.f32 %v1151, %v1239
      %1241 = vdwg.mxu0
      %1242 = vmatpush.bf16.msra.mxu0 %v942
      %1243 = vmatpush.bf16.msra.mxu0 %v941
      %1244 = vmatpush.bf16.msra.mxu0 %v940
      %1245 = vmatpush.bf16.msra.mxu0 %v939
      %1246 = vmatpush.bf16.msra.mxu0 %v938
      %1247 = vmatpush.bf16.msra.mxu0 %v937
      %1248 = vmatpush.bf16.msra.mxu0 %v936
      %1249 = vmatpush.bf16.msra.mxu0 %v935
      %1250 = vmatmul.bf16.gmra.mxu0 %v658
      %v1251 = vpop.f32.mrf.mxu0
      %v1252 = vadd.f32 %v1163, %v1251
      %v1253 = vpop.f32.mrf.mxu0
      %v1254 = vadd.f32 %v1165, %v1253
      %1255 = vmatmul.bf16.gmra.mxu0 %v662
      %v1256 = vpop.f32.mrf.mxu0
      %v1257 = vadd.f32 %v1168, %v1256
      %v1258 = vpop.f32.mrf.mxu0
      %v1259 = vadd.f32 %v1170, %v1258
      %1260 = vmatmul.bf16.gmra.mxu0 %v666
      %v1261 = vpop.f32.mrf.mxu0
      %v1262 = vadd.f32 %v1173, %v1261
      %v1263 = vpop.f32.mrf.mxu0
      %v1264 = vadd.f32 %v1175, %v1263
      %1265 = vmatmul.bf16.gmra.mxu0 %v670
      %v1266 = vpop.f32.mrf.mxu0
      %v1267 = vadd.f32 %v1178, %v1266
      %v1268 = vpop.f32.mrf.mxu0
      %v1269 = vadd.f32 %v1180, %v1268
      %1270 = vmatmul.bf16.gmra.mxu0 %v674
      %v1271 = vpop.f32.mrf.mxu0
      %v1272 = vadd.f32 %v1183, %v1271
      %v1273 = vpop.f32.mrf.mxu0
      %v1274 = vadd.f32 %v1185, %v1273
      %1275 = vmatmul.bf16.gmra.mxu0 %v678
      %v1276 = vpop.f32.mrf.mxu0
      %v1277 = vadd.f32 %v1188, %v1276
      %v1278 = vpop.f32.mrf.mxu0
      %v1279 = vadd.f32 %v1190, %v1278
      %1280 = vmatmul.bf16.gmra.mxu0 %v682
      %v1281 = vpop.f32.mrf.mxu0
      %v1282 = vadd.f32 %v1193, %v1281
      %v1283 = vpop.f32.mrf.mxu0
      %v1284 = vadd.f32 %v1195, %v1283
      %1285 = vmatmul.bf16.gmra.mxu0 %v686
      %v1286 = vpop.f32.mrf.mxu0
      %v1287 = vadd.f32 %v1198, %v1286
      %v1288 = vpop.f32.mrf.mxu0
      %v1289 = vadd.f32 %v1200, %v1288
      %1290 = vmatmul.bf16.gmra.mxu0 %v690
      %v1291 = vpop.f32.mrf.mxu0
      %v1292 = vadd.f32 %v1203, %v1291
      %v1293 = vpop.f32.mrf.mxu0
      %v1294 = vadd.f32 %v1205, %v1293
      %1295 = vmatmul.bf16.gmra.mxu0 %v694
      %v1296 = vpop.f32.mrf.mxu0
      %v1297 = vadd.f32 %v1208, %v1296
      %v1298 = vpop.f32.mrf.mxu0
      %v1299 = vadd.f32 %v1210, %v1298
      %1300 = vmatmul.bf16.gmra.mxu0 %v698
      %v1301 = vpop.f32.mrf.mxu0
      %v1302 = vadd.f32 %v1213, %v1301
      %v1303 = vpop.f32.mrf.mxu0
      %v1304 = vadd.f32 %v1215, %v1303
      %1305 = vmatmul.bf16.gmra.mxu0 %v702
      %v1306 = vpop.f32.mrf.mxu0
      %v1307 = vadd.f32 %v1218, %v1306
      %v1308 = vpop.f32.mrf.mxu0
      %v1309 = vadd.f32 %v1220, %v1308
      %1310 = vmatmul.bf16.gmra.mxu0 %v706
      %v1311 = vpop.f32.mrf.mxu0
      %v1312 = vadd.f32 %v1223, %v1311
      %v1313 = vpop.f32.mrf.mxu0
      %v1314 = vadd.f32 %v1225, %v1313
      %1315 = vmatmul.bf16.gmra.mxu0 %v710
      %v1316 = vpop.f32.mrf.mxu0
      %v1317 = vadd.f32 %v1228, %v1316
      %v1318 = vpop.f32.mrf.mxu0
      %v1319 = vadd.f32 %v1230, %v1318
      %1320 = vmatmul.bf16.gmra.mxu0 %v714
      %v1321 = vpop.f32.mrf.mxu0
      %v1322 = vadd.f32 %v1233, %v1321
      %v1323 = vpop.f32.mrf.mxu0
      %v1324 = vadd.f32 %v1235, %v1323
      %1325 = vmatmul.bf16.gmra.mxu0 %v718
      %v1326 = vpop.f32.mrf.mxu0
      %v1327 = vadd.f32 %v1238, %v1326
      %v1328 = vpop.f32.mrf.mxu0
      %v1329 = vadd.f32 %v1240, %v1328
      %1330 = vdwg.mxu0
      %v1331 = vadd.f32 %v303, %v1252
      %v1332 = vadd.f32 %v304, %v1254
      %v1333 = vadd.f32 %v305, %v1257
      %v1334 = vadd.f32 %v306, %v1259
      %v1335 = vadd.f32 %v307, %v1262
      %v1336 = vadd.f32 %v308, %v1264
      %v1337 = vadd.f32 %v309, %v1267
      %v1338 = vadd.f32 %v310, %v1269
      %v1339 = vadd.f32 %v311, %v1272
      %v1340 = vadd.f32 %v312, %v1274
      %v1341 = vadd.f32 %v313, %v1277
      %v1342 = vadd.f32 %v314, %v1279
      %v1343 = vadd.f32 %v315, %v1282
      %v1344 = vadd.f32 %v316, %v1284
      %v1345 = vadd.f32 %v317, %v1287
      %v1346 = vadd.f32 %v318, %v1289
      %v1347 = vadd.f32 %v319, %v1292
      %v1348 = vadd.f32 %v320, %v1294
      %v1349 = vadd.f32 %v321, %v1297
      %v1350 = vadd.f32 %v322, %v1299
      %v1351 = vadd.f32 %v323, %v1302
      %v1352 = vadd.f32 %v324, %v1304
      %v1353 = vadd.f32 %v325, %v1307
      %v1354 = vadd.f32 %v326, %v1309
      %v1355 = vadd.f32 %v327, %v1312
      %v1356 = vadd.f32 %v328, %v1314
      %v1357 = vadd.f32 %v329, %v1317
      %v1358 = vadd.f32 %v330, %v1319
      %v1359 = vadd.f32 %v331, %v1322
      %v1360 = vadd.f32 %v332, %v1324
      %v1361 = vadd.f32 %v333, %v1327
      %v1362 = vadd.f32 %v334, %v1329
      %1363 = vst [vmem:[#allocation2] sm:$0xff] %v1331
      %1364 = vst [vmem:[#allocation2 + $0x8] sm:$0xff] %v1332
      %1365 = vst [vmem:[#allocation2 + $0x10] sm:$0xff] %v1333
      %1366 = vst [vmem:[#allocation2 + $0x18] sm:$0xff] %v1334
      %1367 = vst [vmem:[#allocation2 + $0x20] sm:$0xff] %v1335
      %1368 = vst [vmem:[#allocation2 + $0x28] sm:$0xff] %v1336
      %1369 = vst [vmem:[#allocation2 + $0x30] sm:$0xff] %v1337
      %1370 = vst [vmem:[#allocation2 + $0x38] sm:$0xff] %v1338
      %1371 = vst [vmem:[#allocation2 + $0x40] sm:$0xff] %v1339
      %1372 = vst [vmem:[#allocation2 + $0x48] sm:$0xff] %v1340
      %1373 = vst [vmem:[#allocation2 + $0x50] sm:$0xff] %v1341
      %1374 = vst [vmem:[#allocation2 + $0x58] sm:$0xff] %v1342
      %1375 = vst [vmem:[#allocation2 + $0x60] sm:$0xff] %v1343
      %1376 = vst [vmem:[#allocation2 + $0x68] sm:$0xff] %v1344
      %1377 = vst [vmem:[#allocation2 + $0x70] sm:$0xff] %v1345
      %1378 = vst [vmem:[#allocation2 + $0x78] sm:$0xff] %v1346
      %1379 = vst [vmem:[#allocation2 + $0x80] sm:$0xff] %v1347
      %1380 = vst [vmem:[#allocation2 + $0x88] sm:$0xff] %v1348
      %1381 = vst [vmem:[#allocation2 + $0x90] sm:$0xff] %v1349
      %1382 = vst [vmem:[#allocation2 + $0x98] sm:$0xff] %v1350
      %1383 = vst [vmem:[#allocation2 + $0xa0] sm:$0xff] %v1351
      %1384 = vst [vmem:[#allocation2 + $0xa8] sm:$0xff] %v1352
      %1385 = vst [vmem:[#allocation2 + $0xb0] sm:$0xff] %v1353
      %1386 = vst [vmem:[#allocation2 + $0xb8] sm:$0xff] %v1354
      %1387 = vst [vmem:[#allocation2 + $0xc0] sm:$0xff] %v1355
      %1388 = vst [vmem:[#allocation2 + $0xc8] sm:$0xff] %v1356
      %1389 = vst [vmem:[#allocation2 + $0xd0] sm:$0xff] %v1357
      %1390 = vst [vmem:[#allocation2 + $0xd8] sm:$0xff] %v1358
      %1391 = vst [vmem:[#allocation2 + $0xe0] sm:$0xff] %v1359
      %1392 = vst [vmem:[#allocation2 + $0xe8] sm:$0xff] %v1360
      %1393 = vst [vmem:[#allocation2 + $0xf0] sm:$0xff] %v1361
      %1394 = vst [vmem:[#allocation2 + $0xf8] sm:$0xff] %v1362
      // Predicated region
      $region37: #{resnet_generator_forward.91} parent=31 // pred_check
        %p1395 = pneg %p267
      $region38: #{resnet_generator_forward.91} parent=31 // pred_check_branch
        %1397 = sbr.rel (%p1395) target = $region40
      $region39: #{resnet_generator_forward.91} parent=31 // pred_region
        %v1398 = vld [vmem:[#allocation2] sm:$0xff]
        %v1399 = vld [vmem:[#allocation2 + $0x8] sm:$0xff]
        %v1400 = vld [vmem:[#allocation2 + $0x10] sm:$0xff]
        %v1401 = vld [vmem:[#allocation2 + $0x18] sm:$0xff]
        %v1402 = vld [vmem:[#allocation2 + $0x20] sm:$0xff]
        %v1403 = vld [vmem:[#allocation2 + $0x28] sm:$0xff]
        %v1404 = vld [vmem:[#allocation2 + $0x30] sm:$0xff]
        %v1405 = vld [vmem:[#allocation2 + $0x38] sm:$0xff]
        %v1406 = vld [vmem:[#allocation2 + $0x40] sm:$0xff]
        %v1407 = vld [vmem:[#allocation2 + $0x48] sm:$0xff]
        %v1408 = vld [vmem:[#allocation2 + $0x50] sm:$0xff]
        %v1409 = vld [vmem:[#allocation2 + $0x58] sm:$0xff]
        %v1410 = vld [vmem:[#allocation2 + $0x60] sm:$0xff]
        %v1411 = vld [vmem:[#allocation2 + $0x68] sm:$0xff]
        %v1412 = vld [vmem:[#allocation2 + $0x70] sm:$0xff]
        %v1413 = vld [vmem:[#allocation2 + $0x78] sm:$0xff]
        %v1414 = vld [vmem:[#allocation2 + $0x80] sm:$0xff]
        %v1415 = vld [vmem:[#allocation2 + $0x88] sm:$0xff]
        %v1416 = vld [vmem:[#allocation2 + $0x90] sm:$0xff]
        %v1417 = vld [vmem:[#allocation2 + $0x98] sm:$0xff]
        %v1418 = vld [vmem:[#allocation2 + $0xa0] sm:$0xff]
        %v1419 = vld [vmem:[#allocation2 + $0xa8] sm:$0xff]
        %v1420 = vld [vmem:[#allocation2 + $0xb0] sm:$0xff]
        %v1421 = vld [vmem:[#allocation2 + $0xb8] sm:$0xff]
        %v1422 = vld [vmem:[#allocation2 + $0xc0] sm:$0xff]
        %v1423 = vld [vmem:[#allocation2 + $0xc8] sm:$0xff]
        %v1424 = vld [vmem:[#allocation2 + $0xd0] sm:$0xff]
        %v1425 = vld [vmem:[#allocation2 + $0xd8] sm:$0xff]
        %v1426 = vld [vmem:[#allocation2 + $0xe0] sm:$0xff]
        %v1427 = vld [vmem:[#allocation2 + $0xe8] sm:$0xff]
        %v1428 = vld [vmem:[#allocation2 + $0xf0] sm:$0xff]
        %v1429 = vld [vmem:[#allocation2 + $0xf8] sm:$0xff]
        %v1430 = vld [vmem:[%s257] sm:$0x1]
        %v1432 = vperm.slane %v1430, 0
        %v1434 = vadd.f32 %v1398, %v1432
        %v1435 = vadd.f32 %v1399, %v1432
        %v1436 = vadd.f32 %v1400, %v1432
        %v1437 = vadd.f32 %v1401, %v1432
        %v1438 = vadd.f32 %v1402, %v1432
        %v1439 = vadd.f32 %v1403, %v1432
        %v1440 = vadd.f32 %v1404, %v1432
        %v1441 = vadd.f32 %v1405, %v1432
        %v1442 = vadd.f32 %v1406, %v1432
        %v1443 = vadd.f32 %v1407, %v1432
        %v1444 = vadd.f32 %v1408, %v1432
        %v1445 = vadd.f32 %v1409, %v1432
        %v1446 = vadd.f32 %v1410, %v1432
        %v1447 = vadd.f32 %v1411, %v1432
        %v1448 = vadd.f32 %v1412, %v1432
        %v1449 = vadd.f32 %v1413, %v1432
        %v1450 = vadd.f32 %v1414, %v1432
        %v1451 = vadd.f32 %v1415, %v1432
        %v1452 = vadd.f32 %v1416, %v1432
        %v1453 = vadd.f32 %v1417, %v1432
        %v1454 = vadd.f32 %v1418, %v1432
        %v1455 = vadd.f32 %v1419, %v1432
        %v1456 = vadd.f32 %v1420, %v1432
        %v1457 = vadd.f32 %v1421, %v1432
        %v1458 = vadd.f32 %v1422, %v1432
        %v1459 = vadd.f32 %v1423, %v1432
        %v1460 = vadd.f32 %v1424, %v1432
        %v1461 = vadd.f32 %v1425, %v1432
        %v1462 = vadd.f32 %v1426, %v1432
        %v1463 = vadd.f32 %v1427, %v1432
        %v1464 = vadd.f32 %v1428, %v1432
        %v1465 = vadd.f32 %v1429, %v1432
        %v1466 = vtanh.pop %v1434
        %v1467 = vtanh.pop %v1435
        %v1468 = vtanh.pop %v1436
        %v1469 = vtanh.pop %v1437
        %v1470 = vtanh.pop %v1438
        %v1471 = vtanh.pop %v1439
        %v1472 = vtanh.pop %v1440
        %v1473 = vtanh.pop %v1441
        %v1474 = vtanh.pop %v1442
        %v1475 = vtanh.pop %v1443
        %v1476 = vtanh.pop %v1444
        %v1477 = vtanh.pop %v1445
        %v1478 = vtanh.pop %v1446
        %v1479 = vtanh.pop %v1447
        %v1480 = vtanh.pop %v1448
        %v1481 = vtanh.pop %v1449
        %v1482 = vtanh.pop %v1450
        %v1483 = vtanh.pop %v1451
        %v1484 = vtanh.pop %v1452
        %v1485 = vtanh.pop %v1453
        %v1486 = vtanh.pop %v1454
        %v1487 = vtanh.pop %v1455
        %v1488 = vtanh.pop %v1456
        %v1489 = vtanh.pop %v1457
        %v1490 = vtanh.pop %v1458
        %v1491 = vtanh.pop %v1459
        %v1492 = vtanh.pop %v1460
        %v1493 = vtanh.pop %v1461
        %v1494 = vtanh.pop %v1462
        %v1495 = vtanh.pop %v1463
        %v1496 = vtanh.pop %v1464
        %v1497 = vtanh.pop %v1465
        %1498 = vst [vmem:[%s265] sm:$0xff] %v1466
        %1499 = vst [vmem:[%s265 + $0x8] sm:$0xff] %v1467
        %1500 = vst [vmem:[%s265 + $0x10] sm:$0xff] %v1468
        %1501 = vst [vmem:[%s265 + $0x18] sm:$0xff] %v1469
        %1502 = vst [vmem:[%s265 + $0x20] sm:$0xff] %v1470
        %1503 = vst [vmem:[%s265 + $0x28] sm:$0xff] %v1471
        %1504 = vst [vmem:[%s265 + $0x30] sm:$0xff] %v1472
        %1505 = vst [vmem:[%s265 + $0x38] sm:$0xff] %v1473
        %1506 = vst [vmem:[%s265 + $0x40] sm:$0xff] %v1474
        %1507 = vst [vmem:[%s265 + $0x48] sm:$0xff] %v1475
        %1508 = vst [vmem:[%s265 + $0x50] sm:$0xff] %v1476
        %1509 = vst [vmem:[%s265 + $0x58] sm:$0xff] %v1477
        %1510 = vst [vmem:[%s265 + $0x60] sm:$0xff] %v1478
        %1511 = vst [vmem:[%s265 + $0x68] sm:$0xff] %v1479
        %1512 = vst [vmem:[%s265 + $0x70] sm:$0xff] %v1480
        %1513 = vst [vmem:[%s265 + $0x78] sm:$0xff] %v1481
        %1514 = vst [vmem:[%s265 + $0x80] sm:$0xff] %v1482
        %1515 = vst [vmem:[%s265 + $0x88] sm:$0xff] %v1483
        %1516 = vst [vmem:[%s265 + $0x90] sm:$0xff] %v1484
        %1517 = vst [vmem:[%s265 + $0x98] sm:$0xff] %v1485
        %1518 = vst [vmem:[%s265 + $0xa0] sm:$0xff] %v1486
        %1519 = vst [vmem:[%s265 + $0xa8] sm:$0xff] %v1487
        %1520 = vst [vmem:[%s265 + $0xb0] sm:$0xff] %v1488
        %1521 = vst [vmem:[%s265 + $0xb8] sm:$0xff] %v1489
        %1522 = vst [vmem:[%s265 + $0xc0] sm:$0xff] %v1490
        %1523 = vst [vmem:[%s265 + $0xc8] sm:$0xff] %v1491
        %1524 = vst [vmem:[%s265 + $0xd0] sm:$0xff] %v1492
        %1525 = vst [vmem:[%s265 + $0xd8] sm:$0xff] %v1493
        %1526 = vst [vmem:[%s265 + $0xe0] sm:$0xff] %v1494
        %1527 = vst [vmem:[%s265 + $0xe8] sm:$0xff] %v1495
        %1528 = vst [vmem:[%s265 + $0xf0] sm:$0xff] %v1496
        %1529 = vst [vmem:[%s265 + $0xf8] sm:$0xff] %v1497
      $region40: #{resnet_generator_forward.91} parent=31 // pred_fallthru
        _
      %s1530 = smul.u32 32, %s19
      %p1531 = scmp.lt.s32.totalorder %s1530, 63
      %s1532 = scalar_select %p1531, %s1530, 63
      %p1533 = scmp.lt.s32.totalorder %s20, 0
      %s1534 = scalar_select %p1533, %s20, 0
      %s1535 = sadd.s32 %s1534, %s1532
      %s1536 = smul.addr %s1535, 8
      %s1537 = scalar_lea.vmem %s3, %s1536
      // Predicated region
      $region41: #{resnet_generator_forward.91} parent=31 // pred_check
        %p1538 = pneg %p135
      $region42: #{resnet_generator_forward.91} parent=31 // pred_check_branch
        %1540 = sbr.rel (%p1538) target = $region44
      $region43: #{resnet_generator_forward.91} parent=31 // pred_region
        %s1541 = smul.u32 32, %s19
      $region44: #{resnet_generator_forward.91} parent=31 // pred_fallthru
        _
    $region32: #{resnet_generator_forward.91} parent=5 // pred_fallthru
      _
    %p1542 = scmp.le.s32.totalorder 2, %s9
    // Predicated region
    $region45: #{resnet_generator_forward.91} parent=5 // pred_check
      %p1543 = pneg %p1542
    $region46: #{resnet_generator_forward.91} parent=5 // pred_check_branch
      %1545 = sbr.rel (%p1543) target = $region48
    $region47: #{resnet_generator_forward.91} parent=5 // pred_region
      %s1546 = ssub.s32 %s9, 2
      // Predicated region
      $region49: #{resnet_generator_forward.91} parent=47 // pred_check
        %p1547 = pneg %p141
      $region50: #{resnet_generator_forward.91} parent=47 // pred_check_branch
        %1549 = sbr.rel (%p1547) target = $region52
      $region51: #{resnet_generator_forward.91} parent=47 // pred_region
        %s1550 = smul.u32 32, %s22
        %p1551 = scmp.lt.s32.totalorder %s1550, 63
        %s1552 = scalar_select %p1551, %s1550, 63
        %p1553 = scmp.lt.s32.totalorder %s23, 0
        %s1554 = scalar_select %p1553, %s23, 0
        %s1555 = sadd.s32 %s1554, %s1552
        %s1556 = smul.addr %s1555, 8
        %s1557 = scalar_lea.vmem %s3, %s1556
      $region52: #{resnet_generator_forward.91} parent=47 // pred_fallthru
        _
    $region48: #{resnet_generator_forward.91} parent=5 // pred_fallthru
      _
  $region6: #{resnet_generator_forward.91} parent=0 // loop_footer
    %s13 = sadd.s32 1, %s9
  $region7: #{resnet_generator_forward.91} parent=0 // loop_footer_branch
    %8 = sbr.rel target = $region3
  $region8: #{resnet_generator_forward.91} parent=0 // loop_exit
    _

</llo_original>
